<compile_context>
chip_gen: v7x
topology: tpu7x:2x2x1
jax: 0.10.0
libtpu: 0.0.40
codegen_flags: <defaults>
</compile_context>

<pallas_src>
import functools

import jax
import jax.numpy as jnp
from jax import lax
from jax.experimental import pallas as pl
from jax.experimental.pallas import tpu as pltpu

NEG_SLOPE = 0.2           # GATConv default negative_slope
LANE = 128                # pad feature dims / node count to lane width
TILE_ROWS = 128           # destination-node (row) tile
NEG_INF = -1e30
MXU_DTYPE = jnp.float32   # set to jnp.bfloat16 on v6e/v7x for full-rate MXU
                          # (accumulation and softmax math stay f32)


def _round_up(v, m):
    return ((v + m - 1) // m) * m


def _pad2d(a, rows, cols):
    return jnp.pad(a, ((0, rows - a.shape[0]), (0, cols - a.shape[1])))


def _pick_col_tile(n_pad):
    for tc in (512, 256, 128):        # >=512 lanes preferred when it divides
        if n_pad % tc == 0:
            return tc
    return n_pad


# ---------------------------------------------------------------------------
# Kernels
# ---------------------------------------------------------------------------
def project_kernel(x_ref, w_ref, att_src_ref, att_dst_ref,
                   h_ref, adst_ref, asrc_ref):
    h = jnp.dot(x_ref[...].astype(MXU_DTYPE), w_ref[...].astype(MXU_DTYPE),
                preferred_element_type=jnp.float32)
    h_ref[...] = h
    adst_ref[...] = jnp.sum(h * att_dst_ref[...], axis=-1, keepdims=True)
    asrc_ref[...] = lax.dot_general(
        att_src_ref[...], h, dimension_numbers=(((1,), (1,)), ((), ())),
        preferred_element_type=jnp.float32)


def project_pre_kernel(x_ref, pre_w_ref, pre_b_ref, w_ref, att_src_ref,
                       att_dst_ref, h_ref, adst_ref, asrc_ref):
    # linear_pre fused into the first GATConv projection (no HBM roundtrip).
    t = jnp.dot(x_ref[...], pre_w_ref[...],
                preferred_element_type=jnp.float32) + pre_b_ref[...]
    h = jnp.dot(t.astype(MXU_DTYPE), w_ref[...].astype(MXU_DTYPE),
                preferred_element_type=jnp.float32)
    h_ref[...] = h
    adst_ref[...] = jnp.sum(h * att_dst_ref[...], axis=-1, keepdims=True)
    asrc_ref[...] = lax.dot_general(
        att_src_ref[...], h, dimension_numbers=(((1,), (1,)), ((), ())),
        preferred_element_type=jnp.float32)


def gat_attn_kernel(adst_ref, asrc_ref, adj_ref, h_ref, b_ref, o_ref,
                    m_ref, l_ref, acc_ref, *, apply_relu, l2_normalize):
    j = pl.program_id(1)

    @pl.when(j == 0)
    def _init():
        m_ref[...] = jnp.full_like(m_ref, NEG_INF)
        l_ref[...] = jnp.zeros_like(l_ref)
        acc_ref[...] = jnp.zeros_like(acc_ref)

    cnt = adj_ref[...].astype(jnp.float32)          # [TR, TC] edge multiplicity
    e = adst_ref[...] + asrc_ref[...]               # e[i, j] = a_dst[i] + a_src[j]
    e = jnp.where(e >= 0.0, e, NEG_SLOPE * e)       # LeakyReLU(0.2)
    e = jnp.where(cnt > 0.0, e, NEG_INF)            # mask non-edges before max

    m_prev = m_ref[...]
    m_new = jnp.maximum(m_prev, jnp.max(e, axis=-1, keepdims=True))
    corr = jnp.exp(m_prev - m_new)
    p = jnp.exp(e - m_new) * cnt                    # cnt==0 zeroes masked slots

    l_ref[...] = corr * l_ref[...] + jnp.sum(p, axis=-1, keepdims=True)
    acc_ref[...] = corr * acc_ref[...] + jnp.dot(
        p.astype(MXU_DTYPE), h_ref[...].astype(MXU_DTYPE),
        preferred_element_type=jnp.float32)
    m_ref[...] = m_new

    @pl.when(j == pl.num_programs(1) - 1)
    def _finalize():
        # Deferred softmax normalization: scale the [TR, F] accumulator (EUP
        # reciprocal), never a normalized [TR, TC] attention matrix.
        out = acc_ref[...] * pl.reciprocal(l_ref[...], approx=True) + b_ref[...]
        if apply_relu:
            out = jnp.maximum(out, 0.0)
        if l2_normalize:
            ss = jnp.sum(out * out, axis=-1, keepdims=True)
            out = out * lax.rsqrt(jnp.maximum(ss, 1e-24))   # == /max(||.||,1e-12)
        o_ref[...] = out


# ---------------------------------------------------------------------------
# Wrappers
# ---------------------------------------------------------------------------
def gat_project(x, w, att_src, att_dst, *, pre_w=None, pre_b=None):
    n_pad, din = x.shape
    fp = w.shape[1]
    tr = min(TILE_ROWS, n_pad)
    grid = (n_pad // tr,)

    out_shape = (jax.ShapeDtypeStruct((n_pad, fp), jnp.float32),   # h
                 jax.ShapeDtypeStruct((n_pad, 1), jnp.float32),    # a_dst
                 jax.ShapeDtypeStruct((1, n_pad), jnp.float32))    # a_src
    out_specs = (pl.BlockSpec((tr, fp), lambda r: (r, 0)),
                 pl.BlockSpec((tr, 1), lambda r: (r, 0)),
                 pl.BlockSpec((1, tr), lambda r: (0, r)))
    full = lambda a: pl.BlockSpec(a.shape, lambda r: (0, 0))

    if pre_w is None:
        kernel = project_kernel
        in_specs = [pl.BlockSpec((tr, din), lambda r: (r, 0)),
                    full(w), full(att_src), full(att_dst)]
        args = (x, w, att_src, att_dst)
    else:
        kernel = project_pre_kernel
        in_specs = [pl.BlockSpec((tr, din), lambda r: (r, 0)),
                    full(pre_w), full(pre_b), full(w),
                    full(att_src), full(att_dst)]
        args = (x, pre_w, pre_b, w, att_src, att_dst)

    return pl.pallas_call(
        kernel,
        out_shape=out_shape,
        grid_spec=pltpu.PrefetchScalarGridSpec(
            num_scalar_prefetch=0, grid=grid,
            in_specs=in_specs, out_specs=out_specs),
        compiler_params=pltpu.CompilerParams(
            dimension_semantics=("parallel",)),
    )(*args)


def gat_attention(adst, asrc, adj, h, bias, *, apply_relu, l2_normalize):
    n_pad, fp = h.shape
    tr = min(TILE_ROWS, n_pad)
    tc = _pick_col_tile(n_pad)
    grid = (n_pad // tr, n_pad // tc)
    kernel = functools.partial(gat_attn_kernel, apply_relu=apply_relu,
                               l2_normalize=l2_normalize)
    return pl.pallas_call(
        kernel,
        out_shape=jax.ShapeDtypeStruct((n_pad, fp), jnp.float32),
        grid_spec=pltpu.PrefetchScalarGridSpec(
            num_scalar_prefetch=0,
            grid=grid,
            in_specs=[
                pl.BlockSpec((tr, 1), lambda i, j: (i, 0)),   # a_dst row tile
                pl.BlockSpec((1, tc), lambda i, j: (0, j)),   # a_src col tile
                pl.BlockSpec((tr, tc), lambda i, j: (i, j)),  # int8 adj tile
                pl.BlockSpec((tc, fp), lambda i, j: (j, 0)),  # h source tile
                pl.BlockSpec((1, fp), lambda i, j: (0, 0)),   # bias
            ],
            out_specs=pl.BlockSpec((tr, fp), lambda i, j: (i, 0)),
            scratch_shapes=[
                pltpu.VMEM((tr, 1), jnp.float32),    # running max  m
                pltpu.VMEM((tr, 1), jnp.float32),    # running sum  l
                pltpu.VMEM((tr, fp), jnp.float32),   # accumulator
            ]),
        compiler_params=pltpu.CompilerParams(
            dimension_semantics=("parallel", "arbitrary"),
            vmem_limit_bytes=48 * 1024 * 1024),      # fits v5e/v6e/v7x budgets
    )(adst, asrc, adj, h, bias)


def gat_forward(x, edge_index, params):
    """GAT.forward (eval): linear_pre -> GATConv -> relu -> GATConv -> l2 norm."""
    n = x.shape[0]
    w1, as1, ad1, b1 = params['conv_first']
    w2, as2, ad2, b2 = params['conv_out']
    feature_dim = params['pre_w'].shape[1]
    hidden_dim = w1.shape[1]
    output_dim = w2.shape[1]

    n_pad = _round_up(n, LANE)
    fh = _round_up(hidden_dim, LANE)    # lane-dense padded hidden width
    fo = _round_up(output_dim, LANE)    # lane-dense padded output width

    xp = _pad2d(x.astype(jnp.float32), n_pad, x.shape[1])

    # int8 edge-multiplicity adjacency: adj[i, j] = #edges j -> i.
    # PyG GATConv removes existing self loops and adds exactly one per node;
    # padded nodes also get a self loop so their (discarded) rows stay finite.
    src, dst = edge_index[0], edge_index[1]
    cnt = jnp.zeros((n_pad, n_pad), jnp.int32).at[dst, src].add(1)
    eye = jnp.eye(n_pad, dtype=jnp.int32)
    adj = jnp.minimum(cnt * (1 - eye) + eye, 127).astype(jnp.int8)

    # ---- layer 1 (linear_pre fused into the projection prologue) ----
    h1, adst1, asrc1 = gat_project(
        xp, _pad2d(w1, feature_dim, fh), _pad2d(as1, 1, fh),
        _pad2d(ad1, 1, fh), pre_w=params['pre_w'], pre_b=params['pre_b'])
    y1 = gat_attention(adst1, asrc1, adj, h1, _pad2d(b1, 1, fh),
                       apply_relu=True, l2_normalize=False)
    # F.dropout(training=False) -> identity
    # TODO(synk): conv_hidden layers for layer_num > 2 (default layer_num=2 -> none)

    # ---- layer 2 ----
    h2, adst2, asrc2 = gat_project(
        y1, _pad2d(w2, fh, fo), _pad2d(as2, 1, fo), _pad2d(ad2, 1, fo))
    y2 = gat_attention(adst2, asrc2, adj, h2, _pad2d(b2, 1, fo),
                       apply_relu=False, l2_normalize=True)

    # TODO(synk): for very large sparse graphs replace the dense O(N^2) adj
    # with CSR neighbor offsets via PrefetchScalarGridSpec (scalar prefetch).
    return y2[:n, :output_dim]


# ---------------------------------------------------------------------------
# Pure-JAX dense reference (mirrors PyG GATConv single-head semantics)
# ---------------------------------------------------------------------------
def _ref_gatconv(x, cnt, w, att_src, att_dst, b):
    h = x @ w
    a_d = jnp.sum(h * att_dst, axis=-1, keepdims=True)
    a_s = jnp.sum(h * att_src, axis=-1, keepdims=True)
    e = a_d + a_s.T
    e = jnp.where(e >= 0.0, e, NEG_SLOPE * e)
    e = jnp.where(cnt > 0.0, e, -jnp.inf)
    p = jnp.exp(e - jnp.max(e, axis=-1, keepdims=True)) * cnt
    attn = p / jnp.sum(p, axis=-1, keepdims=True)
    return attn @ h + b


def gat_reference(x, edge_index, params):
    n = x.shape[0]
    src, dst = edge_index[0], edge_index[1]
    eye = jnp.eye(n, dtype=jnp.float32)
    cnt = jnp.zeros((n, n), jnp.float32).at[dst, src].add(1.0)
    cnt = cnt * (1.0 - eye) + eye        # remove self loops, add exactly one
    h = x @ params['pre_w'] + params['pre_b']
    h = _ref_gatconv(h, cnt, *params['conv_first'])
    h = jnp.maximum(h, 0.0)
    h = _ref_gatconv(h, cnt, *params['conv_out'])
    nrm = jnp.sqrt(jnp.sum(h * h, axis=-1, keepdims=True))
    return h / jnp.maximum(nrm, 1e-12)


# ---------------------------------------------------------------------------
# Deterministic parameter construction
# ---------------------------------------------------------------------------
def init_params(key, input_dim, feature_dim, hidden_dim, output_dim):
    ks = jax.random.split(key, 10)

    def g(k, shape, scale=0.1):
        return jax.random.normal(k, shape, jnp.float32) * scale

    return {
        'pre_w': g(ks[0], (input_dim, feature_dim)),   # Linear weight [in, out]
        'pre_b': g(ks[1], (1, feature_dim)),           # Linear bias
        'conv_first': (
            g(ks[2], (feature_dim, hidden_dim)),       # W       [in, out]
            g(ks[3], (1, hidden_dim)),                 # att_src [1, out]
            g(ks[4], (1, hidden_dim)),                 # att_dst [1, out]
            g(ks[5], (1, hidden_dim)),                 # bias
        ),
        'conv_out': (
            g(ks[6], (hidden_dim, output_dim)),
            g(ks[7], (1, output_dim)),
            g(ks[8], (1, output_dim)),
            g(ks[9], (1, output_dim)),
        ),
    }


if __name__ == "__main__":
    key = jax.random.PRNGKey(0)
    N, E = 384, 2048                        # small multi-tile graph
    input_dim, feature_dim, hidden_dim, output_dim = 16, 32, 32, 16

    k_x, k_e, k_p = jax.random.split(key, 3)
    x = jax.random.normal(k_x, (N, input_dim), jnp.float32)
    edge_index = jax.random.randint(k_e, (2, E), 0, N)   # [2, E] (src; dst)
    params = init_params(k_p, input_dim, feature_dim, hidden_dim, output_dim)

    out = jax.jit(gat_forward)(x, edge_index, params)
    jax.block_until_ready(out)
    assert out.shape == (N, output_dim)

    ref = gat_reference(x, edge_index, params)
    err = float(jnp.max(jnp.abs(out - ref)))
    assert err < 3e-2, f"kernel/reference mismatch: max|err|={err}"

    print("KERNEL_OK")
</pallas_src>

<mosaic_0001>
module attributes {stable_mosaic.version = 11 : i64} {
  func.func private @main(%arg0: i32) attributes {dimension_semantics = [#tpu.dimension_semantics<core_parallel>], iteration_bounds = array<i64: 2>, tpu.core_type = #tpu.core_type<sc_scalar_subcore>, window_params = []} {
    return
  }
}

module attributes {stable_mosaic.version = 11 : i64} {
  func.func private @main(%arg0: i32) attributes {dimension_semantics = [#tpu.dimension_semantics<core_parallel>], iteration_bounds = array<i64: 2>, tpu.core_type = #tpu.core_type<sc_scalar_subcore>, window_params = []} {
    return
  }
}

module attributes {stable_mosaic.version = 11 : i64} {
  func.func @project_pre_kernel(%arg0: i32, %arg1: memref<128x16xf32, #tpu.memory_space<vmem>>, %arg2: memref<16x32xf32, #tpu.memory_space<vmem>>, %arg3: memref<1x32xf32, #tpu.memory_space<vmem>>, %arg4: memref<32x128xf32, #tpu.memory_space<vmem>>, %arg5: memref<1x128xf32, #tpu.memory_space<vmem>>, %arg6: memref<1x128xf32, #tpu.memory_space<vmem>>, %arg7: memref<128x128xf32, #tpu.memory_space<vmem>>, %arg8: memref<128x1xf32, #tpu.memory_space<vmem>>, %arg9: memref<1x128xf32, #tpu.memory_space<vmem>>) attributes {dimension_semantics = [#tpu.dimension_semantics<parallel>], iteration_bounds = array<i64: 3>, scalar_prefetch = 0 : i64, scratch_operands = 0 : i64, tpu.core_type = #tpu.core_type<tc>, window_params = [{transform_indices = @transform_0, window_bounds = array<i64: 128, 16>}, {pipeline_mode = #tpu.pipeline_mode<synchronous>, transform_indices = @transform_1, window_bounds = array<i64: 16, 32>}, {pipeline_mode = #tpu.pipeline_mode<synchronous>, transform_indices = @transform_2, window_bounds = array<i64: 1, 32>}, {pipeline_mode = #tpu.pipeline_mode<synchronous>, transform_indices = @transform_3, window_bounds = array<i64: 32, 128>}, {pipeline_mode = #tpu.pipeline_mode<synchronous>, transform_indices = @transform_4, window_bounds = array<i64: 1, 128>}, {pipeline_mode = #tpu.pipeline_mode<synchronous>, transform_indices = @transform_5, window_bounds = array<i64: 1, 128>}, {transform_indices = @transform_6, window_bounds = array<i64: 128, 128>}, {transform_indices = @transform_7, window_bounds = array<i64: 128, 1>}, {transform_indices = @transform_8, window_bounds = array<i64: 1, 128>}]} {
    %c0 = arith.constant 0 : index
    %c0_0 = arith.constant 0 : index
    %0 = vector.load %arg1[%c0, %c0_0] : memref<128x16xf32, #tpu.memory_space<vmem>>, vector<128x16xf32>
    %c0_1 = arith.constant 0 : index
    %c0_2 = arith.constant 0 : index
    %1 = vector.load %arg2[%c0_1, %c0_2] : memref<16x32xf32, #tpu.memory_space<vmem>>, vector<16x32xf32>
    %cst = arith.constant dense<0.000000e+00> : vector<128x32xf32>
    %2 = tpu.matmul %0, %1, %cst {dimension_numbers = #tpu.dot_dimension_numbers<[1], [0], [0], [1], [0, 0, 1, 1], [], []>} : vector<128x16xf32>, vector<16x32xf32>, vector<128x32xf32> -> vector<128x32xf32>
    %c0_3 = arith.constant 0 : index
    %c0_4 = arith.constant 0 : index
    %3 = vector.load %arg3[%c0_3, %c0_4] : memref<1x32xf32, #tpu.memory_space<vmem>>, vector<1x32xf32>
    %4 = vector.broadcast %3 : vector<1x32xf32> to vector<128x32xf32>
    %5 = arith.addf %2, %4 : vector<128x32xf32>
    %c0_5 = arith.constant 0 : index
    %c0_6 = arith.constant 0 : index
    %6 = vector.load %arg4[%c0_5, %c0_6] : memref<32x128xf32, #tpu.memory_space<vmem>>, vector<32x128xf32>
    %cst_7 = arith.constant dense<0.000000e+00> : vector<128x128xf32>
    %7 = tpu.matmul %5, %6, %cst_7 {dimension_numbers = #tpu.dot_dimension_numbers<[1], [0], [0], [1], [0, 0, 1, 1], [], []>} : vector<128x32xf32>, vector<32x128xf32>, vector<128x128xf32> -> vector<128x128xf32>
    %c0_8 = arith.constant 0 : index
    %c0_9 = arith.constant 0 : index
    %8 = vector.load %arg7[%c0_8, %c0_9] : memref<128x128xf32, #tpu.memory_space<vmem>>, vector<128x128xf32>
    tpu.vector_store %arg7[%c0_8, %c0_9], %7 {strides = array<i32>} : memref<128x128xf32, #tpu.memory_space<vmem>>, vector<128x128xf32>,
    %c0_10 = arith.constant 0 : index
    %c0_11 = arith.constant 0 : index
    %9 = vector.load %arg6[%c0_10, %c0_11] : memref<1x128xf32, #tpu.memory_space<vmem>>, vector<1x128xf32>
    %10 = vector.broadcast %9 : vector<1x128xf32> to vector<128x128xf32>
    %11 = arith.mulf %7, %10 : vector<128x128xf32>
    %cst_12 = arith.constant dense<0.000000e+00> : vector<128xf32>
    %12 = vector.multi_reduction <add>, %11, %cst_12 [1] : vector<128x128xf32> to vector<128xf32>
    %13 = vector.shape_cast %12 : vector<128xf32> to vector<128x1xf32>
    %c0_13 = arith.constant 0 : index
    %c0_14 = arith.constant 0 : index
    %14 = vector.load %arg8[%c0_13, %c0_14] : memref<128x1xf32, #tpu.memory_space<vmem>>, vector<128x1xf32>
    tpu.vector_store %arg8[%c0_13, %c0_14], %13 {strides = array<i32>} : memref<128x1xf32, #tpu.memory_space<vmem>>, vector<128x1xf32>,
    %c0_15 = arith.constant 0 : index
    %c0_16 = arith.constant 0 : index
    %15 = vector.load %arg5[%c0_15, %c0_16] : memref<1x128xf32, #tpu.memory_space<vmem>>, vector<1x128xf32>
    %cst_17 = arith.constant dense<0.000000e+00> : vector<1x128xf32>
    %16 = tpu.matmul %15, %7, %cst_17 {dimension_numbers = #tpu.dot_dimension_numbers<[1], [1], [0], [0], [0, 0, 1, 0], [], []>} : vector<1x128xf32>, vector<128x128xf32>, vector<1x128xf32> -> vector<1x128xf32>
    %c0_18 = arith.constant 0 : index
    %c0_19 = arith.constant 0 : index
    %17 = vector.load %arg9[%c0_18, %c0_19] : memref<1x128xf32, #tpu.memory_space<vmem>>, vector<1x128xf32>
    tpu.vector_store %arg9[%c0_18, %c0_19], %16 {strides = array<i32>} : memref<1x128xf32, #tpu.memory_space<vmem>>, vector<1x128xf32>,
    return
  }
  func.func @transform_0(%arg0: i32) -> (i32, i32) {
    %c0_i32 = arith.constant 0 : i32
    %c0_i32_0 = arith.constant 0 : i32
    return %arg0, %c0_i32 : i32, i32
  }
  func.func @transform_1(%arg0: i32) -> (i32, i32) {
    %c0_i32 = arith.constant 0 : i32
    %c0_i32_0 = arith.constant 0 : i32
    %c0_i32_1 = arith.constant 0 : i32
    return %c0_i32, %c0_i32_0 : i32, i32
  }
  func.func @transform_2(%arg0: i32) -> (i32, i32) {
    %c0_i32 = arith.constant 0 : i32
    %c0_i32_0 = arith.constant 0 : i32
    %c0_i32_1 = arith.constant 0 : i32
    return %c0_i32, %c0_i32_0 : i32, i32
  }
  func.func @transform_3(%arg0: i32) -> (i32, i32) {
    %c0_i32 = arith.constant 0 : i32
    %c0_i32_0 = arith.constant 0 : i32
    %c0_i32_1 = arith.constant 0 : i32
    return %c0_i32, %c0_i32_0 : i32, i32
  }
  func.func @transform_4(%arg0: i32) -> (i32, i32) {
    %c0_i32 = arith.constant 0 : i32
    %c0_i32_0 = arith.constant 0 : i32
    %c0_i32_1 = arith.constant 0 : i32
    return %c0_i32, %c0_i32_0 : i32, i32
  }
  func.func @transform_5(%arg0: i32) -> (i32, i32) {
    %c0_i32 = arith.constant 0 : i32
    %c0_i32_0 = arith.constant 0 : i32
    %c0_i32_1 = arith.constant 0 : i32
    return %c0_i32, %c0_i32_0 : i32, i32
  }
  func.func @transform_6(%arg0: i32) -> (i32, i32) {
    %c0_i32 = arith.constant 0 : i32
    %c0_i32_0 = arith.constant 0 : i32
    return %arg0, %c0_i32 : i32, i32
  }
  func.func @transform_7(%arg0: i32) -> (i32, i32) {
    %c0_i32 = arith.constant 0 : i32
    %c0_i32_0 = arith.constant 0 : i32
    return %arg0, %c0_i32 : i32, i32
  }
  func.func @transform_8(%arg0: i32) -> (i32, i32) {
    %c0_i32 = arith.constant 0 : i32
    %c0_i32_0 = arith.constant 0 : i32
    return %c0_i32, %arg0 : i32, i32
  }
}

module attributes {stable_mosaic.version = 11 : i64} {
  func.func @gat_attn_kernel(%arg0: i32, %arg1: i32, %arg2: memref<128x1xf32, #tpu.memory_space<vmem>>, %arg3: memref<1x128xf32, #tpu.memory_space<vmem>>, %arg4: memref<128x128xi8, #tpu.memory_space<vmem>>, %arg5: memref<128x128xf32, #tpu.memory_space<vmem>>, %arg6: memref<1x128xf32, #tpu.memory_space<vmem>>, %arg7: memref<128x128xf32, #tpu.memory_space<vmem>>, %arg8: memref<128x1xf32, #tpu.memory_space<vmem>>, %arg9: memref<128x1xf32, #tpu.memory_space<vmem>>, %arg10: memref<128x128xf32, #tpu.memory_space<vmem>>) attributes {dimension_semantics = [#tpu.dimension_semantics<parallel>, #tpu.dimension_semantics<arbitrary>], iteration_bounds = array<i64: 3, 3>, scalar_prefetch = 0 : i64, scratch_operands = 3 : i64, tpu.core_type = #tpu.core_type<tc>, window_params = [{transform_indices = @transform_0, window_bounds = array<i64: 128, 1>}, {transform_indices = @transform_1, window_bounds = array<i64: 1, 128>}, {transform_indices = @transform_2, window_bounds = array<i64: 128, 128>}, {transform_indices = @transform_3, window_bounds = array<i64: 128, 128>}, {pipeline_mode = #tpu.pipeline_mode<synchronous>, transform_indices = @transform_4, window_bounds = array<i64: 1, 128>}, {transform_indices = @transform_5, window_bounds = array<i64: 128, 128>}]} {
    %c0_i32 = arith.constant 0 : i32
    %0 = arith.cmpi eq, %arg1, %c0_i32 : i32
    %1 = arith.extui %0 : i1 to i32
    %c0_i32_0 = arith.constant 0 : i32
    %2 = arith.cmpi ne, %1, %c0_i32_0 : i32
    scf.if %2 {
      %cst_27 = arith.constant -1.000000e+30 : f32
      %46 = vector.broadcast %cst_27 : f32 to vector<128x1xf32>
      %c0_28 = arith.constant 0 : index
      %c0_29 = arith.constant 0 : index
      %47 = vector.load %arg8[%c0_28, %c0_29] : memref<128x1xf32, #tpu.memory_space<vmem>>, vector<128x1xf32>
      tpu.vector_store %arg8[%c0_28, %c0_29], %46 {strides = array<i32>} : memref<128x1xf32, #tpu.memory_space<vmem>>, vector<128x1xf32>,
      %cst_30 = arith.constant 0.000000e+00 : f32
      %48 = vector.broadcast %cst_30 : f32 to vector<128x1xf32>
      %c0_31 = arith.constant 0 : index
      %c0_32 = arith.constant 0 : index
      %49 = vector.load %arg9[%c0_31, %c0_32] : memref<128x1xf32, #tpu.memory_space<vmem>>, vector<128x1xf32>
      tpu.vector_store %arg9[%c0_31, %c0_32], %48 {strides = array<i32>} : memref<128x1xf32, #tpu.memory_space<vmem>>, vector<128x1xf32>,
      %cst_33 = arith.constant 0.000000e+00 : f32
      %50 = vector.broadcast %cst_33 : f32 to vector<128x128xf32>
      %c0_34 = arith.constant 0 : index
      %c0_35 = arith.constant 0 : index
      %51 = vector.load %arg10[%c0_34, %c0_35] : memref<128x128xf32, #tpu.memory_space<vmem>>, vector<128x128xf32>
      tpu.vector_store %arg10[%c0_34, %c0_35], %50 {strides = array<i32>} : memref<128x128xf32, #tpu.memory_space<vmem>>, vector<128x128xf32>,
    } else {
    }
    %c0 = arith.constant 0 : index
    %c0_1 = arith.constant 0 : index
    %3 = vector.load %arg4[%c0, %c0_1] : memref<128x128xi8, #tpu.memory_space<vmem>>, vector<128x128xi8>
    %4 = arith.sitofp %3 : vector<128x128xi8> to vector<128x128xf32>
    %c0_2 = arith.constant 0 : index
    %c0_3 = arith.constant 0 : index
    %5 = vector.load %arg2[%c0_2, %c0_3] : memref<128x1xf32, #tpu.memory_space<vmem>>, vector<128x1xf32>
    %c0_4 = arith.constant 0 : index
    %c0_5 = arith.constant 0 : index
    %6 = vector.load %arg3[%c0_4, %c0_5] : memref<1x128xf32, #tpu.memory_space<vmem>>, vector<1x128xf32>
    %7 = vector.broadcast %5 : vector<128x1xf32> to vector<128x128xf32>
    %8 = vector.broadcast %6 : vector<1x128xf32> to vector<128x128xf32>
    %9 = arith.addf %7, %8 : vector<128x128xf32>
    %cst = arith.constant 0.000000e+00 : f32
    %10 = vector.broadcast %cst : f32 to vector<128x128xf32>
    %11 = arith.cmpf oge, %9, %10 : vector<128x128xf32>
    %cst_6 = arith.constant 2.000000e-01 : f32
    %12 = vector.broadcast %cst_6 : f32 to vector<128x128xf32>
    %13 = arith.mulf %12, %9 : vector<128x128xf32>
    %14 = arith.select %11, %9, %13 : vector<128x128xi1>, vector<128x128xf32>
    %cst_7 = arith.constant 0.000000e+00 : f32
    %15 = vector.broadcast %cst_7 : f32 to vector<128x128xf32>
    %16 = arith.cmpf ogt, %4, %15 : vector<128x128xf32>
    %cst_8 = arith.constant -1.000000e+30 : f32
    %17 = vector.broadcast %cst_8 : f32 to vector<128x128xf32>
    %18 = arith.select %16, %14, %17 : vector<128x128xi1>, vector<128x128xf32>
    %c0_9 = arith.constant 0 : index
    %c0_10 = arith.constant 0 : index
    %19 = vector.load %arg8[%c0_9, %c0_10] : memref<128x1xf32, #tpu.memory_space<vmem>>, vector<128x1xf32>
    %cst_11 = arith.constant dense<0xFF800000> : vector<128xf32>
    %20 = vector.multi_reduction <maximumf>, %18, %cst_11 [1] : vector<128x128xf32> to vector<128xf32>
    %21 = vector.shape_cast %20 : vector<128xf32> to vector<128x1xf32>
    %22 = arith.maximumf %19, %21 : vector<128x1xf32>
    %23 = arith.subf %19, %22 : vector<128x1xf32>
    %24 = math.exp %23 : vector<128x1xf32>
    %25 = vector.broadcast %22 : vector<128x1xf32> to vector<128x128xf32>
    %26 = arith.subf %18, %25 : vector<128x128xf32>
    %27 = math.exp %26 : vector<128x128xf32>
    %28 = arith.mulf %27, %4 : vector<128x128xf32>
    %c0_12 = arith.constant 0 : index
    %c0_13 = arith.constant 0 : index
    %29 = vector.load %arg9[%c0_12, %c0_13] : memref<128x1xf32, #tpu.memory_space<vmem>>, vector<128x1xf32>
    %30 = arith.mulf %24, %29 : vector<128x1xf32>
    %cst_14 = arith.constant dense<0.000000e+00> : vector<128xf32>
    %31 = vector.multi_reduction <add>, %28, %cst_14 [1] : vector<128x128xf32> to vector<128xf32>
    %32 = vector.shape_cast %31 : vector<128xf32> to vector<128x1xf32>
    %33 = arith.addf %30, %32 : vector<128x1xf32>
    %c0_15 = arith.constant 0 : index
    %c0_16 = arith.constant 0 : index
    %34 = vector.load %arg9[%c0_15, %c0_16] : memref<128x1xf32, #tpu.memory_space<vmem>>, vector<128x1xf32>
    tpu.vector_store %arg9[%c0_15, %c0_16], %33 {strides = array<i32>} : memref<128x1xf32, #tpu.memory_space<vmem>>, vector<128x1xf32>,
    %c0_17 = arith.constant 0 : index
    %c0_18 = arith.constant 0 : index
    %35 = vector.load %arg10[%c0_17, %c0_18] : memref<128x128xf32, #tpu.memory_space<vmem>>, vector<128x128xf32>
    %36 = vector.broadcast %24 : vector<128x1xf32> to vector<128x128xf32>
    %37 = arith.mulf %36, %35 : vector<128x128xf32>
    %c0_19 = arith.constant 0 : index
    %c0_20 = arith.constant 0 : index
    %38 = vector.load %arg5[%c0_19, %c0_20] : memref<128x128xf32, #tpu.memory_space<vmem>>, vector<128x128xf32>
    %cst_21 = arith.constant dense<0.000000e+00> : vector<128x128xf32>
    %39 = tpu.matmul %28, %38, %cst_21 {dimension_numbers = #tpu.dot_dimension_numbers<[1], [0], [0], [1], [0, 0, 1, 1], [], []>} : vector<128x128xf32>, vector<128x128xf32>, vector<128x128xf32> -> vector<128x128xf32>
    %40 = arith.addf %37, %39 : vector<128x128xf32>
    %c0_22 = arith.constant 0 : index
    %c0_23 = arith.constant 0 : index
    %41 = vector.load %arg10[%c0_22, %c0_23] : memref<128x128xf32, #tpu.memory_space<vmem>>, vector<128x128xf32>
    tpu.vector_store %arg10[%c0_22, %c0_23], %40 {strides = array<i32>} : memref<128x128xf32, #tpu.memory_space<vmem>>, vector<128x128xf32>,
    %c0_24 = arith.constant 0 : index
    %c0_25 = arith.constant 0 : index
    %42 = vector.load %arg8[%c0_24, %c0_25] : memref<128x1xf32, #tpu.memory_space<vmem>>, vector<128x1xf32>
    tpu.vector_store %arg8[%c0_24, %c0_25], %22 {strides = array<i32>} : memref<128x1xf32, #tpu.memory_space<vmem>>, vector<128x1xf32>,
    %c2_i32 = arith.constant 2 : i32
    %43 = arith.cmpi eq, %arg1, %c2_i32 : i32
    %44 = arith.extui %43 : i1 to i32
    %c0_i32_26 = arith.constant 0 : i32
    %45 = arith.cmpi ne, %44, %c0_i32_26 : i32
    scf.if %45 {
      %c0_27 = arith.constant 0 : index
      %c0_28 = arith.constant 0 : index
      %46 = vector.load %arg10[%c0_27, %c0_28] : memref<128x128xf32, #tpu.memory_space<vmem>>, vector<128x128xf32>
      %c0_29 = arith.constant 0 : index
      %c0_30 = arith.constant 0 : index
      %47 = vector.load %arg9[%c0_29, %c0_30] : memref<128x1xf32, #tpu.memory_space<vmem>>, vector<128x1xf32>
      %48 = tpu.reciprocal %47 {approx = true} : vector<128x1xf32> -> vector<128x1xf32>
      %49 = vector.broadcast %48 : vector<128x1xf32> to vector<128x128xf32>
      %50 = arith.mulf %46, %49 : vector<128x128xf32>
      %c0_31 = arith.constant 0 : index
      %c0_32 = arith.constant 0 : index
      %51 = vector.load %arg6[%c0_31, %c0_32] : memref<1x128xf32, #tpu.memory_space<vmem>>, vector<1x128xf32>
      %52 = vector.broadcast %51 : vector<1x128xf32> to vector<128x128xf32>
      %53 = arith.addf %50, %52 : vector<128x128xf32>
      %cst_33 = arith.constant 0.000000e+00 : f32
      %54 = vector.broadcast %cst_33 : f32 to vector<128x128xf32>
      %55 = arith.maximumf %53, %54 : vector<128x128xf32>
      %c0_34 = arith.constant 0 : index
      %c0_35 = arith.constant 0 : index
      %56 = vector.load %arg7[%c0_34, %c0_35] : memref<128x128xf32, #tpu.memory_space<vmem>>, vector<128x128xf32>
      tpu.vector_store %arg7[%c0_34, %c0_35], %55 {strides = array<i32>} : memref<128x128xf32, #tpu.memory_space<vmem>>, vector<128x128xf32>,
    } else {
    }
    return
  }
  func.func @transform_0(%arg0: i32, %arg1: i32) -> (i32, i32) {
    %c0_i32 = arith.constant 0 : i32
    %c0_i32_0 = arith.constant 0 : i32
    return %arg0, %c0_i32 : i32, i32
  }
  func.func @transform_1(%arg0: i32, %arg1: i32) -> (i32, i32) {
    %c0_i32 = arith.constant 0 : i32
    %c0_i32_0 = arith.constant 0 : i32
    return %c0_i32, %arg1 : i32, i32
  }
  func.func @transform_2(%arg0: i32, %arg1: i32) -> (i32, i32) {
    %c0_i32 = arith.constant 0 : i32
    return %arg0, %arg1 : i32, i32
  }
  func.func @transform_3(%arg0: i32, %arg1: i32) -> (i32, i32) {
    %c0_i32 = arith.constant 0 : i32
    %c0_i32_0 = arith.constant 0 : i32
    return %arg1, %c0_i32 : i32, i32
  }
  func.func @transform_4(%arg0: i32, %arg1: i32) -> (i32, i32) {
    %c0_i32 = arith.constant 0 : i32
    %c0_i32_0 = arith.constant 0 : i32
    %c0_i32_1 = arith.constant 0 : i32
    return %c0_i32, %c0_i32_0 : i32, i32
  }
  func.func @transform_5(%arg0: i32, %arg1: i32) -> (i32, i32) {
    %c0_i32 = arith.constant 0 : i32
    %c0_i32_0 = arith.constant 0 : i32
    return %arg0, %c0_i32 : i32, i32
  }
}

module attributes {stable_mosaic.version = 11 : i64} {
  func.func @project_kernel(%arg0: i32, %arg1: memref<128x128xf32, #tpu.memory_space<vmem>>, %arg2: memref<128x128xf32, #tpu.memory_space<vmem>>, %arg3: memref<1x128xf32, #tpu.memory_space<vmem>>, %arg4: memref<1x128xf32, #tpu.memory_space<vmem>>, %arg5: memref<128x128xf32, #tpu.memory_space<vmem>>, %arg6: memref<128x1xf32, #tpu.memory_space<vmem>>, %arg7: memref<1x128xf32, #tpu.memory_space<vmem>>) attributes {dimension_semantics = [#tpu.dimension_semantics<parallel>], iteration_bounds = array<i64: 3>, scalar_prefetch = 0 : i64, scratch_operands = 0 : i64, tpu.core_type = #tpu.core_type<tc>, window_params = [{transform_indices = @transform_0, window_bounds = array<i64: 128, 128>}, {pipeline_mode = #tpu.pipeline_mode<synchronous>, transform_indices = @transform_1, window_bounds = array<i64: 128, 128>}, {pipeline_mode = #tpu.pipeline_mode<synchronous>, transform_indices = @transform_2, window_bounds = array<i64: 1, 128>}, {pipeline_mode = #tpu.pipeline_mode<synchronous>, transform_indices = @transform_3, window_bounds = array<i64: 1, 128>}, {transform_indices = @transform_4, window_bounds = array<i64: 128, 128>}, {transform_indices = @transform_5, window_bounds = array<i64: 128, 1>}, {transform_indices = @transform_6, window_bounds = array<i64: 1, 128>}]} {
    %c0 = arith.constant 0 : index
    %c0_0 = arith.constant 0 : index
    %0 = vector.load %arg1[%c0, %c0_0] : memref<128x128xf32, #tpu.memory_space<vmem>>, vector<128x128xf32>
    %c0_1 = arith.constant 0 : index
    %c0_2 = arith.constant 0 : index
    %1 = vector.load %arg2[%c0_1, %c0_2] : memref<128x128xf32, #tpu.memory_space<vmem>>, vector<128x128xf32>
    %cst = arith.constant dense<0.000000e+00> : vector<128x128xf32>
    %2 = tpu.matmul %0, %1, %cst {dimension_numbers = #tpu.dot_dimension_numbers<[1], [0], [0], [1], [0, 0, 1, 1], [], []>} : vector<128x128xf32>, vector<128x128xf32>, vector<128x128xf32> -> vector<128x128xf32>
    %c0_3 = arith.constant 0 : index
    %c0_4 = arith.constant 0 : index
    %3 = vector.load %arg5[%c0_3, %c0_4] : memref<128x128xf32, #tpu.memory_space<vmem>>, vector<128x128xf32>
    tpu.vector_store %arg5[%c0_3, %c0_4], %2 {strides = array<i32>} : memref<128x128xf32, #tpu.memory_space<vmem>>, vector<128x128xf32>,
    %c0_5 = arith.constant 0 : index
    %c0_6 = arith.constant 0 : index
    %4 = vector.load %arg4[%c0_5, %c0_6] : memref<1x128xf32, #tpu.memory_space<vmem>>, vector<1x128xf32>
    %5 = vector.broadcast %4 : vector<1x128xf32> to vector<128x128xf32>
    %6 = arith.mulf %2, %5 : vector<128x128xf32>
    %cst_7 = arith.constant dense<0.000000e+00> : vector<128xf32>
    %7 = vector.multi_reduction <add>, %6, %cst_7 [1] : vector<128x128xf32> to vector<128xf32>
    %8 = vector.shape_cast %7 : vector<128xf32> to vector<128x1xf32>
    %c0_8 = arith.constant 0 : index
    %c0_9 = arith.constant 0 : index
    %9 = vector.load %arg6[%c0_8, %c0_9] : memref<128x1xf32, #tpu.memory_space<vmem>>, vector<128x1xf32>
    tpu.vector_store %arg6[%c0_8, %c0_9], %8 {strides = array<i32>} : memref<128x1xf32, #tpu.memory_space<vmem>>, vector<128x1xf32>,
    %c0_10 = arith.constant 0 : index
    %c0_11 = arith.constant 0 : index
    %10 = vector.load %arg3[%c0_10, %c0_11] : memref<1x128xf32, #tpu.memory_space<vmem>>, vector<1x128xf32>
    %cst_12 = arith.constant dense<0.000000e+00> : vector<1x128xf32>
    %11 = tpu.matmul %10, %2, %cst_12 {dimension_numbers = #tpu.dot_dimension_numbers<[1], [1], [0], [0], [0, 0, 1, 0], [], []>} : vector<1x128xf32>, vector<128x128xf32>, vector<1x128xf32> -> vector<1x128xf32>
    %c0_13 = arith.constant 0 : index
    %c0_14 = arith.constant 0 : index
    %12 = vector.load %arg7[%c0_13, %c0_14] : memref<1x128xf32, #tpu.memory_space<vmem>>, vector<1x128xf32>
    tpu.vector_store %arg7[%c0_13, %c0_14], %11 {strides = array<i32>} : memref<1x128xf32, #tpu.memory_space<vmem>>, vector<1x128xf32>,
    return
  }
  func.func @transform_0(%arg0: i32) -> (i32, i32) {
    %c0_i32 = arith.constant 0 : i32
    %c0_i32_0 = arith.constant 0 : i32
    return %arg0, %c0_i32 : i32, i32
  }
  func.func @transform_1(%arg0: i32) -> (i32, i32) {
    %c0_i32 = arith.constant 0 : i32
    %c0_i32_0 = arith.constant 0 : i32
    %c0_i32_1 = arith.constant 0 : i32
    return %c0_i32, %c0_i32_0 : i32, i32
  }
  func.func @transform_2(%arg0: i32) -> (i32, i32) {
    %c0_i32 = arith.constant 0 : i32
    %c0_i32_0 = arith.constant 0 : i32
    %c0_i32_1 = arith.constant 0 : i32
    return %c0_i32, %c0_i32_0 : i32, i32
  }
  func.func @transform_3(%arg0: i32) -> (i32, i32) {
    %c0_i32 = arith.constant 0 : i32
    %c0_i32_0 = arith.constant 0 : i32
    %c0_i32_1 = arith.constant 0 : i32
    return %c0_i32, %c0_i32_0 : i32, i32
  }
  func.func @transform_4(%arg0: i32) -> (i32, i32) {
    %c0_i32 = arith.constant 0 : i32
    %c0_i32_0 = arith.constant 0 : i32
    return %arg0, %c0_i32 : i32, i32
  }
  func.func @transform_5(%arg0: i32) -> (i32, i32) {
    %c0_i32 = arith.constant 0 : i32
    %c0_i32_0 = arith.constant 0 : i32
    return %arg0, %c0_i32 : i32, i32
  }
  func.func @transform_6(%arg0: i32) -> (i32, i32) {
    %c0_i32 = arith.constant 0 : i32
    %c0_i32_0 = arith.constant 0 : i32
    return %c0_i32, %arg0 : i32, i32
  }
}

module attributes {stable_mosaic.version = 11 : i64} {
  func.func @gat_attn_kernel(%arg0: i32, %arg1: i32, %arg2: memref<128x1xf32, #tpu.memory_space<vmem>>, %arg3: memref<1x128xf32, #tpu.memory_space<vmem>>, %arg4: memref<128x128xi8, #tpu.memory_space<vmem>>, %arg5: memref<128x128xf32, #tpu.memory_space<vmem>>, %arg6: memref<1x128xf32, #tpu.memory_space<vmem>>, %arg7: memref<128x128xf32, #tpu.memory_space<vmem>>, %arg8: memref<128x1xf32, #tpu.memory_space<vmem>>, %arg9: memref<128x1xf32, #tpu.memory_space<vmem>>, %arg10: memref<128x128xf32, #tpu.memory_space<vmem>>) attributes {dimension_semantics = [#tpu.dimension_semantics<parallel>, #tpu.dimension_semantics<arbitrary>], iteration_bounds = array<i64: 3, 3>, scalar_prefetch = 0 : i64, scratch_operands = 3 : i64, tpu.core_type = #tpu.core_type<tc>, window_params = [{transform_indices = @transform_0, window_bounds = array<i64: 128, 1>}, {transform_indices = @transform_1, window_bounds = array<i64: 1, 128>}, {transform_indices = @transform_2, window_bounds = array<i64: 128, 128>}, {transform_indices = @transform_3, window_bounds = array<i64: 128, 128>}, {pipeline_mode = #tpu.pipeline_mode<synchronous>, transform_indices = @transform_4, window_bounds = array<i64: 1, 128>}, {transform_indices = @transform_5, window_bounds = array<i64: 128, 128>}]} {
    %c0_i32 = arith.constant 0 : i32
    %0 = arith.cmpi eq, %arg1, %c0_i32 : i32
    %1 = arith.extui %0 : i1 to i32
    %c0_i32_0 = arith.constant 0 : i32
    %2 = arith.cmpi ne, %1, %c0_i32_0 : i32
    scf.if %2 {
      %cst_27 = arith.constant -1.000000e+30 : f32
      %46 = vector.broadcast %cst_27 : f32 to vector<128x1xf32>
      %c0_28 = arith.constant 0 : index
      %c0_29 = arith.constant 0 : index
      %47 = vector.load %arg8[%c0_28, %c0_29] : memref<128x1xf32, #tpu.memory_space<vmem>>, vector<128x1xf32>
      tpu.vector_store %arg8[%c0_28, %c0_29], %46 {strides = array<i32>} : memref<128x1xf32, #tpu.memory_space<vmem>>, vector<128x1xf32>,
      %cst_30 = arith.constant 0.000000e+00 : f32
      %48 = vector.broadcast %cst_30 : f32 to vector<128x1xf32>
      %c0_31 = arith.constant 0 : index
      %c0_32 = arith.constant 0 : index
      %49 = vector.load %arg9[%c0_31, %c0_32] : memref<128x1xf32, #tpu.memory_space<vmem>>, vector<128x1xf32>
      tpu.vector_store %arg9[%c0_31, %c0_32], %48 {strides = array<i32>} : memref<128x1xf32, #tpu.memory_space<vmem>>, vector<128x1xf32>,
      %cst_33 = arith.constant 0.000000e+00 : f32
      %50 = vector.broadcast %cst_33 : f32 to vector<128x128xf32>
      %c0_34 = arith.constant 0 : index
      %c0_35 = arith.constant 0 : index
      %51 = vector.load %arg10[%c0_34, %c0_35] : memref<128x128xf32, #tpu.memory_space<vmem>>, vector<128x128xf32>
      tpu.vector_store %arg10[%c0_34, %c0_35], %50 {strides = array<i32>} : memref<128x128xf32, #tpu.memory_space<vmem>>, vector<128x128xf32>,
    } else {
    }
    %c0 = arith.constant 0 : index
    %c0_1 = arith.constant 0 : index
    %3 = vector.load %arg4[%c0, %c0_1] : memref<128x128xi8, #tpu.memory_space<vmem>>, vector<128x128xi8>
    %4 = arith.sitofp %3 : vector<128x128xi8> to vector<128x128xf32>
    %c0_2 = arith.constant 0 : index
    %c0_3 = arith.constant 0 : index
    %5 = vector.load %arg2[%c0_2, %c0_3] : memref<128x1xf32, #tpu.memory_space<vmem>>, vector<128x1xf32>
    %c0_4 = arith.constant 0 : index
    %c0_5 = arith.constant 0 : index
    %6 = vector.load %arg3[%c0_4, %c0_5] : memref<1x128xf32, #tpu.memory_space<vmem>>, vector<1x128xf32>
    %7 = vector.broadcast %5 : vector<128x1xf32> to vector<128x128xf32>
    %8 = vector.broadcast %6 : vector<1x128xf32> to vector<128x128xf32>
    %9 = arith.addf %7, %8 : vector<128x128xf32>
    %cst = arith.constant 0.000000e+00 : f32
    %10 = vector.broadcast %cst : f32 to vector<128x128xf32>
    %11 = arith.cmpf oge, %9, %10 : vector<128x128xf32>
    %cst_6 = arith.constant 2.000000e-01 : f32
    %12 = vector.broadcast %cst_6 : f32 to vector<128x128xf32>
    %13 = arith.mulf %12, %9 : vector<128x128xf32>
    %14 = arith.select %11, %9, %13 : vector<128x128xi1>, vector<128x128xf32>
    %cst_7 = arith.constant 0.000000e+00 : f32
    %15 = vector.broadcast %cst_7 : f32 to vector<128x128xf32>
    %16 = arith.cmpf ogt, %4, %15 : vector<128x128xf32>
    %cst_8 = arith.constant -1.000000e+30 : f32
    %17 = vector.broadcast %cst_8 : f32 to vector<128x128xf32>
    %18 = arith.select %16, %14, %17 : vector<128x128xi1>, vector<128x128xf32>
    %c0_9 = arith.constant 0 : index
    %c0_10 = arith.constant 0 : index
    %19 = vector.load %arg8[%c0_9, %c0_10] : memref<128x1xf32, #tpu.memory_space<vmem>>, vector<128x1xf32>
    %cst_11 = arith.constant dense<0xFF800000> : vector<128xf32>
    %20 = vector.multi_reduction <maximumf>, %18, %cst_11 [1] : vector<128x128xf32> to vector<128xf32>
    %21 = vector.shape_cast %20 : vector<128xf32> to vector<128x1xf32>
    %22 = arith.maximumf %19, %21 : vector<128x1xf32>
    %23 = arith.subf %19, %22 : vector<128x1xf32>
    %24 = math.exp %23 : vector<128x1xf32>
    %25 = vector.broadcast %22 : vector<128x1xf32> to vector<128x128xf32>
    %26 = arith.subf %18, %25 : vector<128x128xf32>
    %27 = math.exp %26 : vector<128x128xf32>
    %28 = arith.mulf %27, %4 : vector<128x128xf32>
    %c0_12 = arith.constant 0 : index
    %c0_13 = arith.constant 0 : index
    %29 = vector.load %arg9[%c0_12, %c0_13] : memref<128x1xf32, #tpu.memory_space<vmem>>, vector<128x1xf32>
    %30 = arith.mulf %24, %29 : vector<128x1xf32>
    %cst_14 = arith.constant dense<0.000000e+00> : vector<128xf32>
    %31 = vector.multi_reduction <add>, %28, %cst_14 [1] : vector<128x128xf32> to vector<128xf32>
    %32 = vector.shape_cast %31 : vector<128xf32> to vector<128x1xf32>
    %33 = arith.addf %30, %32 : vector<128x1xf32>
    %c0_15 = arith.constant 0 : index
    %c0_16 = arith.constant 0 : index
    %34 = vector.load %arg9[%c0_15, %c0_16] : memref<128x1xf32, #tpu.memory_space<vmem>>, vector<128x1xf32>
    tpu.vector_store %arg9[%c0_15, %c0_16], %33 {strides = array<i32>} : memref<128x1xf32, #tpu.memory_space<vmem>>, vector<128x1xf32>,
    %c0_17 = arith.constant 0 : index
    %c0_18 = arith.constant 0 : index
    %35 = vector.load %arg10[%c0_17, %c0_18] : memref<128x128xf32, #tpu.memory_space<vmem>>, vector<128x128xf32>
    %36 = vector.broadcast %24 : vector<128x1xf32> to vector<128x128xf32>
    %37 = arith.mulf %36, %35 : vector<128x128xf32>
    %c0_19 = arith.constant 0 : index
    %c0_20 = arith.constant 0 : index
    %38 = vector.load %arg5[%c0_19, %c0_20] : memref<128x128xf32, #tpu.memory_space<vmem>>, vector<128x128xf32>
    %cst_21 = arith.constant dense<0.000000e+00> : vector<128x128xf32>
    %39 = tpu.matmul %28, %38, %cst_21 {dimension_numbers = #tpu.dot_dimension_numbers<[1], [0], [0], [1], [0, 0, 1, 1], [], []>} : vector<128x128xf32>, vector<128x128xf32>, vector<128x128xf32> -> vector<128x128xf32>
    %40 = arith.addf %37, %39 : vector<128x128xf32>
    %c0_22 = arith.constant 0 : index
    %c0_23 = arith.constant 0 : index
    %41 = vector.load %arg10[%c0_22, %c0_23] : memref<128x128xf32, #tpu.memory_space<vmem>>, vector<128x128xf32>
    tpu.vector_store %arg10[%c0_22, %c0_23], %40 {strides = array<i32>} : memref<128x128xf32, #tpu.memory_space<vmem>>, vector<128x128xf32>,
    %c0_24 = arith.constant 0 : index
    %c0_25 = arith.constant 0 : index
    %42 = vector.load %arg8[%c0_24, %c0_25] : memref<128x1xf32, #tpu.memory_space<vmem>>, vector<128x1xf32>
    tpu.vector_store %arg8[%c0_24, %c0_25], %22 {strides = array<i32>} : memref<128x1xf32, #tpu.memory_space<vmem>>, vector<128x1xf32>,
    %c2_i32 = arith.constant 2 : i32
    %43 = arith.cmpi eq, %arg1, %c2_i32 : i32
    %44 = arith.extui %43 : i1 to i32
    %c0_i32_26 = arith.constant 0 : i32
    %45 = arith.cmpi ne, %44, %c0_i32_26 : i32
    scf.if %45 {
      %c0_27 = arith.constant 0 : index
      %c0_28 = arith.constant 0 : index
      %46 = vector.load %arg10[%c0_27, %c0_28] : memref<128x128xf32, #tpu.memory_space<vmem>>, vector<128x128xf32>
      %c0_29 = arith.constant 0 : index
      %c0_30 = arith.constant 0 : index
      %47 = vector.load %arg9[%c0_29, %c0_30] : memref<128x1xf32, #tpu.memory_space<vmem>>, vector<128x1xf32>
      %48 = tpu.reciprocal %47 {approx = true} : vector<128x1xf32> -> vector<128x1xf32>
      %49 = vector.broadcast %48 : vector<128x1xf32> to vector<128x128xf32>
      %50 = arith.mulf %46, %49 : vector<128x128xf32>
      %c0_31 = arith.constant 0 : index
      %c0_32 = arith.constant 0 : index
      %51 = vector.load %arg6[%c0_31, %c0_32] : memref<1x128xf32, #tpu.memory_space<vmem>>, vector<1x128xf32>
      %52 = vector.broadcast %51 : vector<1x128xf32> to vector<128x128xf32>
      %53 = arith.addf %50, %52 : vector<128x128xf32>
      %54 = arith.mulf %53, %53 : vector<128x128xf32>
      %cst_33 = arith.constant dense<0.000000e+00> : vector<128xf32>
      %55 = vector.multi_reduction <add>, %54, %cst_33 [1] : vector<128x128xf32> to vector<128xf32>
      %56 = vector.shape_cast %55 : vector<128xf32> to vector<128x1xf32>
      %cst_34 = arith.constant 1.000000e-24 : f32
      %57 = vector.broadcast %cst_34 : f32 to vector<128x1xf32>
      %58 = arith.maximumf %56, %57 : vector<128x1xf32>
      %59 = math.rsqrt %58 : vector<128x1xf32>
      %60 = vector.broadcast %59 : vector<128x1xf32> to vector<128x128xf32>
      %61 = arith.mulf %53, %60 : vector<128x128xf32>
      %c0_35 = arith.constant 0 : index
      %c0_36 = arith.constant 0 : index
      %62 = vector.load %arg7[%c0_35, %c0_36] : memref<128x128xf32, #tpu.memory_space<vmem>>, vector<128x128xf32>
      tpu.vector_store %arg7[%c0_35, %c0_36], %61 {strides = array<i32>} : memref<128x128xf32, #tpu.memory_space<vmem>>, vector<128x128xf32>,
    } else {
    }
    return
  }
  func.func @transform_0(%arg0: i32, %arg1: i32) -> (i32, i32) {
    %c0_i32 = arith.constant 0 : i32
    %c0_i32_0 = arith.constant 0 : i32
    return %arg0, %c0_i32 : i32, i32
  }
  func.func @transform_1(%arg0: i32, %arg1: i32) -> (i32, i32) {
    %c0_i32 = arith.constant 0 : i32
    %c0_i32_0 = arith.constant 0 : i32
    return %c0_i32, %arg1 : i32, i32
  }
  func.func @transform_2(%arg0: i32, %arg1: i32) -> (i32, i32) {
    %c0_i32 = arith.constant 0 : i32
    return %arg0, %arg1 : i32, i32
  }
  func.func @transform_3(%arg0: i32, %arg1: i32) -> (i32, i32) {
    %c0_i32 = arith.constant 0 : i32
    %c0_i32_0 = arith.constant 0 : i32
    return %arg1, %c0_i32 : i32, i32
  }
  func.func @transform_4(%arg0: i32, %arg1: i32) -> (i32, i32) {
    %c0_i32 = arith.constant 0 : i32
    %c0_i32_0 = arith.constant 0 : i32
    %c0_i32_1 = arith.constant 0 : i32
    return %c0_i32, %c0_i32_0 : i32, i32
  }
  func.func @transform_5(%arg0: i32, %arg1: i32) -> (i32, i32) {
    %c0_i32 = arith.constant 0 : i32
    %c0_i32_0 = arith.constant 0 : i32
    return %arg0, %c0_i32 : i32, i32
  }
}

</mosaic_0001>

<llo_original>
// kernel: gat_forward.4
$region0: #{gat_forward.4}
  #allocation0 [shape = 'u32[]', space=smem, size = 0x4, offset = 0x4, fixed_abs, tag = 'smem constant byte address 0x4 - core index']
  #allocation1 [shape = 'u32[144,128]{1,0:T(1,128)}', space=vmem, size = 0x12000, scoped, tag = 'internal scratch']
  %s0 = inlined_call_operand.vmem [shape: f32[384,16], index: 0, kind: input, shape index: {}]
  %s1 = inlined_call_operand.vmem [shape: f32[16,32], index: 1, kind: input, shape index: {}]
  %s2 = inlined_call_operand.vmem [shape: f32[1,32], index: 2, kind: input, shape index: {}]
  %s3 = inlined_call_operand.vmem [shape: f32[32,128], index: 3, kind: input, shape index: {}]
  %s4 = inlined_call_operand.vmem [shape: f32[1,128], index: 4, kind: input, shape index: {}]
  %s5 = inlined_call_operand.vmem [shape: f32[1,128], index: 5, kind: input, shape index: {}]
  %s6 = inlined_call_operand.vmem [shape: f32[384,128], index: 6, kind: output, shape index: {0}]
  %s7 = inlined_call_operand.vmem [shape: f32[384,1], index: 7, kind: output, shape index: {1}]
  %s8 = inlined_call_operand.vmem [shape: f32[1,384], index: 8, kind: output, shape index: {2}]
  %9 = xla_tuple %s6, %s7, %s8
  %s10 = sld [smem:[#allocation0]]
  $region73: #{gat_forward.4} parent=0
    _
  %s12 = ssub.s32 1, %s10
  %s13 = scalar_select 0, %s12, %s10
  loop: start=0, step=1, limit=5
  $region2: #{gat_forward.4} parent=0 // loop_pre_header
    _
  $region3: #{gat_forward.4} parent=0 // loop_header
    %s15 = sphi 0, %s19
    %p16 = scmp.ge.s32.totalorder %s15, 5
    %s25 = sphi 0, %s27
    %s28 = sphi 0, %s25
    %s29 = sphi 0, %s28
    %s45 = sphi 0, %s29
    %s49 = sphi 0, %s49
    %s51 = sphi 0, %s49
    %s52 = sphi 0, %s51
    %s66 = sphi 0, %s52
    %s70 = sphi 0, %s70
    %s72 = sphi 0, %s70
    %s73 = sphi 0, %s72
    %s87 = sphi 0, %s73
    %s91 = sphi 0, %s91
    %s93 = sphi 0, %s91
    %s94 = sphi 0, %s93
    %s108 = sphi 0, %s94
    %s112 = sphi 0, %s112
    %s114 = sphi 0, %s112
    %s115 = sphi 0, %s114
    %s129 = sphi 0, %s115
    %s133 = sphi 0, %s133
    %s135 = sphi 0, %s133
    %s136 = sphi 0, %s135
    %s150 = sphi 0, %s136
    %s156 = sphi 0, %s158
    %s159 = sphi 0, %s156
    %s160 = sphi 0, %s159
    %s176 = sphi 0, %s160
    %s182 = sphi 0, %s184
    %s185 = sphi 0, %s182
    %s186 = sphi 0, %s185
    %s202 = sphi 0, %s186
    %s208 = sphi 0, %s210
    %s211 = sphi 0, %s208
    %s212 = sphi 0, %s211
    %s228 = sphi 0, %s212
  $region4: #{gat_forward.4} parent=0 // loop_header_branch
    %18 = sbr.rel (%p16) target = $region8
  $region5: #{gat_forward.4} parent=0 // loop_body
    %s20 = ssub.s32 %s15, 1
    %s21 = ssub.s32 %s15, 2
    %s22 = sadd.s32 %s15, 1
    %s23 = ssub.s32 %s15, %s22
    %p24 = scmp.eq.s32.totalorder %s23, 0
    %s26 = sadd.s32 %s25, 1
    %s27 = scalar_select %p24, %s25, %s26
    %p30 = pneg %p24
    %p31 = scmp.eq.s32.totalorder %s15, 2
    %p32 = por %p30, %p31
    %p33 = scmp.ne.s32.totalorder %s25, %s28
    %p34 = scmp.eq.s32.totalorder %s15, 0
    %p35 = por %p33, %p34
    %p36 = scmp.ne.s32.totalorder %s25, %s28
    %p37 = scmp.eq.s32.totalorder %s20, 2
    %p38 = por %p36, %p37
    %p39 = scmp.ne.s32.totalorder %s28, %s29
    %p40 = scmp.eq.s32.totalorder %s20, 0
    %p41 = por %p39, %p40
    %p42 = scmp.ne.s32.totalorder %s28, %s29
    %p43 = scmp.eq.s32.totalorder %s21, 2
    %p44 = por %p42, %p43
    %p46 = scmp.ne.s32.totalorder %s29, %s45
    %p47 = scmp.eq.s32.totalorder %s21, 0
    %p48 = por %p46, %p47
    %s50 = sadd.s32 %s49, 1
    %p53 = scmp.eq.s32.totalorder %s15, 2
    %p54 = scmp.ne.s32.totalorder %s49, %s51
    %p55 = scmp.eq.s32.totalorder %s15, 0
    %p56 = por %p54, %p55
    %p57 = scmp.ne.s32.totalorder %s49, %s51
    %p58 = scmp.eq.s32.totalorder %s20, 2
    %p59 = por %p57, %p58
    %p60 = scmp.ne.s32.totalorder %s51, %s52
    %p61 = scmp.eq.s32.totalorder %s20, 0
    %p62 = por %p60, %p61
    %p63 = scmp.ne.s32.totalorder %s51, %s52
    %p64 = scmp.eq.s32.totalorder %s21, 2
    %p65 = por %p63, %p64
    %p67 = scmp.ne.s32.totalorder %s52, %s66
    %p68 = scmp.eq.s32.totalorder %s21, 0
    %p69 = por %p67, %p68
    %s71 = sadd.s32 %s70, 1
    %p74 = scmp.eq.s32.totalorder %s15, 2
    %p75 = scmp.ne.s32.totalorder %s70, %s72
    %p76 = scmp.eq.s32.totalorder %s15, 0
    %p77 = por %p75, %p76
    %p78 = scmp.ne.s32.totalorder %s70, %s72
    %p79 = scmp.eq.s32.totalorder %s20, 2
    %p80 = por %p78, %p79
    %p81 = scmp.ne.s32.totalorder %s72, %s73
    %p82 = scmp.eq.s32.totalorder %s20, 0
    %p83 = por %p81, %p82
    %p84 = scmp.ne.s32.totalorder %s72, %s73
    %p85 = scmp.eq.s32.totalorder %s21, 2
    %p86 = por %p84, %p85
    %p88 = scmp.ne.s32.totalorder %s73, %s87
    %p89 = scmp.eq.s32.totalorder %s21, 0
    %p90 = por %p88, %p89
    %s92 = sadd.s32 %s91, 1
    %p95 = scmp.eq.s32.totalorder %s15, 2
    %p96 = scmp.ne.s32.totalorder %s91, %s93
    %p97 = scmp.eq.s32.totalorder %s15, 0
    %p98 = por %p96, %p97
    %p99 = scmp.ne.s32.totalorder %s91, %s93
    %p100 = scmp.eq.s32.totalorder %s20, 2
    %p101 = por %p99, %p100
    %p102 = scmp.ne.s32.totalorder %s93, %s94
    %p103 = scmp.eq.s32.totalorder %s20, 0
    %p104 = por %p102, %p103
    %p105 = scmp.ne.s32.totalorder %s93, %s94
    %p106 = scmp.eq.s32.totalorder %s21, 2
    %p107 = por %p105, %p106
    %p109 = scmp.ne.s32.totalorder %s94, %s108
    %p110 = scmp.eq.s32.totalorder %s21, 0
    %p111 = por %p109, %p110
    %s113 = sadd.s32 %s112, 1
    %p116 = scmp.eq.s32.totalorder %s15, 2
    %p117 = scmp.ne.s32.totalorder %s112, %s114
    %p118 = scmp.eq.s32.totalorder %s15, 0
    %p119 = por %p117, %p118
    %p120 = scmp.ne.s32.totalorder %s112, %s114
    %p121 = scmp.eq.s32.totalorder %s20, 2
    %p122 = por %p120, %p121
    %p123 = scmp.ne.s32.totalorder %s114, %s115
    %p124 = scmp.eq.s32.totalorder %s20, 0
    %p125 = por %p123, %p124
    %p126 = scmp.ne.s32.totalorder %s114, %s115
    %p127 = scmp.eq.s32.totalorder %s21, 2
    %p128 = por %p126, %p127
    %p130 = scmp.ne.s32.totalorder %s115, %s129
    %p131 = scmp.eq.s32.totalorder %s21, 0
    %p132 = por %p130, %p131
    %s134 = sadd.s32 %s133, 1
    %p137 = scmp.eq.s32.totalorder %s15, 2
    %p138 = scmp.ne.s32.totalorder %s133, %s135
    %p139 = scmp.eq.s32.totalorder %s15, 0
    %p140 = por %p138, %p139
    %p141 = scmp.ne.s32.totalorder %s133, %s135
    %p142 = scmp.eq.s32.totalorder %s20, 2
    %p143 = por %p141, %p142
    %p144 = scmp.ne.s32.totalorder %s135, %s136
    %p145 = scmp.eq.s32.totalorder %s20, 0
    %p146 = por %p144, %p145
    %p147 = scmp.ne.s32.totalorder %s135, %s136
    %p148 = scmp.eq.s32.totalorder %s21, 2
    %p149 = por %p147, %p148
    %p151 = scmp.ne.s32.totalorder %s136, %s150
    %p152 = scmp.eq.s32.totalorder %s21, 0
    %p153 = por %p151, %p152
    %s154 = ssub.s32 %s15, %s22
    %p155 = scmp.eq.s32.totalorder %s154, 0
    %s157 = sadd.s32 %s156, 1
    %s158 = scalar_select %p155, %s156, %s157
    %p161 = pneg %p155
    %p162 = scmp.eq.s32.totalorder %s15, 2
    %p163 = por %p161, %p162
    %p164 = scmp.ne.s32.totalorder %s156, %s159
    %p165 = scmp.eq.s32.totalorder %s15, 0
    %p166 = por %p164, %p165
    %p167 = scmp.ne.s32.totalorder %s156, %s159
    %p168 = scmp.eq.s32.totalorder %s20, 2
    %p169 = por %p167, %p168
    %p170 = scmp.ne.s32.totalorder %s159, %s160
    %p171 = scmp.eq.s32.totalorder %s20, 0
    %p172 = por %p170, %p171
    %p173 = scmp.ne.s32.totalorder %s159, %s160
    %p174 = scmp.eq.s32.totalorder %s21, 2
    %p175 = por %p173, %p174
    %p177 = scmp.ne.s32.totalorder %s160, %s176
    %p178 = scmp.eq.s32.totalorder %s21, 0
    %p179 = por %p177, %p178
    %s180 = ssub.s32 %s15, %s22
    %p181 = scmp.eq.s32.totalorder %s180, 0
    %s183 = sadd.s32 %s182, 1
    %s184 = scalar_select %p181, %s182, %s183
    %p187 = pneg %p181
    %p188 = scmp.eq.s32.totalorder %s15, 2
    %p189 = por %p187, %p188
    %p190 = scmp.ne.s32.totalorder %s182, %s185
    %p191 = scmp.eq.s32.totalorder %s15, 0
    %p192 = por %p190, %p191
    %p193 = scmp.ne.s32.totalorder %s182, %s185
    %p194 = scmp.eq.s32.totalorder %s20, 2
    %p195 = por %p193, %p194
    %p196 = scmp.ne.s32.totalorder %s185, %s186
    %p197 = scmp.eq.s32.totalorder %s20, 0
    %p198 = por %p196, %p197
    %p199 = scmp.ne.s32.totalorder %s185, %s186
    %p200 = scmp.eq.s32.totalorder %s21, 2
    %p201 = por %p199, %p200
    %p203 = scmp.ne.s32.totalorder %s186, %s202
    %p204 = scmp.eq.s32.totalorder %s21, 0
    %p205 = por %p203, %p204
    %s206 = ssub.s32 %s15, %s22
    %p207 = scmp.eq.s32.totalorder %s206, 0
    %s209 = sadd.s32 %s208, 1
    %s210 = scalar_select %p207, %s208, %s209
    %p213 = pneg %p207
    %p214 = scmp.eq.s32.totalorder %s15, 2
    %p215 = por %p213, %p214
    %p216 = scmp.ne.s32.totalorder %s208, %s211
    %p217 = scmp.eq.s32.totalorder %s15, 0
    %p218 = por %p216, %p217
    %p219 = scmp.ne.s32.totalorder %s208, %s211
    %p220 = scmp.eq.s32.totalorder %s20, 2
    %p221 = por %p219, %p220
    %p222 = scmp.ne.s32.totalorder %s211, %s212
    %p223 = scmp.eq.s32.totalorder %s20, 0
    %p224 = por %p222, %p223
    %p225 = scmp.ne.s32.totalorder %s211, %s212
    %p226 = scmp.eq.s32.totalorder %s21, 2
    %p227 = por %p225, %p226
    %p229 = scmp.ne.s32.totalorder %s212, %s228
    %p230 = scmp.eq.s32.totalorder %s21, 0
    %p231 = por %p229, %p230
    %p232 = scmp.le.s32.totalorder 1, %s15
    %p233 = scmp.lt.s32.totalorder %s15, 4
    %p234 = pnand %p232, %p233
    %p235 = pneg %p234
    // Predicated region
    $region9: #{gat_forward.4} parent=5 // pred_check
      _
    $region10: #{gat_forward.4} parent=5 // pred_check_branch
      %237 = sbr.rel (%p234) target = $region12
    $region11: #{gat_forward.4} parent=5 // pred_region
      %s238 = ssub.s32 %s15, 1
      // Predicated region
      $region13: #{gat_forward.4} parent=11 // pred_check
        %p239 = pneg %p62
      $region14: #{gat_forward.4} parent=11 // pred_check_branch
        %241 = sbr.rel (%p239) target = $region16
      $region15: #{gat_forward.4} parent=11 // pred_region
        _
      $region16: #{gat_forward.4} parent=11 // pred_fallthru
        _
      // Predicated region
      $region17: #{gat_forward.4} parent=11 // pred_check
        %p242 = pneg %p83
      $region18: #{gat_forward.4} parent=11 // pred_check_branch
        %244 = sbr.rel (%p242) target = $region20
      $region19: #{gat_forward.4} parent=11 // pred_region
        _
      $region20: #{gat_forward.4} parent=11 // pred_fallthru
        _
      // Predicated region
      $region21: #{gat_forward.4} parent=11 // pred_check
        %p245 = pneg %p104
      $region22: #{gat_forward.4} parent=11 // pred_check_branch
        %247 = sbr.rel (%p245) target = $region24
      $region23: #{gat_forward.4} parent=11 // pred_region
        _
      $region24: #{gat_forward.4} parent=11 // pred_fallthru
        _
      // Predicated region
      $region25: #{gat_forward.4} parent=11 // pred_check
        %p248 = pneg %p125
      $region26: #{gat_forward.4} parent=11 // pred_check_branch
        %250 = sbr.rel (%p248) target = $region28
      $region27: #{gat_forward.4} parent=11 // pred_region
        _
      $region28: #{gat_forward.4} parent=11 // pred_fallthru
        _
      // Predicated region
      $region29: #{gat_forward.4} parent=11 // pred_check
        %p251 = pneg %p146
      $region30: #{gat_forward.4} parent=11 // pred_check_branch
        %253 = sbr.rel (%p251) target = $region32
      $region31: #{gat_forward.4} parent=11 // pred_region
        _
      $region32: #{gat_forward.4} parent=11 // pred_fallthru
        _
    $region12: #{gat_forward.4} parent=5 // pred_fallthru
      _
    %p254 = scmp.lt.s32.totalorder %s15, 3
    // Predicated region
    $region33: #{gat_forward.4} parent=5 // pred_check
      %p255 = pneg %p254
    $region34: #{gat_forward.4} parent=5 // pred_check_branch
      %257 = sbr.rel (%p255) target = $region36
    $region35: #{gat_forward.4} parent=5 // pred_region
      // Predicated region
      $region37: #{gat_forward.4} parent=35 // pred_check
        %p258 = pneg %p35
      $region38: #{gat_forward.4} parent=35 // pred_check_branch
        %260 = sbr.rel (%p258) target = $region40
      $region39: #{gat_forward.4} parent=35 // pred_region
        %s261 = smul.u32 16, %s15
        %p262 = scmp.lt.s32.totalorder %s261, 47
        %s263 = scalar_select %p262, %s261, 47
        %s264 = smul.addr %s263, 8
        %s265 = scalar_lea.vmem %s0, %s264
        %s266 = smul.u32 16, %s15
      $region40: #{gat_forward.4} parent=35 // pred_fallthru
        _
    $region36: #{gat_forward.4} parent=5 // pred_fallthru
      _
    %p267 = scmp.le.s32.totalorder 1, %s15
    %p268 = scmp.lt.s32.totalorder %s15, 4
    %p269 = pnand %p267, %p268
    %p270 = pneg %p269
    // Predicated region
    $region41: #{gat_forward.4} parent=5 // pred_check
      _
    $region42: #{gat_forward.4} parent=5 // pred_check_branch
      %272 = sbr.rel (%p269) target = $region44
    $region43: #{gat_forward.4} parent=5 // pred_region
      %s273 = ssub.s32 %s15, 1
      %s274 = smul.u32 16, %s20
      %p275 = scmp.lt.s32.totalorder %s274, 47
      %s276 = scalar_select %p275, %s274, 47
      %s277 = smul.addr %s276, 8
      %s278 = scalar_lea.vmem %s0, %s277
      %p279 = pneg %p41
      %p280 = pneg %p38
      %p281 = pneg %p62
      %p282 = pneg %p59
      %p283 = pneg %p83
      %p284 = pneg %p80
      %p285 = pneg %p104
      %p286 = pneg %p101
      %p287 = pneg %p125
      %p288 = pneg %p122
      %p289 = pneg %p146
      %p290 = pneg %p143
      %p291 = pneg %p172
      %p292 = pneg %p169
      %s293 = smul.u32 16, %s20
      %p294 = scmp.lt.s32.totalorder %s293, 47
      %s295 = scalar_select %p294, %s293, 47
      %s296 = smul.addr %s295, 8
      %s297 = scalar_lea.vmem %s6, %s296
      %p298 = pneg %p198
      %p299 = pneg %p195
      %s300 = smul.u32 16, %s20
      %p301 = scmp.lt.s32.totalorder %s300, 47
      %s302 = scalar_select %p301, %s300, 47
      %s303 = smul.addr %s302, 8
      %s304 = scalar_lea.vmem %s7, %s303
      %p305 = pneg %p224
      %p306 = pneg %p221
      %p307 = scmp.lt.s32.totalorder %s20, 2
      %s308 = scalar_select %p307, %s20, 2
      %s309 = scalar_lea.vmem %s8, %s308
      %s310 = smul.u32 16, %s20
      %p311 = scmp.lt.s32.totalorder %s310, 47
      %s312 = scalar_select %p311, %s310, 47
      %s313 = smul.addr %s312, 8
      %s314 = scalar_lea.vmem %s0, %s313
      %s315 = smul.u32 16, %s20
      %s316 = smul.u32 16, %s20
      %p317 = scmp.lt.s32.totalorder %s316, 47
      %s318 = scalar_select %p317, %s316, 47
      %s319 = smul.addr %s318, 8
      %s320 = scalar_lea.vmem %s6, %s319
      %s321 = smul.u32 16, %s20
      %s322 = smul.u32 16, %s20
      %p323 = scmp.lt.s32.totalorder %s322, 47
      %s324 = scalar_select %p323, %s322, 47
      %s325 = smul.addr %s324, 8
      %s326 = scalar_lea.vmem %s7, %s325
      %s327 = smul.u32 16, %s20
      %p328 = scmp.lt.s32.totalorder %s20, 2
      %s329 = scalar_select %p328, %s20, 2
      %s330 = scalar_lea.vmem %s8, %s329
      %v331 = vld [vmem:[%s314] sm:$0xff]
      %v332 = vld [vmem:[%s314 + $0x8] sm:$0xff]
      %v333 = vld [vmem:[%s314 + $0x10] sm:$0xff]
      %v334 = vld [vmem:[%s314 + $0x18] sm:$0xff]
      %v335 = vld [vmem:[%s314 + $0x20] sm:$0xff]
      %v336 = vld [vmem:[%s314 + $0x28] sm:$0xff]
      %v337 = vld [vmem:[%s314 + $0x30] sm:$0xff]
      %v338 = vld [vmem:[%s314 + $0x38] sm:$0xff]
      %v339 = vld [vmem:[%s314 + $0x40] sm:$0xff]
      %v340 = vld [vmem:[%s314 + $0x48] sm:$0xff]
      %v341 = vld [vmem:[%s314 + $0x50] sm:$0xff]
      %v342 = vld [vmem:[%s314 + $0x58] sm:$0xff]
      %v343 = vld [vmem:[%s314 + $0x60] sm:$0xff]
      %v344 = vld [vmem:[%s314 + $0x68] sm:$0xff]
      %v345 = vld [vmem:[%s314 + $0x70] sm:$0xff]
      %v346 = vld [vmem:[%s314 + $0x78] sm:$0xff]
      %v347 = vld [vmem:[%s1] sm:$0xff]
      %v348 = vld [vmem:[%s1 + $0x8] sm:$0xff]
      %v349 = vld [vmem:[%s2] sm:$0x1]
      %v351 = vlaneseq
      %v352 = vshrl.u32 %v351, 7
      %v353 = vsub.s32 0, %v352
      %v354 = vrot.slane %v349, %v353
      %vm356 = vcmask 130048
      %v358 = vsel %vm356, %v331, 0
      %v361 = vsel %vm356, %v332, 0
      %v364 = vsel %vm356, %v333, 0
      %v367 = vsel %vm356, %v334, 0
      %v370 = vsel %vm356, %v335, 0
      %v373 = vsel %vm356, %v336, 0
      %v376 = vsel %vm356, %v337, 0
      %v379 = vsel %vm356, %v338, 0
      %v382 = vsel %vm356, %v339, 0
      %v385 = vsel %vm356, %v340, 0
      %v388 = vsel %vm356, %v341, 0
      %v391 = vsel %vm356, %v342, 0
      %v394 = vsel %vm356, %v343, 0
      %v397 = vsel %vm356, %v344, 0
      %v400 = vsel %vm356, %v345, 0
      %v403 = vsel %vm356, %v346, 0
      %405 = vmatprep.subr.mxu0 0.0
      %406 = vmatpush1.msra.mxu0 %v347
      %407 = vmatprep.subr.mxu0 0.0
      %408 = vmatpush1.msra.mxu0 %v348
      %409 = vmatprep.subr.mxu0 0.0
      %410 = vmatpush1.msra.mxu0 0.0
      %411 = vmatprep.subr.mxu0 0.0
      %412 = vmatpush1.msra.mxu0 0.0
      %413 = vmatprep.subr.mxu0 0.0
      %414 = vmatpush1.msra.mxu0 0.0
      %415 = vmatprep.subr.mxu0 0.0
      %416 = vmatpush1.msra.mxu0 0.0
      %417 = vmatprep.subr.mxu0 0.0
      %418 = vmatpush1.msra.mxu0 0.0
      %419 = vmatprep.subr.mxu0 0.0
      %420 = vmatpush1.msra.mxu0 0.0
      %421 = vmatprep.subr.mxu0 0.0
      %422 = vmatpush1.msra.mxu0 0.0
      %423 = vmatprep.subr.mxu0 0.0
      %424 = vmatpush1.msra.mxu0 0.0
      %425 = vmatprep.subr.mxu0 0.0
      %426 = vmatpush1.msra.mxu0 0.0
      %427 = vmatprep.subr.mxu0 0.0
      %428 = vmatpush1.msra.mxu0 0.0
      %429 = vmatprep.subr.mxu0 0.0
      %430 = vmatpush1.msra.mxu0 0.0
      %431 = vmatprep.subr.mxu0 0.0
      %432 = vmatpush1.msra.mxu0 0.0
      %433 = vmatprep.subr.mxu0 0.0
      %434 = vmatpush1.msra.mxu0 0.0
      %435 = vmatprep.subr.mxu0 0.0
      %436 = vmatpush1.msra.mxu0 0.0
      %437 = vmatprep.subr.mxu0 0.0
      %438 = vmatpush1.msra.mxu0 0.0
      %439 = vmatprep.subr.mxu0 0.0
      %440 = vmatpush1.msra.mxu0 0.0
      %441 = vmatprep.subr.mxu0 0.0
      %442 = vmatpush1.msra.mxu0 0.0
      %443 = vmatprep.subr.mxu0 0.0
      %444 = vmatpush1.msra.mxu0 0.0
      %445 = vmatprep.subr.mxu0 0.0
      %446 = vmatpush1.msra.mxu0 0.0
      %447 = vmatprep.subr.mxu0 0.0
      %448 = vmatpush1.msra.mxu0 0.0
      %449 = vmatprep.subr.mxu0 0.0
      %450 = vmatpush1.msra.mxu0 0.0
      %451 = vmatprep.subr.mxu0 0.0
      %452 = vmatpush1.msra.mxu0 0.0
      %453 = vmatprep.subr.mxu0 0.0
      %454 = vmatpush1.msra.mxu0 0.0
      %455 = vmatprep.subr.mxu0 0.0
      %456 = vmatpush1.msra.mxu0 0.0
      %457 = vmatprep.subr.mxu0 0.0
      %458 = vmatpush1.msra.mxu0 0.0
      %459 = vmatprep.subr.mxu0 0.0
      %460 = vmatpush1.msra.mxu0 0.0
      %461 = vmatprep.subr.mxu0 0.0
      %462 = vmatpush1.msra.mxu0 0.0
      %463 = vmatprep.subr.mxu0 0.0
      %464 = vmatpush1.msra.mxu0 0.0
      %465 = vmatprep.subr.mxu0 0.0
      %466 = vmatpush1.msra.mxu0 0.0
      %467 = vmatprep.subr.mxu0 0.0
      %468 = vmatpush1.msra.mxu0 0.0
      %469 = vmatprep.mubr.f32.mxu0 0.0
      %470 = vmatmul.mubr.f32.gmra.mrb[0].mxu0 %v358
      %v471 = vpop.f32.mrb[0].mxu0
      %v472 = vadd.f32 %v354, %v471
      %v473 = vpop.f32.mrb[0].mxu0
      %474 = vmatprep.mubr.f32.mxu0 0.0
      %475 = vmatmul.mubr.f32.gmra.mrb[0].mxu0 %v361
      %v476 = vpop.f32.mrb[0].mxu0
      %v477 = vadd.f32 %v354, %v476
      %v478 = vpop.f32.mrb[0].mxu0
      %479 = vmatprep.mubr.f32.mxu0 0.0
      %480 = vmatmul.mubr.f32.gmra.mrb[0].mxu0 %v364
      %v481 = vpop.f32.mrb[0].mxu0
      %v482 = vadd.f32 %v354, %v481
      %v483 = vpop.f32.mrb[0].mxu0
      %484 = vmatprep.mubr.f32.mxu0 0.0
      %485 = vmatmul.mubr.f32.gmra.mrb[0].mxu0 %v367
      %v486 = vpop.f32.mrb[0].mxu0
      %v487 = vadd.f32 %v354, %v486
      %v488 = vpop.f32.mrb[0].mxu0
      %489 = vmatprep.mubr.f32.mxu0 0.0
      %490 = vmatmul.mubr.f32.gmra.mrb[0].mxu0 %v370
      %v491 = vpop.f32.mrb[0].mxu0
      %v492 = vadd.f32 %v354, %v491
      %v493 = vpop.f32.mrb[0].mxu0
      %494 = vmatprep.mubr.f32.mxu0 0.0
      %495 = vmatmul.mubr.f32.gmra.mrb[0].mxu0 %v373
      %v496 = vpop.f32.mrb[0].mxu0
      %v497 = vadd.f32 %v354, %v496
      %v498 = vpop.f32.mrb[0].mxu0
      %499 = vmatprep.mubr.f32.mxu0 0.0
      %500 = vmatmul.mubr.f32.gmra.mrb[0].mxu0 %v376
      %v501 = vpop.f32.mrb[0].mxu0
      %v502 = vadd.f32 %v354, %v501
      %v503 = vpop.f32.mrb[0].mxu0
      %504 = vmatprep.mubr.f32.mxu0 0.0
      %505 = vmatmul.mubr.f32.gmra.mrb[0].mxu0 %v379
      %v506 = vpop.f32.mrb[0].mxu0
      %v507 = vadd.f32 %v354, %v506
      %v508 = vpop.f32.mrb[0].mxu0
      %509 = vmatprep.mubr.f32.mxu0 0.0
      %510 = vmatmul.mubr.f32.gmra.mrb[0].mxu0 %v382
      %v511 = vpop.f32.mrb[0].mxu0
      %v512 = vadd.f32 %v354, %v511
      %v513 = vpop.f32.mrb[0].mxu0
      %514 = vmatprep.mubr.f32.mxu0 0.0
      %515 = vmatmul.mubr.f32.gmra.mrb[0].mxu0 %v385
      %v516 = vpop.f32.mrb[0].mxu0
      %v517 = vadd.f32 %v354, %v516
      %v518 = vpop.f32.mrb[0].mxu0
      %519 = vmatprep.mubr.f32.mxu0 0.0
      %520 = vmatmul.mubr.f32.gmra.mrb[0].mxu0 %v388
      %v521 = vpop.f32.mrb[0].mxu0
      %v522 = vadd.f32 %v354, %v521
      %v523 = vpop.f32.mrb[0].mxu0
      %524 = vmatprep.mubr.f32.mxu0 0.0
      %525 = vmatmul.mubr.f32.gmra.mrb[0].mxu0 %v391
      %v526 = vpop.f32.mrb[0].mxu0
      %v527 = vadd.f32 %v354, %v526
      %v528 = vpop.f32.mrb[0].mxu0
      %529 = vmatprep.mubr.f32.mxu0 0.0
      %530 = vmatmul.mubr.f32.gmra.mrb[0].mxu0 %v394
      %v531 = vpop.f32.mrb[0].mxu0
      %v532 = vadd.f32 %v354, %v531
      %v533 = vpop.f32.mrb[0].mxu0
      %534 = vmatprep.mubr.f32.mxu0 0.0
      %535 = vmatmul.mubr.f32.gmra.mrb[0].mxu0 %v397
      %v536 = vpop.f32.mrb[0].mxu0
      %v537 = vadd.f32 %v354, %v536
      %v538 = vpop.f32.mrb[0].mxu0
      %539 = vmatprep.mubr.f32.mxu0 0.0
      %540 = vmatmul.mubr.f32.gmra.mrb[0].mxu0 %v400
      %v541 = vpop.f32.mrb[0].mxu0
      %v542 = vadd.f32 %v354, %v541
      %v543 = vpop.f32.mrb[0].mxu0
      %544 = vmatprep.mubr.f32.mxu0 0.0
      %545 = vmatmul.mubr.f32.gmra.mrb[0].mxu0 %v403
      %v546 = vpop.f32.mrb[0].mxu0
      %v547 = vadd.f32 %v354, %v546
      %v548 = vpop.f32.mrb[0].mxu0
      %549 = vdwg.mxu0
      %v550 = vld [vmem:[%s3] sm:$0xff]
      %v551 = vld [vmem:[%s3 + $0x8] sm:$0xff]
      %v552 = vld [vmem:[%s3 + $0x10] sm:$0xff]
      %v553 = vld [vmem:[%s3 + $0x18] sm:$0xff]
      %vm554 = vcmask 261120
      %v556 = vsel %vm554, %v472, 0
      %v559 = vsel %vm554, %v477, 0
      %v562 = vsel %vm554, %v482, 0
      %v565 = vsel %vm554, %v487, 0
      %v568 = vsel %vm554, %v492, 0
      %v571 = vsel %vm554, %v497, 0
      %v574 = vsel %vm554, %v502, 0
      %v577 = vsel %vm554, %v507, 0
      %v580 = vsel %vm554, %v512, 0
      %v583 = vsel %vm554, %v517, 0
      %v586 = vsel %vm554, %v522, 0
      %v589 = vsel %vm554, %v527, 0
      %v592 = vsel %vm554, %v532, 0
      %v595 = vsel %vm554, %v537, 0
      %v598 = vsel %vm554, %v542, 0
      %v601 = vsel %vm554, %v547, 0
      %603 = vmatprep.subr.mxu0 0.0
      %604 = vmatpush1.msra.mxu0 %v550
      %605 = vmatprep.subr.mxu0 0.0
      %606 = vmatpush1.msra.mxu0 %v551
      %607 = vmatprep.subr.mxu0 0.0
      %608 = vmatpush1.msra.mxu0 %v552
      %609 = vmatprep.subr.mxu0 0.0
      %610 = vmatpush1.msra.mxu0 %v553
      %611 = vmatprep.subr.mxu0 0.0
      %612 = vmatpush1.msra.mxu0 0.0
      %613 = vmatprep.subr.mxu0 0.0
      %614 = vmatpush1.msra.mxu0 0.0
      %615 = vmatprep.subr.mxu0 0.0
      %616 = vmatpush1.msra.mxu0 0.0
      %617 = vmatprep.subr.mxu0 0.0
      %618 = vmatpush1.msra.mxu0 0.0
      %619 = vmatprep.subr.mxu0 0.0
      %620 = vmatpush1.msra.mxu0 0.0
      %621 = vmatprep.subr.mxu0 0.0
      %622 = vmatpush1.msra.mxu0 0.0
      %623 = vmatprep.subr.mxu0 0.0
      %624 = vmatpush1.msra.mxu0 0.0
      %625 = vmatprep.subr.mxu0 0.0
      %626 = vmatpush1.msra.mxu0 0.0
      %627 = vmatprep.subr.mxu0 0.0
      %628 = vmatpush1.msra.mxu0 0.0
      %629 = vmatprep.subr.mxu0 0.0
      %630 = vmatpush1.msra.mxu0 0.0
      %631 = vmatprep.subr.mxu0 0.0
      %632 = vmatpush1.msra.mxu0 0.0
      %633 = vmatprep.subr.mxu0 0.0
      %634 = vmatpush1.msra.mxu0 0.0
      %635 = vmatprep.subr.mxu0 0.0
      %636 = vmatpush1.msra.mxu0 0.0
      %637 = vmatprep.subr.mxu0 0.0
      %638 = vmatpush1.msra.mxu0 0.0
      %639 = vmatprep.subr.mxu0 0.0
      %640 = vmatpush1.msra.mxu0 0.0
      %641 = vmatprep.subr.mxu0 0.0
      %642 = vmatpush1.msra.mxu0 0.0
      %643 = vmatprep.subr.mxu0 0.0
      %644 = vmatpush1.msra.mxu0 0.0
      %645 = vmatprep.subr.mxu0 0.0
      %646 = vmatpush1.msra.mxu0 0.0
      %647 = vmatprep.subr.mxu0 0.0
      %648 = vmatpush1.msra.mxu0 0.0
      %649 = vmatprep.subr.mxu0 0.0
      %650 = vmatpush1.msra.mxu0 0.0
      %651 = vmatprep.subr.mxu0 0.0
      %652 = vmatpush1.msra.mxu0 0.0
      %653 = vmatprep.subr.mxu0 0.0
      %654 = vmatpush1.msra.mxu0 0.0
      %655 = vmatprep.subr.mxu0 0.0
      %656 = vmatpush1.msra.mxu0 0.0
      %657 = vmatprep.subr.mxu0 0.0
      %658 = vmatpush1.msra.mxu0 0.0
      %659 = vmatprep.subr.mxu0 0.0
      %660 = vmatpush1.msra.mxu0 0.0
      %661 = vmatprep.subr.mxu0 0.0
      %662 = vmatpush1.msra.mxu0 0.0
      %663 = vmatprep.subr.mxu0 0.0
      %664 = vmatpush1.msra.mxu0 0.0
      %665 = vmatprep.subr.mxu0 0.0
      %666 = vmatpush1.msra.mxu0 0.0
      %667 = vmatprep.mubr.f32.mxu0 0.0
      %668 = vmatmul.mubr.f32.gmra.mrb[0].mxu0 %v556
      %v669 = vpop.f32.mrb[0].mxu0
      %v670 = vadd.f32 0.0, %v669
      %v671 = vpop.f32.mrb[0].mxu0
      %672 = vmatprep.mubr.f32.mxu0 0.0
      %673 = vmatmul.mubr.f32.gmra.mrb[0].mxu0 %v559
      %v674 = vpop.f32.mrb[0].mxu0
      %v675 = vadd.f32 0.0, %v674
      %v676 = vpop.f32.mrb[0].mxu0
      %677 = vmatprep.mubr.f32.mxu0 0.0
      %678 = vmatmul.mubr.f32.gmra.mrb[0].mxu0 %v562
      %v679 = vpop.f32.mrb[0].mxu0
      %v680 = vadd.f32 0.0, %v679
      %v681 = vpop.f32.mrb[0].mxu0
      %682 = vmatprep.mubr.f32.mxu0 0.0
      %683 = vmatmul.mubr.f32.gmra.mrb[0].mxu0 %v565
      %v684 = vpop.f32.mrb[0].mxu0
      %v685 = vadd.f32 0.0, %v684
      %v686 = vpop.f32.mrb[0].mxu0
      %687 = vmatprep.mubr.f32.mxu0 0.0
      %688 = vmatmul.mubr.f32.gmra.mrb[0].mxu0 %v568
      %v689 = vpop.f32.mrb[0].mxu0
      %v690 = vadd.f32 0.0, %v689
      %v691 = vpop.f32.mrb[0].mxu0
      %692 = vmatprep.mubr.f32.mxu0 0.0
      %693 = vmatmul.mubr.f32.gmra.mrb[0].mxu0 %v571
      %v694 = vpop.f32.mrb[0].mxu0
      %v695 = vadd.f32 0.0, %v694
      %v696 = vpop.f32.mrb[0].mxu0
      %697 = vmatprep.mubr.f32.mxu0 0.0
      %698 = vmatmul.mubr.f32.gmra.mrb[0].mxu0 %v574
      %v699 = vpop.f32.mrb[0].mxu0
      %v700 = vadd.f32 0.0, %v699
      %v701 = vpop.f32.mrb[0].mxu0
      %702 = vmatprep.mubr.f32.mxu0 0.0
      %703 = vmatmul.mubr.f32.gmra.mrb[0].mxu0 %v577
      %v704 = vpop.f32.mrb[0].mxu0
      %v705 = vadd.f32 0.0, %v704
      %v706 = vpop.f32.mrb[0].mxu0
      %707 = vmatprep.mubr.f32.mxu0 0.0
      %708 = vmatmul.mubr.f32.gmra.mrb[0].mxu0 %v580
      %v709 = vpop.f32.mrb[0].mxu0
      %v710 = vadd.f32 0.0, %v709
      %v711 = vpop.f32.mrb[0].mxu0
      %712 = vmatprep.mubr.f32.mxu0 0.0
      %713 = vmatmul.mubr.f32.gmra.mrb[0].mxu0 %v583
      %v714 = vpop.f32.mrb[0].mxu0
      %v715 = vadd.f32 0.0, %v714
      %v716 = vpop.f32.mrb[0].mxu0
      %717 = vmatprep.mubr.f32.mxu0 0.0
      %718 = vmatmul.mubr.f32.gmra.mrb[0].mxu0 %v586
      %v719 = vpop.f32.mrb[0].mxu0
      %v720 = vadd.f32 0.0, %v719
      %v721 = vpop.f32.mrb[0].mxu0
      %722 = vmatprep.mubr.f32.mxu0 0.0
      %723 = vmatmul.mubr.f32.gmra.mrb[0].mxu0 %v589
      %v724 = vpop.f32.mrb[0].mxu0
      %v725 = vadd.f32 0.0, %v724
      %v726 = vpop.f32.mrb[0].mxu0
      %727 = vmatprep.mubr.f32.mxu0 0.0
      %728 = vmatmul.mubr.f32.gmra.mrb[0].mxu0 %v592
      %v729 = vpop.f32.mrb[0].mxu0
      %v730 = vadd.f32 0.0, %v729
      %v731 = vpop.f32.mrb[0].mxu0
      %732 = vmatprep.mubr.f32.mxu0 0.0
      %733 = vmatmul.mubr.f32.gmra.mrb[0].mxu0 %v595
      %v734 = vpop.f32.mrb[0].mxu0
      %v735 = vadd.f32 0.0, %v734
      %v736 = vpop.f32.mrb[0].mxu0
      %737 = vmatprep.mubr.f32.mxu0 0.0
      %738 = vmatmul.mubr.f32.gmra.mrb[0].mxu0 %v598
      %v739 = vpop.f32.mrb[0].mxu0
      %v740 = vadd.f32 0.0, %v739
      %v741 = vpop.f32.mrb[0].mxu0
      %742 = vmatprep.mubr.f32.mxu0 0.0
      %743 = vmatmul.mubr.f32.gmra.mrb[0].mxu0 %v601
      %v744 = vpop.f32.mrb[0].mxu0
      %v745 = vadd.f32 0.0, %v744
      %v746 = vpop.f32.mrb[0].mxu0
      %747 = vdwg.mxu0
      %748 = vst [vmem:[%s320] sm:$0xff] %v670
      %749 = vst [vmem:[%s320 + $0x8] sm:$0xff] %v675
      %750 = vst [vmem:[%s320 + $0x10] sm:$0xff] %v680
      %751 = vst [vmem:[%s320 + $0x18] sm:$0xff] %v685
      %752 = vst [vmem:[%s320 + $0x20] sm:$0xff] %v690
      %753 = vst [vmem:[%s320 + $0x28] sm:$0xff] %v695
      %754 = vst [vmem:[%s320 + $0x30] sm:$0xff] %v700
      %755 = vst [vmem:[%s320 + $0x38] sm:$0xff] %v705
      %756 = vst [vmem:[%s320 + $0x40] sm:$0xff] %v710
      %757 = vst [vmem:[%s320 + $0x48] sm:$0xff] %v715
      %758 = vst [vmem:[%s320 + $0x50] sm:$0xff] %v720
      %759 = vst [vmem:[%s320 + $0x58] sm:$0xff] %v725
      %760 = vst [vmem:[%s320 + $0x60] sm:$0xff] %v730
      %761 = vst [vmem:[%s320 + $0x68] sm:$0xff] %v735
      %762 = vst [vmem:[%s320 + $0x70] sm:$0xff] %v740
      %763 = vst [vmem:[%s320 + $0x78] sm:$0xff] %v745
      %v764 = vld [vmem:[%s5] sm:$0x1]
      %v766 = vlaneseq
      %v767 = vshrl.u32 %v766, 7
      %v768 = vsub.s32 0, %v767
      %v769 = vrot.slane %v764, %v768
      %v771 = vmul.f32 %v670, %v769
      %v772 = vmul.f32 %v675, %v769
      %v773 = vmul.f32 %v680, %v769
      %v774 = vmul.f32 %v685, %v769
      %v775 = vmul.f32 %v690, %v769
      %v776 = vmul.f32 %v695, %v769
      %v777 = vmul.f32 %v700, %v769
      %v778 = vmul.f32 %v705, %v769
      %v779 = vmul.f32 %v710, %v769
      %v780 = vmul.f32 %v715, %v769
      %v781 = vmul.f32 %v720, %v769
      %v782 = vmul.f32 %v725, %v769
      %v783 = vmul.f32 %v730, %v769
      %v784 = vmul.f32 %v735, %v769
      %v785 = vmul.f32 %v740, %v769
      %v786 = vmul.f32 %v745, %v769
      %787 = vadd.xlane.f32.xlu0 %v771
      %v788 = vpop.xlane.xlu0 %787
      %789 = vadd.xlane.f32.xlu0 %v772
      %v790 = vpop.xlane.xlu0 %789
      %791 = vadd.xlane.f32.xlu0 %v773
      %v792 = vpop.xlane.xlu0 %791
      %793 = vadd.xlane.f32.xlu0 %v774
      %v794 = vpop.xlane.xlu0 %793
      %795 = vadd.xlane.f32.xlu0 %v775
      %v796 = vpop.xlane.xlu0 %795
      %797 = vadd.xlane.f32.xlu0 %v776
      %v798 = vpop.xlane.xlu0 %797
      %799 = vadd.xlane.f32.xlu0 %v777
      %v800 = vpop.xlane.xlu0 %799
      %801 = vadd.xlane.f32.xlu0 %v778
      %v802 = vpop.xlane.xlu0 %801
      %803 = vadd.xlane.f32.xlu0 %v779
      %v804 = vpop.xlane.xlu0 %803
      %805 = vadd.xlane.f32.xlu0 %v780
      %v806 = vpop.xlane.xlu0 %805
      %807 = vadd.xlane.f32.xlu0 %v781
      %v808 = vpop.xlane.xlu0 %807
      %809 = vadd.xlane.f32.xlu0 %v782
      %v810 = vpop.xlane.xlu0 %809
      %811 = vadd.xlane.f32.xlu0 %v783
      %v812 = vpop.xlane.xlu0 %811
      %813 = vadd.xlane.f32.xlu0 %v784
      %v814 = vpop.xlane.xlu0 %813
      %815 = vadd.xlane.f32.xlu0 %v785
      %v816 = vpop.xlane.xlu0 %815
      %817 = vadd.xlane.f32.xlu0 %v786
      %v818 = vpop.xlane.xlu0 %817
      %vm819 = vcmask 7168
      %820 = vst.msk [vmem:[%s326] sm:$0xff] %vm819, %v788
      %821 = vst.msk [vmem:[%s326 + $0x8] sm:$0xff] %vm819, %v790
      %822 = vst.msk [vmem:[%s326 + $0x10] sm:$0xff] %vm819, %v792
      %823 = vst.msk [vmem:[%s326 + $0x18] sm:$0xff] %vm819, %v794
      %824 = vst.msk [vmem:[%s326 + $0x20] sm:$0xff] %vm819, %v796
      %825 = vst.msk [vmem:[%s326 + $0x28] sm:$0xff] %vm819, %v798
      %826 = vst.msk [vmem:[%s326 + $0x30] sm:$0xff] %vm819, %v800
      %827 = vst.msk [vmem:[%s326 + $0x38] sm:$0xff] %vm819, %v802
      %828 = vst.msk [vmem:[%s326 + $0x40] sm:$0xff] %vm819, %v804
      %829 = vst.msk [vmem:[%s326 + $0x48] sm:$0xff] %vm819, %v806
      %830 = vst.msk [vmem:[%s326 + $0x50] sm:$0xff] %vm819, %v808
      %831 = vst.msk [vmem:[%s326 + $0x58] sm:$0xff] %vm819, %v810
      %832 = vst.msk [vmem:[%s326 + $0x60] sm:$0xff] %vm819, %v812
      %833 = vst.msk [vmem:[%s326 + $0x68] sm:$0xff] %vm819, %v814
      %834 = vst.msk [vmem:[%s326 + $0x70] sm:$0xff] %vm819, %v816
      %835 = vst.msk [vmem:[%s326 + $0x78] sm:$0xff] %vm819, %v818
      %v836 = vld [vmem:[%s4] sm:$0x1]
      %837 = vmatprep.subr.mxu0 0.0
      %838 = vmatpush1.xpose.msra.mxu0 %v670
      %839 = vmatprep.subr.mxu0 0.0
      %840 = vmatpush1.xpose.msra.mxu0 %v675
      %841 = vmatprep.subr.mxu0 0.0
      %842 = vmatpush1.xpose.msra.mxu0 %v680
      %843 = vmatprep.subr.mxu0 0.0
      %844 = vmatpush1.xpose.msra.mxu0 %v685
      %845 = vmatprep.subr.mxu0 0.0
      %846 = vmatpush1.xpose.msra.mxu0 %v690
      %847 = vmatprep.subr.mxu0 0.0
      %848 = vmatpush1.xpose.msra.mxu0 %v695
      %849 = vmatprep.subr.mxu0 0.0
      %850 = vmatpush1.xpose.msra.mxu0 %v700
      %851 = vmatprep.subr.mxu0 0.0
      %852 = vmatpush1.xpose.msra.mxu0 %v705
      %853 = vmatprep.subr.mxu0 0.0
      %854 = vmatpush1.xpose.msra.mxu0 %v710
      %855 = vmatprep.subr.mxu0 0.0
      %856 = vmatpush1.xpose.msra.mxu0 %v715
      %857 = vmatprep.subr.mxu0 0.0
      %858 = vmatpush1.xpose.msra.mxu0 %v720
      %859 = vmatprep.subr.mxu0 0.0
      %860 = vmatpush1.xpose.msra.mxu0 %v725
      %861 = vmatprep.subr.mxu0 0.0
      %862 = vmatpush1.xpose.msra.mxu0 %v730
      %863 = vmatprep.subr.mxu0 0.0
      %864 = vmatpush1.xpose.msra.mxu0 %v735
      %865 = vmatprep.subr.mxu0 0.0
      %866 = vmatpush1.xpose.msra.mxu0 %v740
      %867 = vmatprep.subr.mxu0 0.0
      %868 = vmatpush1.xpose.msra.mxu0 %v745
      %869 = vmatprep.subr.mxu0 0.0
      %870 = vmatpush1.xpose.msra.mxu0 0.0
      %871 = vmatprep.subr.mxu0 0.0
      %872 = vmatpush1.xpose.msra.mxu0 0.0
      %873 = vmatprep.subr.mxu0 0.0
      %874 = vmatpush1.xpose.msra.mxu0 0.0
      %875 = vmatprep.subr.mxu0 0.0
      %876 = vmatpush1.xpose.msra.mxu0 0.0
      %877 = vmatprep.subr.mxu0 0.0
      %878 = vmatpush1.xpose.msra.mxu0 0.0
      %879 = vmatprep.subr.mxu0 0.0
      %880 = vmatpush1.xpose.msra.mxu0 0.0
      %881 = vmatprep.subr.mxu0 0.0
      %882 = vmatpush1.xpose.msra.mxu0 0.0
      %883 = vmatprep.subr.mxu0 0.0
      %884 = vmatpush1.xpose.msra.mxu0 0.0
      %885 = vmatprep.subr.mxu0 0.0
      %886 = vmatpush1.xpose.msra.mxu0 0.0
      %887 = vmatprep.subr.mxu0 0.0
      %888 = vmatpush1.xpose.msra.mxu0 0.0
      %889 = vmatprep.subr.mxu0 0.0
      %890 = vmatpush1.xpose.msra.mxu0 0.0
      %891 = vmatprep.subr.mxu0 0.0
      %892 = vmatpush1.xpose.msra.mxu0 0.0
      %893 = vmatprep.subr.mxu0 0.0
      %894 = vmatpush1.xpose.msra.mxu0 0.0
      %895 = vmatprep.subr.mxu0 0.0
      %896 = vmatpush1.xpose.msra.mxu0 0.0
      %897 = vmatprep.subr.mxu0 0.0
      %898 = vmatpush1.xpose.msra.mxu0 0.0
      %899 = vmatprep.subr.mxu0 0.0
      %900 = vmatpush1.xpose.msra.mxu0 0.0
      %901 = vmatprep.mubr.f32.mxu0 0.0
      %902 = vmatmul.mubr.f32.gmra.mrb[0].mxu0 %v836
      %v903 = vpop.f32.mrb[0].mxu0
      %v904 = vadd.f32 0.0, %v903
      %v905 = vpop.f32.mrb[0].mxu0
      %906 = vdwg.mxu0
      %907 = vst [vmem:[%s330] sm:$0x1] %v904
      %s908 = smul.u32 16, %s20
      %p909 = scmp.lt.s32.totalorder %s908, 47
      %s910 = scalar_select %p909, %s908, 47
      %s911 = smul.addr %s910, 8
      %s912 = scalar_lea.vmem %s6, %s911
      %s913 = smul.u32 16, %s20
      %p914 = scmp.lt.s32.totalorder %s913, 47
      %s915 = scalar_select %p914, %s913, 47
      %s916 = smul.addr %s915, 8
      %s917 = scalar_lea.vmem %s7, %s916
      %p918 = scmp.lt.s32.totalorder %s20, 2
      %s919 = scalar_select %p918, %s20, 2
      %s920 = scalar_lea.vmem %s8, %s919
      // Predicated region
      $region45: #{gat_forward.4} parent=43 // pred_check
        %p921 = pneg %p169
      $region46: #{gat_forward.4} parent=43 // pred_check_branch
        %923 = sbr.rel (%p921) target = $region48
      $region47: #{gat_forward.4} parent=43 // pred_region
        %s924 = smul.u32 16, %s20
      $region48: #{gat_forward.4} parent=43 // pred_fallthru
        _
      // Predicated region
      $region49: #{gat_forward.4} parent=43 // pred_check
        %p925 = pneg %p195
      $region50: #{gat_forward.4} parent=43 // pred_check_branch
        %927 = sbr.rel (%p925) target = $region52
      $region51: #{gat_forward.4} parent=43 // pred_region
        %s928 = smul.u32 16, %s20
      $region52: #{gat_forward.4} parent=43 // pred_fallthru
        _
      // Predicated region
      $region53: #{gat_forward.4} parent=43 // pred_check
        %p929 = pneg %p221
      $region54: #{gat_forward.4} parent=43 // pred_check_branch
        %931 = sbr.rel (%p929) target = $region56
      $region55: #{gat_forward.4} parent=43 // pred_region
        _
      $region56: #{gat_forward.4} parent=43 // pred_fallthru
        _
    $region44: #{gat_forward.4} parent=5 // pred_fallthru
      _
    %p932 = scmp.le.s32.totalorder 2, %s15
    // Predicated region
    $region57: #{gat_forward.4} parent=5 // pred_check
      %p933 = pneg %p932
    $region58: #{gat_forward.4} parent=5 // pred_check_branch
      %935 = sbr.rel (%p933) target = $region60
    $region59: #{gat_forward.4} parent=5 // pred_region
      %s936 = ssub.s32 %s15, 2
      // Predicated region
      $region61: #{gat_forward.4} parent=59 // pred_check
        %p937 = pneg %p175
      $region62: #{gat_forward.4} parent=59 // pred_check_branch
        %939 = sbr.rel (%p937) target = $region64
      $region63: #{gat_forward.4} parent=59 // pred_region
        %s940 = smul.u32 16, %s21
        %p941 = scmp.lt.s32.totalorder %s940, 47
        %s942 = scalar_select %p941, %s940, 47
        %s943 = smul.addr %s942, 8
        %s944 = scalar_lea.vmem %s6, %s943
      $region64: #{gat_forward.4} parent=59 // pred_fallthru
        _
      // Predicated region
      $region65: #{gat_forward.4} parent=59 // pred_check
        %p945 = pneg %p201
      $region66: #{gat_forward.4} parent=59 // pred_check_branch
        %947 = sbr.rel (%p945) target = $region68
      $region67: #{gat_forward.4} parent=59 // pred_region
        %s948 = smul.u32 16, %s21
        %p949 = scmp.lt.s32.totalorder %s948, 47
        %s950 = scalar_select %p949, %s948, 47
        %s951 = smul.addr %s950, 8
        %s952 = scalar_lea.vmem %s7, %s951
      $region68: #{gat_forward.4} parent=59 // pred_fallthru
        _
      // Predicated region
      $region69: #{gat_forward.4} parent=59 // pred_check
        %p953 = pneg %p227
      $region70: #{gat_forward.4} parent=59 // pred_check_branch
        %955 = sbr.rel (%p953) target = $region72
      $region71: #{gat_forward.4} parent=59 // pred_region
        %p956 = scmp.lt.s32.totalorder %s21, 2
        %s957 = scalar_select %p956, %s21, 2
        %s958 = scalar_lea.vmem %s8, %s957
      $region72: #{gat_forward.4} parent=59 // pred_fallthru
        _
    $region60: #{gat_forward.4} parent=5 // pred_fallthru
      _
  $region6: #{gat_forward.4} parent=0 // loop_footer
    %s19 = sadd.s32 1, %s15
  $region7: #{gat_forward.4} parent=0 // loop_footer_branch
    %14 = sbr.rel target = $region3
  $region8: #{gat_forward.4} parent=0 // loop_exit
    _

// kernel: gat_forward.6
$region0: #{gat_forward.6}
  #allocation0 [shape = 'u32[]', space=smem, size = 0x4, offset = 0x4, fixed_abs, tag = 'smem constant byte address 0x4 - core index']
  #allocation1 [shape = 'u32[144,128]{1,0:T(1,128)}', space=vmem, size = 0x12000, scoped, tag = 'internal scratch']
  %s0 = inlined_call_operand.vmem [shape: f32[384,128], index: 0, kind: input, shape index: {}]
  %s1 = inlined_call_operand.vmem [shape: f32[128,128], index: 1, kind: input, shape index: {}]
  %s2 = inlined_call_operand.vmem [shape: f32[1,128], index: 2, kind: input, shape index: {}]
  %s3 = inlined_call_operand.vmem [shape: f32[1,128], index: 3, kind: input, shape index: {}]
  %s4 = inlined_call_operand.vmem [shape: f32[384,128], index: 4, kind: output, shape index: {0}]
  %s5 = inlined_call_operand.vmem [shape: f32[384,1], index: 5, kind: output, shape index: {1}]
  %s6 = inlined_call_operand.vmem [shape: f32[1,384], index: 6, kind: output, shape index: {2}]
  %7 = xla_tuple %s4, %s5, %s6
  %s8 = sld [smem:[#allocation0]]
  $region65: #{gat_forward.6} parent=0
    _
  %s10 = ssub.s32 1, %s8
  %s11 = scalar_select 0, %s10, %s8
  loop: start=0, step=1, limit=5
  $region2: #{gat_forward.6} parent=0 // loop_pre_header
    _
  $region3: #{gat_forward.6} parent=0 // loop_header
    %s13 = sphi 0, %s17
    %p14 = scmp.ge.s32.totalorder %s13, 5
    %s23 = sphi 0, %s25
    %s26 = sphi 0, %s23
    %s27 = sphi 0, %s26
    %s43 = sphi 0, %s27
    %s47 = sphi 0, %s47
    %s49 = sphi 0, %s47
    %s50 = sphi 0, %s49
    %s64 = sphi 0, %s50
    %s68 = sphi 0, %s68
    %s70 = sphi 0, %s68
    %s71 = sphi 0, %s70
    %s85 = sphi 0, %s71
    %s89 = sphi 0, %s89
    %s91 = sphi 0, %s89
    %s92 = sphi 0, %s91
    %s106 = sphi 0, %s92
    %s112 = sphi 0, %s114
    %s115 = sphi 0, %s112
    %s116 = sphi 0, %s115
    %s132 = sphi 0, %s116
    %s138 = sphi 0, %s140
    %s141 = sphi 0, %s138
    %s142 = sphi 0, %s141
    %s158 = sphi 0, %s142
    %s164 = sphi 0, %s166
    %s167 = sphi 0, %s164
    %s168 = sphi 0, %s167
    %s184 = sphi 0, %s168
  $region4: #{gat_forward.6} parent=0 // loop_header_branch
    %16 = sbr.rel (%p14) target = $region8
  $region5: #{gat_forward.6} parent=0 // loop_body
    %s18 = ssub.s32 %s13, 1
    %s19 = ssub.s32 %s13, 2
    %s20 = sadd.s32 %s13, 1
    %s21 = ssub.s32 %s13, %s20
    %p22 = scmp.eq.s32.totalorder %s21, 0
    %s24 = sadd.s32 %s23, 1
    %s25 = scalar_select %p22, %s23, %s24
    %p28 = pneg %p22
    %p29 = scmp.eq.s32.totalorder %s13, 2
    %p30 = por %p28, %p29
    %p31 = scmp.ne.s32.totalorder %s23, %s26
    %p32 = scmp.eq.s32.totalorder %s13, 0
    %p33 = por %p31, %p32
    %p34 = scmp.ne.s32.totalorder %s23, %s26
    %p35 = scmp.eq.s32.totalorder %s18, 2
    %p36 = por %p34, %p35
    %p37 = scmp.ne.s32.totalorder %s26, %s27
    %p38 = scmp.eq.s32.totalorder %s18, 0
    %p39 = por %p37, %p38
    %p40 = scmp.ne.s32.totalorder %s26, %s27
    %p41 = scmp.eq.s32.totalorder %s19, 2
    %p42 = por %p40, %p41
    %p44 = scmp.ne.s32.totalorder %s27, %s43
    %p45 = scmp.eq.s32.totalorder %s19, 0
    %p46 = por %p44, %p45
    %s48 = sadd.s32 %s47, 1
    %p51 = scmp.eq.s32.totalorder %s13, 2
    %p52 = scmp.ne.s32.totalorder %s47, %s49
    %p53 = scmp.eq.s32.totalorder %s13, 0
    %p54 = por %p52, %p53
    %p55 = scmp.ne.s32.totalorder %s47, %s49
    %p56 = scmp.eq.s32.totalorder %s18, 2
    %p57 = por %p55, %p56
    %p58 = scmp.ne.s32.totalorder %s49, %s50
    %p59 = scmp.eq.s32.totalorder %s18, 0
    %p60 = por %p58, %p59
    %p61 = scmp.ne.s32.totalorder %s49, %s50
    %p62 = scmp.eq.s32.totalorder %s19, 2
    %p63 = por %p61, %p62
    %p65 = scmp.ne.s32.totalorder %s50, %s64
    %p66 = scmp.eq.s32.totalorder %s19, 0
    %p67 = por %p65, %p66
    %s69 = sadd.s32 %s68, 1
    %p72 = scmp.eq.s32.totalorder %s13, 2
    %p73 = scmp.ne.s32.totalorder %s68, %s70
    %p74 = scmp.eq.s32.totalorder %s13, 0
    %p75 = por %p73, %p74
    %p76 = scmp.ne.s32.totalorder %s68, %s70
    %p77 = scmp.eq.s32.totalorder %s18, 2
    %p78 = por %p76, %p77
    %p79 = scmp.ne.s32.totalorder %s70, %s71
    %p80 = scmp.eq.s32.totalorder %s18, 0
    %p81 = por %p79, %p80
    %p82 = scmp.ne.s32.totalorder %s70, %s71
    %p83 = scmp.eq.s32.totalorder %s19, 2
    %p84 = por %p82, %p83
    %p86 = scmp.ne.s32.totalorder %s71, %s85
    %p87 = scmp.eq.s32.totalorder %s19, 0
    %p88 = por %p86, %p87
    %s90 = sadd.s32 %s89, 1
    %p93 = scmp.eq.s32.totalorder %s13, 2
    %p94 = scmp.ne.s32.totalorder %s89, %s91
    %p95 = scmp.eq.s32.totalorder %s13, 0
    %p96 = por %p94, %p95
    %p97 = scmp.ne.s32.totalorder %s89, %s91
    %p98 = scmp.eq.s32.totalorder %s18, 2
    %p99 = por %p97, %p98
    %p100 = scmp.ne.s32.totalorder %s91, %s92
    %p101 = scmp.eq.s32.totalorder %s18, 0
    %p102 = por %p100, %p101
    %p103 = scmp.ne.s32.totalorder %s91, %s92
    %p104 = scmp.eq.s32.totalorder %s19, 2
    %p105 = por %p103, %p104
    %p107 = scmp.ne.s32.totalorder %s92, %s106
    %p108 = scmp.eq.s32.totalorder %s19, 0
    %p109 = por %p107, %p108
    %s110 = ssub.s32 %s13, %s20
    %p111 = scmp.eq.s32.totalorder %s110, 0
    %s113 = sadd.s32 %s112, 1
    %s114 = scalar_select %p111, %s112, %s113
    %p117 = pneg %p111
    %p118 = scmp.eq.s32.totalorder %s13, 2
    %p119 = por %p117, %p118
    %p120 = scmp.ne.s32.totalorder %s112, %s115
    %p121 = scmp.eq.s32.totalorder %s13, 0
    %p122 = por %p120, %p121
    %p123 = scmp.ne.s32.totalorder %s112, %s115
    %p124 = scmp.eq.s32.totalorder %s18, 2
    %p125 = por %p123, %p124
    %p126 = scmp.ne.s32.totalorder %s115, %s116
    %p127 = scmp.eq.s32.totalorder %s18, 0
    %p128 = por %p126, %p127
    %p129 = scmp.ne.s32.totalorder %s115, %s116
    %p130 = scmp.eq.s32.totalorder %s19, 2
    %p131 = por %p129, %p130
    %p133 = scmp.ne.s32.totalorder %s116, %s132
    %p134 = scmp.eq.s32.totalorder %s19, 0
    %p135 = por %p133, %p134
    %s136 = ssub.s32 %s13, %s20
    %p137 = scmp.eq.s32.totalorder %s136, 0
    %s139 = sadd.s32 %s138, 1
    %s140 = scalar_select %p137, %s138, %s139
    %p143 = pneg %p137
    %p144 = scmp.eq.s32.totalorder %s13, 2
    %p145 = por %p143, %p144
    %p146 = scmp.ne.s32.totalorder %s138, %s141
    %p147 = scmp.eq.s32.totalorder %s13, 0
    %p148 = por %p146, %p147
    %p149 = scmp.ne.s32.totalorder %s138, %s141
    %p150 = scmp.eq.s32.totalorder %s18, 2
    %p151 = por %p149, %p150
    %p152 = scmp.ne.s32.totalorder %s141, %s142
    %p153 = scmp.eq.s32.totalorder %s18, 0
    %p154 = por %p152, %p153
    %p155 = scmp.ne.s32.totalorder %s141, %s142
    %p156 = scmp.eq.s32.totalorder %s19, 2
    %p157 = por %p155, %p156
    %p159 = scmp.ne.s32.totalorder %s142, %s158
    %p160 = scmp.eq.s32.totalorder %s19, 0
    %p161 = por %p159, %p160
    %s162 = ssub.s32 %s13, %s20
    %p163 = scmp.eq.s32.totalorder %s162, 0
    %s165 = sadd.s32 %s164, 1
    %s166 = scalar_select %p163, %s164, %s165
    %p169 = pneg %p163
    %p170 = scmp.eq.s32.totalorder %s13, 2
    %p171 = por %p169, %p170
    %p172 = scmp.ne.s32.totalorder %s164, %s167
    %p173 = scmp.eq.s32.totalorder %s13, 0
    %p174 = por %p172, %p173
    %p175 = scmp.ne.s32.totalorder %s164, %s167
    %p176 = scmp.eq.s32.totalorder %s18, 2
    %p177 = por %p175, %p176
    %p178 = scmp.ne.s32.totalorder %s167, %s168
    %p179 = scmp.eq.s32.totalorder %s18, 0
    %p180 = por %p178, %p179
    %p181 = scmp.ne.s32.totalorder %s167, %s168
    %p182 = scmp.eq.s32.totalorder %s19, 2
    %p183 = por %p181, %p182
    %p185 = scmp.ne.s32.totalorder %s168, %s184
    %p186 = scmp.eq.s32.totalorder %s19, 0
    %p187 = por %p185, %p186
    %p188 = scmp.le.s32.totalorder 1, %s13
    %p189 = scmp.lt.s32.totalorder %s13, 4
    %p190 = pnand %p188, %p189
    %p191 = pneg %p190
    // Predicated region
    $region9: #{gat_forward.6} parent=5 // pred_check
      _
    $region10: #{gat_forward.6} parent=5 // pred_check_branch
      %193 = sbr.rel (%p190) target = $region12
    $region11: #{gat_forward.6} parent=5 // pred_region
      %s194 = ssub.s32 %s13, 1
      // Predicated region
      $region13: #{gat_forward.6} parent=11 // pred_check
        %p195 = pneg %p60
      $region14: #{gat_forward.6} parent=11 // pred_check_branch
        %197 = sbr.rel (%p195) target = $region16
      $region15: #{gat_forward.6} parent=11 // pred_region
        _
      $region16: #{gat_forward.6} parent=11 // pred_fallthru
        _
      // Predicated region
      $region17: #{gat_forward.6} parent=11 // pred_check
        %p198 = pneg %p81
      $region18: #{gat_forward.6} parent=11 // pred_check_branch
        %200 = sbr.rel (%p198) target = $region20
      $region19: #{gat_forward.6} parent=11 // pred_region
        _
      $region20: #{gat_forward.6} parent=11 // pred_fallthru
        _
      // Predicated region
      $region21: #{gat_forward.6} parent=11 // pred_check
        %p201 = pneg %p102
      $region22: #{gat_forward.6} parent=11 // pred_check_branch
        %203 = sbr.rel (%p201) target = $region24
      $region23: #{gat_forward.6} parent=11 // pred_region
        _
      $region24: #{gat_forward.6} parent=11 // pred_fallthru
        _
    $region12: #{gat_forward.6} parent=5 // pred_fallthru
      _
    %p204 = scmp.lt.s32.totalorder %s13, 3
    // Predicated region
    $region25: #{gat_forward.6} parent=5 // pred_check
      %p205 = pneg %p204
    $region26: #{gat_forward.6} parent=5 // pred_check_branch
      %207 = sbr.rel (%p205) target = $region28
    $region27: #{gat_forward.6} parent=5 // pred_region
      // Predicated region
      $region29: #{gat_forward.6} parent=27 // pred_check
        %p208 = pneg %p33
      $region30: #{gat_forward.6} parent=27 // pred_check_branch
        %210 = sbr.rel (%p208) target = $region32
      $region31: #{gat_forward.6} parent=27 // pred_region
        %s211 = smul.u32 16, %s13
        %p212 = scmp.lt.s32.totalorder %s211, 47
        %s213 = scalar_select %p212, %s211, 47
        %s214 = smul.addr %s213, 8
        %s215 = scalar_lea.vmem %s0, %s214
        %s216 = smul.u32 16, %s13
      $region32: #{gat_forward.6} parent=27 // pred_fallthru
        _
    $region28: #{gat_forward.6} parent=5 // pred_fallthru
      _
    %p217 = scmp.le.s32.totalorder 1, %s13
    %p218 = scmp.lt.s32.totalorder %s13, 4
    %p219 = pnand %p217, %p218
    %p220 = pneg %p219
    // Predicated region
    $region33: #{gat_forward.6} parent=5 // pred_check
      _
    $region34: #{gat_forward.6} parent=5 // pred_check_branch
      %222 = sbr.rel (%p219) target = $region36
    $region35: #{gat_forward.6} parent=5 // pred_region
      %s223 = ssub.s32 %s13, 1
      %s224 = smul.u32 16, %s18
      %p225 = scmp.lt.s32.totalorder %s224, 47
      %s226 = scalar_select %p225, %s224, 47
      %s227 = smul.addr %s226, 8
      %s228 = scalar_lea.vmem %s0, %s227
      %p229 = pneg %p39
      %p230 = pneg %p36
      %p231 = pneg %p60
      %p232 = pneg %p57
      %p233 = pneg %p81
      %p234 = pneg %p78
      %p235 = pneg %p102
      %p236 = pneg %p99
      %p237 = pneg %p128
      %p238 = pneg %p125
      %s239 = smul.u32 16, %s18
      %p240 = scmp.lt.s32.totalorder %s239, 47
      %s241 = scalar_select %p240, %s239, 47
      %s242 = smul.addr %s241, 8
      %s243 = scalar_lea.vmem %s4, %s242
      %p244 = pneg %p154
      %p245 = pneg %p151
      %s246 = smul.u32 16, %s18
      %p247 = scmp.lt.s32.totalorder %s246, 47
      %s248 = scalar_select %p247, %s246, 47
      %s249 = smul.addr %s248, 8
      %s250 = scalar_lea.vmem %s5, %s249
      %p251 = pneg %p180
      %p252 = pneg %p177
      %p253 = scmp.lt.s32.totalorder %s18, 2
      %s254 = scalar_select %p253, %s18, 2
      %s255 = scalar_lea.vmem %s6, %s254
      %s256 = smul.u32 16, %s18
      %p257 = scmp.lt.s32.totalorder %s256, 47
      %s258 = scalar_select %p257, %s256, 47
      %s259 = smul.addr %s258, 8
      %s260 = scalar_lea.vmem %s0, %s259
      %s261 = smul.u32 16, %s18
      %s262 = smul.u32 16, %s18
      %p263 = scmp.lt.s32.totalorder %s262, 47
      %s264 = scalar_select %p263, %s262, 47
      %s265 = smul.addr %s264, 8
      %s266 = scalar_lea.vmem %s4, %s265
      %s267 = smul.u32 16, %s18
      %s268 = smul.u32 16, %s18
      %p269 = scmp.lt.s32.totalorder %s268, 47
      %s270 = scalar_select %p269, %s268, 47
      %s271 = smul.addr %s270, 8
      %s272 = scalar_lea.vmem %s5, %s271
      %s273 = smul.u32 16, %s18
      %p274 = scmp.lt.s32.totalorder %s18, 2
      %s275 = scalar_select %p274, %s18, 2
      %s276 = scalar_lea.vmem %s6, %s275
      %v277 = vld [vmem:[%s260] sm:$0xff]
      %v278 = vld [vmem:[%s260 + $0x8] sm:$0xff]
      %v279 = vld [vmem:[%s260 + $0x10] sm:$0xff]
      %v280 = vld [vmem:[%s260 + $0x18] sm:$0xff]
      %v281 = vld [vmem:[%s260 + $0x20] sm:$0xff]
      %v282 = vld [vmem:[%s260 + $0x28] sm:$0xff]
      %v283 = vld [vmem:[%s260 + $0x30] sm:$0xff]
      %v284 = vld [vmem:[%s260 + $0x38] sm:$0xff]
      %v285 = vld [vmem:[%s260 + $0x40] sm:$0xff]
      %v286 = vld [vmem:[%s260 + $0x48] sm:$0xff]
      %v287 = vld [vmem:[%s260 + $0x50] sm:$0xff]
      %v288 = vld [vmem:[%s260 + $0x58] sm:$0xff]
      %v289 = vld [vmem:[%s260 + $0x60] sm:$0xff]
      %v290 = vld [vmem:[%s260 + $0x68] sm:$0xff]
      %v291 = vld [vmem:[%s260 + $0x70] sm:$0xff]
      %v292 = vld [vmem:[%s260 + $0x78] sm:$0xff]
      %v293 = vld [vmem:[%s1] sm:$0xff]
      %v294 = vld [vmem:[%s1 + $0x8] sm:$0xff]
      %v295 = vld [vmem:[%s1 + $0x10] sm:$0xff]
      %v296 = vld [vmem:[%s1 + $0x18] sm:$0xff]
      %v297 = vld [vmem:[%s1 + $0x20] sm:$0xff]
      %v298 = vld [vmem:[%s1 + $0x28] sm:$0xff]
      %v299 = vld [vmem:[%s1 + $0x30] sm:$0xff]
      %v300 = vld [vmem:[%s1 + $0x38] sm:$0xff]
      %v301 = vld [vmem:[%s1 + $0x40] sm:$0xff]
      %v302 = vld [vmem:[%s1 + $0x48] sm:$0xff]
      %v303 = vld [vmem:[%s1 + $0x50] sm:$0xff]
      %v304 = vld [vmem:[%s1 + $0x58] sm:$0xff]
      %v305 = vld [vmem:[%s1 + $0x60] sm:$0xff]
      %v306 = vld [vmem:[%s1 + $0x68] sm:$0xff]
      %v307 = vld [vmem:[%s1 + $0x70] sm:$0xff]
      %v308 = vld [vmem:[%s1 + $0x78] sm:$0xff]
      %309 = vmatprep.subr.mxu0 0.0
      %310 = vmatpush1.msra.mxu0 %v293
      %311 = vmatprep.subr.mxu0 0.0
      %312 = vmatpush1.msra.mxu0 %v294
      %313 = vmatprep.subr.mxu0 0.0
      %314 = vmatpush1.msra.mxu0 %v295
      %315 = vmatprep.subr.mxu0 0.0
      %316 = vmatpush1.msra.mxu0 %v296
      %317 = vmatprep.subr.mxu0 0.0
      %318 = vmatpush1.msra.mxu0 %v297
      %319 = vmatprep.subr.mxu0 0.0
      %320 = vmatpush1.msra.mxu0 %v298
      %321 = vmatprep.subr.mxu0 0.0
      %322 = vmatpush1.msra.mxu0 %v299
      %323 = vmatprep.subr.mxu0 0.0
      %324 = vmatpush1.msra.mxu0 %v300
      %325 = vmatprep.subr.mxu0 0.0
      %326 = vmatpush1.msra.mxu0 %v301
      %327 = vmatprep.subr.mxu0 0.0
      %328 = vmatpush1.msra.mxu0 %v302
      %329 = vmatprep.subr.mxu0 0.0
      %330 = vmatpush1.msra.mxu0 %v303
      %331 = vmatprep.subr.mxu0 0.0
      %332 = vmatpush1.msra.mxu0 %v304
      %333 = vmatprep.subr.mxu0 0.0
      %334 = vmatpush1.msra.mxu0 %v305
      %335 = vmatprep.subr.mxu0 0.0
      %336 = vmatpush1.msra.mxu0 %v306
      %337 = vmatprep.subr.mxu0 0.0
      %338 = vmatpush1.msra.mxu0 %v307
      %339 = vmatprep.subr.mxu0 0.0
      %340 = vmatpush1.msra.mxu0 %v308
      %341 = vmatprep.subr.mxu0 0.0
      %342 = vmatpush1.msra.mxu0 0.0
      %343 = vmatprep.subr.mxu0 0.0
      %344 = vmatpush1.msra.mxu0 0.0
      %345 = vmatprep.subr.mxu0 0.0
      %346 = vmatpush1.msra.mxu0 0.0
      %347 = vmatprep.subr.mxu0 0.0
      %348 = vmatpush1.msra.mxu0 0.0
      %349 = vmatprep.subr.mxu0 0.0
      %350 = vmatpush1.msra.mxu0 0.0
      %351 = vmatprep.subr.mxu0 0.0
      %352 = vmatpush1.msra.mxu0 0.0
      %353 = vmatprep.subr.mxu0 0.0
      %354 = vmatpush1.msra.mxu0 0.0
      %355 = vmatprep.subr.mxu0 0.0
      %356 = vmatpush1.msra.mxu0 0.0
      %357 = vmatprep.subr.mxu0 0.0
      %358 = vmatpush1.msra.mxu0 0.0
      %359 = vmatprep.subr.mxu0 0.0
      %360 = vmatpush1.msra.mxu0 0.0
      %361 = vmatprep.subr.mxu0 0.0
      %362 = vmatpush1.msra.mxu0 0.0
      %363 = vmatprep.subr.mxu0 0.0
      %364 = vmatpush1.msra.mxu0 0.0
      %365 = vmatprep.subr.mxu0 0.0
      %366 = vmatpush1.msra.mxu0 0.0
      %367 = vmatprep.subr.mxu0 0.0
      %368 = vmatpush1.msra.mxu0 0.0
      %369 = vmatprep.subr.mxu0 0.0
      %370 = vmatpush1.msra.mxu0 0.0
      %371 = vmatprep.subr.mxu0 0.0
      %372 = vmatpush1.msra.mxu0 0.0
      %373 = vmatprep.mubr.f32.mxu0 0.0
      %374 = vmatmul.mubr.f32.gmra.mrb[0].mxu0 %v277
      %v375 = vpop.f32.mrb[0].mxu0
      %v376 = vadd.f32 0.0, %v375
      %v377 = vpop.f32.mrb[0].mxu0
      %378 = vmatprep.mubr.f32.mxu0 0.0
      %379 = vmatmul.mubr.f32.gmra.mrb[0].mxu0 %v278
      %v380 = vpop.f32.mrb[0].mxu0
      %v381 = vadd.f32 0.0, %v380
      %v382 = vpop.f32.mrb[0].mxu0
      %383 = vmatprep.mubr.f32.mxu0 0.0
      %384 = vmatmul.mubr.f32.gmra.mrb[0].mxu0 %v279
      %v385 = vpop.f32.mrb[0].mxu0
      %v386 = vadd.f32 0.0, %v385
      %v387 = vpop.f32.mrb[0].mxu0
      %388 = vmatprep.mubr.f32.mxu0 0.0
      %389 = vmatmul.mubr.f32.gmra.mrb[0].mxu0 %v280
      %v390 = vpop.f32.mrb[0].mxu0
      %v391 = vadd.f32 0.0, %v390
      %v392 = vpop.f32.mrb[0].mxu0
      %393 = vmatprep.mubr.f32.mxu0 0.0
      %394 = vmatmul.mubr.f32.gmra.mrb[0].mxu0 %v281
      %v395 = vpop.f32.mrb[0].mxu0
      %v396 = vadd.f32 0.0, %v395
      %v397 = vpop.f32.mrb[0].mxu0
      %398 = vmatprep.mubr.f32.mxu0 0.0
      %399 = vmatmul.mubr.f32.gmra.mrb[0].mxu0 %v282
      %v400 = vpop.f32.mrb[0].mxu0
      %v401 = vadd.f32 0.0, %v400
      %v402 = vpop.f32.mrb[0].mxu0
      %403 = vmatprep.mubr.f32.mxu0 0.0
      %404 = vmatmul.mubr.f32.gmra.mrb[0].mxu0 %v283
      %v405 = vpop.f32.mrb[0].mxu0
      %v406 = vadd.f32 0.0, %v405
      %v407 = vpop.f32.mrb[0].mxu0
      %408 = vmatprep.mubr.f32.mxu0 0.0
      %409 = vmatmul.mubr.f32.gmra.mrb[0].mxu0 %v284
      %v410 = vpop.f32.mrb[0].mxu0
      %v411 = vadd.f32 0.0, %v410
      %v412 = vpop.f32.mrb[0].mxu0
      %413 = vmatprep.mubr.f32.mxu0 0.0
      %414 = vmatmul.mubr.f32.gmra.mrb[0].mxu0 %v285
      %v415 = vpop.f32.mrb[0].mxu0
      %v416 = vadd.f32 0.0, %v415
      %v417 = vpop.f32.mrb[0].mxu0
      %418 = vmatprep.mubr.f32.mxu0 0.0
      %419 = vmatmul.mubr.f32.gmra.mrb[0].mxu0 %v286
      %v420 = vpop.f32.mrb[0].mxu0
      %v421 = vadd.f32 0.0, %v420
      %v422 = vpop.f32.mrb[0].mxu0
      %423 = vmatprep.mubr.f32.mxu0 0.0
      %424 = vmatmul.mubr.f32.gmra.mrb[0].mxu0 %v287
      %v425 = vpop.f32.mrb[0].mxu0
      %v426 = vadd.f32 0.0, %v425
      %v427 = vpop.f32.mrb[0].mxu0
      %428 = vmatprep.mubr.f32.mxu0 0.0
      %429 = vmatmul.mubr.f32.gmra.mrb[0].mxu0 %v288
      %v430 = vpop.f32.mrb[0].mxu0
      %v431 = vadd.f32 0.0, %v430
      %v432 = vpop.f32.mrb[0].mxu0
      %433 = vmatprep.mubr.f32.mxu0 0.0
      %434 = vmatmul.mubr.f32.gmra.mrb[0].mxu0 %v289
      %v435 = vpop.f32.mrb[0].mxu0
      %v436 = vadd.f32 0.0, %v435
      %v437 = vpop.f32.mrb[0].mxu0
      %438 = vmatprep.mubr.f32.mxu0 0.0
      %439 = vmatmul.mubr.f32.gmra.mrb[0].mxu0 %v290
      %v440 = vpop.f32.mrb[0].mxu0
      %v441 = vadd.f32 0.0, %v440
      %v442 = vpop.f32.mrb[0].mxu0
      %443 = vmatprep.mubr.f32.mxu0 0.0
      %444 = vmatmul.mubr.f32.gmra.mrb[0].mxu0 %v291
      %v445 = vpop.f32.mrb[0].mxu0
      %v446 = vadd.f32 0.0, %v445
      %v447 = vpop.f32.mrb[0].mxu0
      %448 = vmatprep.mubr.f32.mxu0 0.0
      %449 = vmatmul.mubr.f32.gmra.mrb[0].mxu0 %v292
      %v450 = vpop.f32.mrb[0].mxu0
      %v451 = vadd.f32 0.0, %v450
      %v452 = vpop.f32.mrb[0].mxu0
      %453 = vdwg.mxu0
      %454 = vst [vmem:[%s266] sm:$0xff] %v376
      %455 = vst [vmem:[%s266 + $0x8] sm:$0xff] %v381
      %456 = vst [vmem:[%s266 + $0x10] sm:$0xff] %v386
      %457 = vst [vmem:[%s266 + $0x18] sm:$0xff] %v391
      %458 = vst [vmem:[%s266 + $0x20] sm:$0xff] %v396
      %459 = vst [vmem:[%s266 + $0x28] sm:$0xff] %v401
      %460 = vst [vmem:[%s266 + $0x30] sm:$0xff] %v406
      %461 = vst [vmem:[%s266 + $0x38] sm:$0xff] %v411
      %462 = vst [vmem:[%s266 + $0x40] sm:$0xff] %v416
      %463 = vst [vmem:[%s266 + $0x48] sm:$0xff] %v421
      %464 = vst [vmem:[%s266 + $0x50] sm:$0xff] %v426
      %465 = vst [vmem:[%s266 + $0x58] sm:$0xff] %v431
      %466 = vst [vmem:[%s266 + $0x60] sm:$0xff] %v436
      %467 = vst [vmem:[%s266 + $0x68] sm:$0xff] %v441
      %468 = vst [vmem:[%s266 + $0x70] sm:$0xff] %v446
      %469 = vst [vmem:[%s266 + $0x78] sm:$0xff] %v451
      %v470 = vld [vmem:[%s3] sm:$0x1]
      %v472 = vlaneseq
      %v473 = vshrl.u32 %v472, 7
      %v474 = vsub.s32 0, %v473
      %v475 = vrot.slane %v470, %v474
      %v477 = vmul.f32 %v376, %v475
      %v478 = vmul.f32 %v381, %v475
      %v479 = vmul.f32 %v386, %v475
      %v480 = vmul.f32 %v391, %v475
      %v481 = vmul.f32 %v396, %v475
      %v482 = vmul.f32 %v401, %v475
      %v483 = vmul.f32 %v406, %v475
      %v484 = vmul.f32 %v411, %v475
      %v485 = vmul.f32 %v416, %v475
      %v486 = vmul.f32 %v421, %v475
      %v487 = vmul.f32 %v426, %v475
      %v488 = vmul.f32 %v431, %v475
      %v489 = vmul.f32 %v436, %v475
      %v490 = vmul.f32 %v441, %v475
      %v491 = vmul.f32 %v446, %v475
      %v492 = vmul.f32 %v451, %v475
      %493 = vadd.xlane.f32.xlu0 %v477
      %v494 = vpop.xlane.xlu0 %493
      %495 = vadd.xlane.f32.xlu0 %v478
      %v496 = vpop.xlane.xlu0 %495
      %497 = vadd.xlane.f32.xlu0 %v479
      %v498 = vpop.xlane.xlu0 %497
      %499 = vadd.xlane.f32.xlu0 %v480
      %v500 = vpop.xlane.xlu0 %499
      %501 = vadd.xlane.f32.xlu0 %v481
      %v502 = vpop.xlane.xlu0 %501
      %503 = vadd.xlane.f32.xlu0 %v482
      %v504 = vpop.xlane.xlu0 %503
      %505 = vadd.xlane.f32.xlu0 %v483
      %v506 = vpop.xlane.xlu0 %505
      %507 = vadd.xlane.f32.xlu0 %v484
      %v508 = vpop.xlane.xlu0 %507
      %509 = vadd.xlane.f32.xlu0 %v485
      %v510 = vpop.xlane.xlu0 %509
      %511 = vadd.xlane.f32.xlu0 %v486
      %v512 = vpop.xlane.xlu0 %511
      %513 = vadd.xlane.f32.xlu0 %v487
      %v514 = vpop.xlane.xlu0 %513
      %515 = vadd.xlane.f32.xlu0 %v488
      %v516 = vpop.xlane.xlu0 %515
      %517 = vadd.xlane.f32.xlu0 %v489
      %v518 = vpop.xlane.xlu0 %517
      %519 = vadd.xlane.f32.xlu0 %v490
      %v520 = vpop.xlane.xlu0 %519
      %521 = vadd.xlane.f32.xlu0 %v491
      %v522 = vpop.xlane.xlu0 %521
      %523 = vadd.xlane.f32.xlu0 %v492
      %v524 = vpop.xlane.xlu0 %523
      %vm525 = vcmask 7168
      %526 = vst.msk [vmem:[%s272] sm:$0xff] %vm525, %v494
      %527 = vst.msk [vmem:[%s272 + $0x8] sm:$0xff] %vm525, %v496
      %528 = vst.msk [vmem:[%s272 + $0x10] sm:$0xff] %vm525, %v498
      %529 = vst.msk [vmem:[%s272 + $0x18] sm:$0xff] %vm525, %v500
      %530 = vst.msk [vmem:[%s272 + $0x20] sm:$0xff] %vm525, %v502
      %531 = vst.msk [vmem:[%s272 + $0x28] sm:$0xff] %vm525, %v504
      %532 = vst.msk [vmem:[%s272 + $0x30] sm:$0xff] %vm525, %v506
      %533 = vst.msk [vmem:[%s272 + $0x38] sm:$0xff] %vm525, %v508
      %534 = vst.msk [vmem:[%s272 + $0x40] sm:$0xff] %vm525, %v510
      %535 = vst.msk [vmem:[%s272 + $0x48] sm:$0xff] %vm525, %v512
      %536 = vst.msk [vmem:[%s272 + $0x50] sm:$0xff] %vm525, %v514
      %537 = vst.msk [vmem:[%s272 + $0x58] sm:$0xff] %vm525, %v516
      %538 = vst.msk [vmem:[%s272 + $0x60] sm:$0xff] %vm525, %v518
      %539 = vst.msk [vmem:[%s272 + $0x68] sm:$0xff] %vm525, %v520
      %540 = vst.msk [vmem:[%s272 + $0x70] sm:$0xff] %vm525, %v522
      %541 = vst.msk [vmem:[%s272 + $0x78] sm:$0xff] %vm525, %v524
      %v542 = vld [vmem:[%s2] sm:$0x1]
      %543 = vmatprep.subr.mxu0 0.0
      %544 = vmatpush1.xpose.msra.mxu0 %v376
      %545 = vmatprep.subr.mxu0 0.0
      %546 = vmatpush1.xpose.msra.mxu0 %v381
      %547 = vmatprep.subr.mxu0 0.0
      %548 = vmatpush1.xpose.msra.mxu0 %v386
      %549 = vmatprep.subr.mxu0 0.0
      %550 = vmatpush1.xpose.msra.mxu0 %v391
      %551 = vmatprep.subr.mxu0 0.0
      %552 = vmatpush1.xpose.msra.mxu0 %v396
      %553 = vmatprep.subr.mxu0 0.0
      %554 = vmatpush1.xpose.msra.mxu0 %v401
      %555 = vmatprep.subr.mxu0 0.0
      %556 = vmatpush1.xpose.msra.mxu0 %v406
      %557 = vmatprep.subr.mxu0 0.0
      %558 = vmatpush1.xpose.msra.mxu0 %v411
      %559 = vmatprep.subr.mxu0 0.0
      %560 = vmatpush1.xpose.msra.mxu0 %v416
      %561 = vmatprep.subr.mxu0 0.0
      %562 = vmatpush1.xpose.msra.mxu0 %v421
      %563 = vmatprep.subr.mxu0 0.0
      %564 = vmatpush1.xpose.msra.mxu0 %v426
      %565 = vmatprep.subr.mxu0 0.0
      %566 = vmatpush1.xpose.msra.mxu0 %v431
      %567 = vmatprep.subr.mxu0 0.0
      %568 = vmatpush1.xpose.msra.mxu0 %v436
      %569 = vmatprep.subr.mxu0 0.0
      %570 = vmatpush1.xpose.msra.mxu0 %v441
      %571 = vmatprep.subr.mxu0 0.0
      %572 = vmatpush1.xpose.msra.mxu0 %v446
      %573 = vmatprep.subr.mxu0 0.0
      %574 = vmatpush1.xpose.msra.mxu0 %v451
      %575 = vmatprep.subr.mxu0 0.0
      %576 = vmatpush1.xpose.msra.mxu0 0.0
      %577 = vmatprep.subr.mxu0 0.0
      %578 = vmatpush1.xpose.msra.mxu0 0.0
      %579 = vmatprep.subr.mxu0 0.0
      %580 = vmatpush1.xpose.msra.mxu0 0.0
      %581 = vmatprep.subr.mxu0 0.0
      %582 = vmatpush1.xpose.msra.mxu0 0.0
      %583 = vmatprep.subr.mxu0 0.0
      %584 = vmatpush1.xpose.msra.mxu0 0.0
      %585 = vmatprep.subr.mxu0 0.0
      %586 = vmatpush1.xpose.msra.mxu0 0.0
      %587 = vmatprep.subr.mxu0 0.0
      %588 = vmatpush1.xpose.msra.mxu0 0.0
      %589 = vmatprep.subr.mxu0 0.0
      %590 = vmatpush1.xpose.msra.mxu0 0.0
      %591 = vmatprep.subr.mxu0 0.0
      %592 = vmatpush1.xpose.msra.mxu0 0.0
      %593 = vmatprep.subr.mxu0 0.0
      %594 = vmatpush1.xpose.msra.mxu0 0.0
      %595 = vmatprep.subr.mxu0 0.0
      %596 = vmatpush1.xpose.msra.mxu0 0.0
      %597 = vmatprep.subr.mxu0 0.0
      %598 = vmatpush1.xpose.msra.mxu0 0.0
      %599 = vmatprep.subr.mxu0 0.0
      %600 = vmatpush1.xpose.msra.mxu0 0.0
      %601 = vmatprep.subr.mxu0 0.0
      %602 = vmatpush1.xpose.msra.mxu0 0.0
      %603 = vmatprep.subr.mxu0 0.0
      %604 = vmatpush1.xpose.msra.mxu0 0.0
      %605 = vmatprep.subr.mxu0 0.0
      %606 = vmatpush1.xpose.msra.mxu0 0.0
      %607 = vmatprep.mubr.f32.mxu0 0.0
      %608 = vmatmul.mubr.f32.gmra.mrb[0].mxu0 %v542
      %v609 = vpop.f32.mrb[0].mxu0
      %v610 = vadd.f32 0.0, %v609
      %v611 = vpop.f32.mrb[0].mxu0
      %612 = vdwg.mxu0
      %613 = vst [vmem:[%s276] sm:$0x1] %v610
      %s614 = smul.u32 16, %s18
      %p615 = scmp.lt.s32.totalorder %s614, 47
      %s616 = scalar_select %p615, %s614, 47
      %s617 = smul.addr %s616, 8
      %s618 = scalar_lea.vmem %s4, %s617
      %s619 = smul.u32 16, %s18
      %p620 = scmp.lt.s32.totalorder %s619, 47
      %s621 = scalar_select %p620, %s619, 47
      %s622 = smul.addr %s621, 8
      %s623 = scalar_lea.vmem %s5, %s622
      %p624 = scmp.lt.s32.totalorder %s18, 2
      %s625 = scalar_select %p624, %s18, 2
      %s626 = scalar_lea.vmem %s6, %s625
      // Predicated region
      $region37: #{gat_forward.6} parent=35 // pred_check
        %p627 = pneg %p125
      $region38: #{gat_forward.6} parent=35 // pred_check_branch
        %629 = sbr.rel (%p627) target = $region40
      $region39: #{gat_forward.6} parent=35 // pred_region
        %s630 = smul.u32 16, %s18
      $region40: #{gat_forward.6} parent=35 // pred_fallthru
        _
      // Predicated region
      $region41: #{gat_forward.6} parent=35 // pred_check
        %p631 = pneg %p151
      $region42: #{gat_forward.6} parent=35 // pred_check_branch
        %633 = sbr.rel (%p631) target = $region44
      $region43: #{gat_forward.6} parent=35 // pred_region
        %s634 = smul.u32 16, %s18
      $region44: #{gat_forward.6} parent=35 // pred_fallthru
        _
      // Predicated region
      $region45: #{gat_forward.6} parent=35 // pred_check
        %p635 = pneg %p177
      $region46: #{gat_forward.6} parent=35 // pred_check_branch
        %637 = sbr.rel (%p635) target = $region48
      $region47: #{gat_forward.6} parent=35 // pred_region
        _
      $region48: #{gat_forward.6} parent=35 // pred_fallthru
        _
    $region36: #{gat_forward.6} parent=5 // pred_fallthru
      _
    %p638 = scmp.le.s32.totalorder 2, %s13
    // Predicated region
    $region49: #{gat_forward.6} parent=5 // pred_check
      %p639 = pneg %p638
    $region50: #{gat_forward.6} parent=5 // pred_check_branch
      %641 = sbr.rel (%p639) target = $region52
    $region51: #{gat_forward.6} parent=5 // pred_region
      %s642 = ssub.s32 %s13, 2
      // Predicated region
      $region53: #{gat_forward.6} parent=51 // pred_check
        %p643 = pneg %p131
      $region54: #{gat_forward.6} parent=51 // pred_check_branch
        %645 = sbr.rel (%p643) target = $region56
      $region55: #{gat_forward.6} parent=51 // pred_region
        %s646 = smul.u32 16, %s19
        %p647 = scmp.lt.s32.totalorder %s646, 47
        %s648 = scalar_select %p647, %s646, 47
        %s649 = smul.addr %s648, 8
        %s650 = scalar_lea.vmem %s4, %s649
      $region56: #{gat_forward.6} parent=51 // pred_fallthru
        _
      // Predicated region
      $region57: #{gat_forward.6} parent=51 // pred_check
        %p651 = pneg %p157
      $region58: #{gat_forward.6} parent=51 // pred_check_branch
        %653 = sbr.rel (%p651) target = $region60
      $region59: #{gat_forward.6} parent=51 // pred_region
        %s654 = smul.u32 16, %s19
        %p655 = scmp.lt.s32.totalorder %s654, 47
        %s656 = scalar_select %p655, %s654, 47
        %s657 = smul.addr %s656, 8
        %s658 = scalar_lea.vmem %s5, %s657
      $region60: #{gat_forward.6} parent=51 // pred_fallthru
        _
      // Predicated region
      $region61: #{gat_forward.6} parent=51 // pred_check
        %p659 = pneg %p183
      $region62: #{gat_forward.6} parent=51 // pred_check_branch
        %661 = sbr.rel (%p659) target = $region64
      $region63: #{gat_forward.6} parent=51 // pred_region
        %p662 = scmp.lt.s32.totalorder %s19, 2
        %s663 = scalar_select %p662, %s19, 2
        %s664 = scalar_lea.vmem %s6, %s663
      $region64: #{gat_forward.6} parent=51 // pred_fallthru
        _
    $region52: #{gat_forward.6} parent=5 // pred_fallthru
      _
  $region6: #{gat_forward.6} parent=0 // loop_footer
    %s17 = sadd.s32 1, %s13
  $region7: #{gat_forward.6} parent=0 // loop_footer_branch
    %12 = sbr.rel target = $region3
  $region8: #{gat_forward.6} parent=0 // loop_exit
    _

// kernel: gat_forward.5
$region0: #{gat_forward.5}
  #allocation0 [shape = 'u32[]', space=smem, size = 0x4, offset = 0x4, fixed_abs, tag = 'smem constant byte address 0x4 - core index']
  #allocation1 [shape = 'u32[144,128]{1,0:T(1,128)}', space=vmem, size = 0x12000, scoped, tag = 'internal scratch']
  #allocation2 [shape = 'f32[128,1]{1,0:T(8,128)}', space=vmem, size = 0x10000, scoped, tag = 'scratch operand']
  #allocation3 [shape = 'f32[128,1]{1,0:T(8,128)}', space=vmem, size = 0x10000, scoped, tag = 'scratch operand']
  #allocation4 [shape = 'f32[128,128]{1,0:T(8,128)}', space=vmem, size = 0x10000, scoped, tag = 'scratch operand']
  %s0 = inlined_call_operand.vmem [shape: f32[384,1], index: 0, kind: input, shape index: {}]
  %s1 = inlined_call_operand.vmem [shape: f32[1,384], index: 1, kind: input, shape index: {}]
  %s2 = inlined_call_operand.vmem [shape: s8[384,384], index: 2, kind: input, shape index: {}]
  %s3 = inlined_call_operand.vmem [shape: f32[384,128], index: 3, kind: input, shape index: {}]
  %s4 = inlined_call_operand.vmem [shape: f32[1,128], index: 4, kind: input, shape index: {}]
  %s5 = inlined_call_operand.vmem [shape: f32[384,128], index: 5, kind: output, shape index: {}]
  %s6 = sld [smem:[#allocation0]]
  $region99: #{gat_forward.5} parent=0
    _
  %s8 = ssub.s32 1, %s6
  %s9 = scalar_select 0, %s8, %s6
  $region1: #{gat_forward.5} parent=0
    #allocation5 [shape = 'u8[32768]{0}', space=vmem, size = 0x8000, scoped, tag = 'input window, operand 2']
    loop: start=0, step=1, limit=11
    $region2: #{gat_forward.5} parent=1 // loop_pre_header
      _
    $region3: #{gat_forward.5} parent=1 // loop_header
      %s11 = sphi 0, %s15
      %p12 = scmp.ge.s32.totalorder %s11, 11
      %s18 = sphi 0, %s30
      %s19 = sphi 0, %s26
      %s20 = sphi 0, %s18
      %s21 = sphi 0, %s19
      %s22 = sphi 0, %s20
      %s23 = sphi 0, %s21
      %s33 = sphi 0, %s35
      %s36 = sphi 0, %s33
      %s37 = sphi 0, %s36
      %s53 = sphi 0, %s37
      %s59 = sphi 0, %s61
      %s62 = sphi 0, %s59
      %s63 = sphi 0, %s62
      %s79 = sphi 0, %s63
      %s87 = sphi 0, %s89
      %s90 = sphi 0, %s87
      %s91 = sphi 0, %s90
      %s107 = sphi 0, %s91
      %s113 = sphi 0, %s115
      %s116 = sphi 0, %s113
      %s117 = sphi 0, %s116
      %s133 = sphi 0, %s117
      %s137 = sphi 0, %s137
      %s139 = sphi 0, %s137
      %s140 = sphi 0, %s139
      %s154 = sphi 0, %s140
      %s160 = sphi 0, %s162
      %s163 = sphi 0, %s160
      %s164 = sphi 0, %s163
      %s180 = sphi 0, %s164
    $region4: #{gat_forward.5} parent=1 // loop_header_branch
      %14 = sbr.rel (%p12) target = $region8
    $region5: #{gat_forward.5} parent=1 // loop_body
      %s16 = ssub.s32 %s11, 1
      %s17 = ssub.s32 %s11, 2
      %s24 = sadd.s32 1, %s19
      %p25 = scmp.ge.s32.totalorder %s24, 3
      %s26 = scalar_select %p25, 0, %s24
      %s27 = sadd.s32 1, %s18
      %s28 = scalar_select %p25, %s27, %s18
      %p29 = scmp.ge.s32.totalorder %s28, 3
      %s30 = scalar_select %p29, 0, %s28
      %s31 = ssub.s32 %s18, %s30
      %p32 = scmp.eq.s32.totalorder %s31, 0
      %s34 = sadd.s32 %s33, 1
      %s35 = scalar_select %p32, %s33, %s34
      %p38 = pneg %p32
      %p39 = scmp.eq.s32.totalorder %s11, 8
      %p40 = por %p38, %p39
      %p41 = scmp.ne.s32.totalorder %s33, %s36
      %p42 = scmp.eq.s32.totalorder %s11, 0
      %p43 = por %p41, %p42
      %p44 = scmp.ne.s32.totalorder %s33, %s36
      %p45 = scmp.eq.s32.totalorder %s16, 8
      %p46 = por %p44, %p45
      %p47 = scmp.ne.s32.totalorder %s36, %s37
      %p48 = scmp.eq.s32.totalorder %s16, 0
      %p49 = por %p47, %p48
      %p50 = scmp.ne.s32.totalorder %s36, %s37
      %p51 = scmp.eq.s32.totalorder %s17, 8
      %p52 = por %p50, %p51
      %p54 = scmp.ne.s32.totalorder %s37, %s53
      %p55 = scmp.eq.s32.totalorder %s17, 0
      %p56 = por %p54, %p55
      %s57 = ssub.s32 %s19, %s26
      %p58 = scmp.eq.s32.totalorder %s57, 0
      %s60 = sadd.s32 %s59, 1
      %s61 = scalar_select %p58, %s59, %s60
      %p64 = pneg %p58
      %p65 = scmp.eq.s32.totalorder %s11, 8
      %p66 = por %p64, %p65
      %p67 = scmp.ne.s32.totalorder %s59, %s62
      %p68 = scmp.eq.s32.totalorder %s11, 0
      %p69 = por %p67, %p68
      %p70 = scmp.ne.s32.totalorder %s59, %s62
      %p71 = scmp.eq.s32.totalorder %s16, 8
      %p72 = por %p70, %p71
      %p73 = scmp.ne.s32.totalorder %s62, %s63
      %p74 = scmp.eq.s32.totalorder %s16, 0
      %p75 = por %p73, %p74
      %p76 = scmp.ne.s32.totalorder %s62, %s63
      %p77 = scmp.eq.s32.totalorder %s17, 8
      %p78 = por %p76, %p77
      %p80 = scmp.ne.s32.totalorder %s63, %s79
      %p81 = scmp.eq.s32.totalorder %s17, 0
      %p82 = por %p80, %p81
      %s83 = ssub.s32 %s18, %s30
      %s84 = ssub.s32 %s19, %s26
      %s85 = sor.u32 %s83, %s84
      %p86 = scmp.eq.s32.totalorder %s85, 0
      %s88 = sadd.s32 %s87, 1
      %s89 = scalar_select %p86, %s87, %s88
      %p92 = pneg %p86
      %p93 = scmp.eq.s32.totalorder %s11, 8
      %p94 = por %p92, %p93
      %p95 = scmp.ne.s32.totalorder %s87, %s90
      %p96 = scmp.eq.s32.totalorder %s11, 0
      %p97 = por %p95, %p96
      %p98 = scmp.ne.s32.totalorder %s87, %s90
      %p99 = scmp.eq.s32.totalorder %s16, 8
      %p100 = por %p98, %p99
      %p101 = scmp.ne.s32.totalorder %s90, %s91
      %p102 = scmp.eq.s32.totalorder %s16, 0
      %p103 = por %p101, %p102
      %p104 = scmp.ne.s32.totalorder %s90, %s91
      %p105 = scmp.eq.s32.totalorder %s17, 8
      %p106 = por %p104, %p105
      %p108 = scmp.ne.s32.totalorder %s91, %s107
      %p109 = scmp.eq.s32.totalorder %s17, 0
      %p110 = por %p108, %p109
      %s111 = ssub.s32 %s19, %s26
      %p112 = scmp.eq.s32.totalorder %s111, 0
      %s114 = sadd.s32 %s113, 1
      %s115 = scalar_select %p112, %s113, %s114
      %p118 = pneg %p112
      %p119 = scmp.eq.s32.totalorder %s11, 8
      %p120 = por %p118, %p119
      %p121 = scmp.ne.s32.totalorder %s113, %s116
      %p122 = scmp.eq.s32.totalorder %s11, 0
      %p123 = por %p121, %p122
      %p124 = scmp.ne.s32.totalorder %s113, %s116
      %p125 = scmp.eq.s32.totalorder %s16, 8
      %p126 = por %p124, %p125
      %p127 = scmp.ne.s32.totalorder %s116, %s117
      %p128 = scmp.eq.s32.totalorder %s16, 0
      %p129 = por %p127, %p128
      %p130 = scmp.ne.s32.totalorder %s116, %s117
      %p131 = scmp.eq.s32.totalorder %s17, 8
      %p132 = por %p130, %p131
      %p134 = scmp.ne.s32.totalorder %s117, %s133
      %p135 = scmp.eq.s32.totalorder %s17, 0
      %p136 = por %p134, %p135
      %s138 = sadd.s32 %s137, 1
      %p141 = scmp.eq.s32.totalorder %s11, 8
      %p142 = scmp.ne.s32.totalorder %s137, %s139
      %p143 = scmp.eq.s32.totalorder %s11, 0
      %p144 = por %p142, %p143
      %p145 = scmp.ne.s32.totalorder %s137, %s139
      %p146 = scmp.eq.s32.totalorder %s16, 8
      %p147 = por %p145, %p146
      %p148 = scmp.ne.s32.totalorder %s139, %s140
      %p149 = scmp.eq.s32.totalorder %s16, 0
      %p150 = por %p148, %p149
      %p151 = scmp.ne.s32.totalorder %s139, %s140
      %p152 = scmp.eq.s32.totalorder %s17, 8
      %p153 = por %p151, %p152
      %p155 = scmp.ne.s32.totalorder %s140, %s154
      %p156 = scmp.eq.s32.totalorder %s17, 0
      %p157 = por %p155, %p156
      %s158 = ssub.s32 %s18, %s30
      %p159 = scmp.eq.s32.totalorder %s158, 0
      %s161 = sadd.s32 %s160, 1
      %s162 = scalar_select %p159, %s160, %s161
      %p165 = pneg %p159
      %p166 = scmp.eq.s32.totalorder %s11, 8
      %p167 = por %p165, %p166
      %p168 = scmp.ne.s32.totalorder %s160, %s163
      %p169 = scmp.eq.s32.totalorder %s11, 0
      %p170 = por %p168, %p169
      %p171 = scmp.ne.s32.totalorder %s160, %s163
      %p172 = scmp.eq.s32.totalorder %s16, 8
      %p173 = por %p171, %p172
      %p174 = scmp.ne.s32.totalorder %s163, %s164
      %p175 = scmp.eq.s32.totalorder %s16, 0
      %p176 = por %p174, %p175
      %p177 = scmp.ne.s32.totalorder %s163, %s164
      %p178 = scmp.eq.s32.totalorder %s17, 8
      %p179 = por %p177, %p178
      %p181 = scmp.ne.s32.totalorder %s164, %s180
      %p182 = scmp.eq.s32.totalorder %s17, 0
      %p183 = por %p181, %p182
      %p184 = scmp.le.s32.totalorder 1, %s11
      %p185 = scmp.lt.s32.totalorder %s11, 10
      %p186 = pnand %p184, %p185
      %p187 = pneg %p186
      // Predicated region
      $region9: #{gat_forward.5} parent=5 // pred_check
        _
      $region10: #{gat_forward.5} parent=5 // pred_check_branch
        %189 = sbr.rel (%p186) target = $region12
      $region11: #{gat_forward.5} parent=5 // pred_region
        %s190 = ssub.s32 %s11, 1
        // Predicated region
        $region13: #{gat_forward.5} parent=11 // pred_check
          %p191 = pneg %p150
        $region14: #{gat_forward.5} parent=11 // pred_check_branch
          %193 = sbr.rel (%p191) target = $region16
        $region15: #{gat_forward.5} parent=11 // pred_region
          _
        $region16: #{gat_forward.5} parent=11 // pred_fallthru
          _
      $region12: #{gat_forward.5} parent=5 // pred_fallthru
        _
      %p194 = scmp.lt.s32.totalorder %s11, 9
      // Predicated region
      $region17: #{gat_forward.5} parent=5 // pred_check
        %p195 = pneg %p194
      $region18: #{gat_forward.5} parent=5 // pred_check_branch
        %197 = sbr.rel (%p195) target = $region20
      $region19: #{gat_forward.5} parent=5 // pred_region
        // Predicated region
        $region21: #{gat_forward.5} parent=19 // pred_check
          %p198 = pneg %p43
        $region22: #{gat_forward.5} parent=19 // pred_check_branch
          %200 = sbr.rel (%p198) target = $region24
        $region23: #{gat_forward.5} parent=19 // pred_region
          %s201 = smul.u32 16, %s18
          %p202 = scmp.lt.s32.totalorder %s201, 47
          %s203 = scalar_select %p202, %s201, 47
          %s204 = smul.addr %s203, 8
          %s205 = scalar_lea.vmem %s0, %s204
          %s206 = smul.u32 16, %s18
        $region24: #{gat_forward.5} parent=19 // pred_fallthru
          _
        // Predicated region
        $region25: #{gat_forward.5} parent=19 // pred_check
          %p207 = pneg %p69
        $region26: #{gat_forward.5} parent=19 // pred_check_branch
          %209 = sbr.rel (%p207) target = $region28
        $region27: #{gat_forward.5} parent=19 // pred_region
          %p210 = scmp.lt.s32.totalorder %s19, 2
          %s211 = scalar_select %p210, %s19, 2
          %s212 = scalar_lea.vmem %s1, %s211
        $region28: #{gat_forward.5} parent=19 // pred_fallthru
          _
        // Predicated region
        $region29: #{gat_forward.5} parent=19 // pred_check
          %p213 = pneg %p97
        $region30: #{gat_forward.5} parent=19 // pred_check_branch
          %215 = sbr.rel (%p213) target = $region32
        $region31: #{gat_forward.5} parent=19 // pred_region
          %s216 = sand.u32 %s87, 1
          %s217 = sand.u32 %s87, 1
          %s218 = smul.addr %s217, 32
          %s219 = scalar_lea.vmem [#allocation5], %s218
          %s220 = smul.u32 4, %s18
          %s221 = smul.addr %s220, 3
          %s222 = sadd.s32 %s19, %s221
          %s223 = smul.addr %s222, 8
          %s224 = scalar_lea.vmem %s2, %s223
          // Predicated region
          $region33: #{gat_forward.5} parent=31 // pred_check
            _
          $region34: #{gat_forward.5} parent=31 // pred_check_branch
            %226 = sbr.rel (0) target = $region36
          $region35: #{gat_forward.5} parent=31 // pred_region
            // Predicated region
            $region37: #{gat_forward.5} parent=35 // pred_check
              _
            $region38: #{gat_forward.5} parent=35 // pred_check_branch
              %228 = sbr.rel (0) target = $region40
            $region39: #{gat_forward.5} parent=35 // pred_region
              // Predicated region
              $region52: #{gat_forward.5} parent=39 // pred_check
                _
              $region53: #{gat_forward.5} parent=39 // pred_check_branch
                %249 = sbr.rel (0) target = $region55
              $region54: #{gat_forward.5} parent=39 // pred_region
                loop: start=0, step=1, limit=1
                $region56: #{gat_forward.5} parent=54 // loop_pre_header
                  _
                $region57: #{gat_forward.5} parent=54 // loop_header
                  %s251 = sphi 0, %s255
                  %p252 = scmp.ge.s32.totalorder %s251, 1
                  %s256 = sphi %s224, %s224
                  %s257 = sphi %s219, %s219
                $region58: #{gat_forward.5} parent=54 // loop_header_branch
                  %254 = sbr.rel (%p252) target = $region62
                $region59: #{gat_forward.5} parent=54 // loop_body
                  %v258 = vld [vmem:[%s256] sm:$0xff]
                  %259 = vst [vmem:[%s257] sm:$0xff] %v258
                  %v260 = vld [vmem:[%s256 + $0x18] sm:$0xff]
                  %261 = vst [vmem:[%s257 + $0x8] sm:$0xff] %v260
                  %v262 = vld [vmem:[%s256 + $0x30] sm:$0xff]
                  %263 = vst [vmem:[%s257 + $0x10] sm:$0xff] %v262
                  %v264 = vld [vmem:[%s256 + $0x48] sm:$0xff]
                  %265 = vst [vmem:[%s257 + $0x18] sm:$0xff] %v264
                $region60: #{gat_forward.5} parent=54 // loop_footer
                  %s255 = sadd.s32 1, %s251
                $region61: #{gat_forward.5} parent=54 // loop_footer_branch
                  %250 = sbr.rel target = $region57
                $region62: #{gat_forward.5} parent=54 // loop_exit
                  _
              $region55: #{gat_forward.5} parent=39 // pred_fallthru
                _
              // Predicated region
              $region63: #{gat_forward.5} parent=39 // pred_check
                _
              $region64: #{gat_forward.5} parent=39 // pred_check_branch
                %267 = sbr.rel target = $region66
              $region65: #{gat_forward.5} parent=39 // pred_region
                _
              $region66: #{gat_forward.5} parent=39 // pred_fallthru
                _
            $region40: #{gat_forward.5} parent=35 // pred_fallthru
              _
            // Predicated region
            $region41: #{gat_forward.5} parent=35 // pred_check
              _
            $region42: #{gat_forward.5} parent=35 // pred_check_branch
              %230 = sbr.rel target = $region44
            $region43: #{gat_forward.5} parent=35 // pred_region
              loop: start=0, step=1, limit=1
              $region45: #{gat_forward.5} parent=43 // loop_pre_header
                _
              $region46: #{gat_forward.5} parent=43 // loop_header
                %s233 = sphi 0, %s237
                %p234 = scmp.ge.s32.totalorder %s233, 1
                %s238 = sphi %s224, %s224
                %s239 = sphi %s219, %s219
              $region47: #{gat_forward.5} parent=43 // loop_header_branch
                %236 = sbr.rel (%p234) target = $region51
              $region48: #{gat_forward.5} parent=43 // loop_body
                %v240 = vld [vmem:[%s238] sm:$0xff]
                %241 = vst [vmem:[%s239] sm:$0xff] %v240
                %v242 = vld [vmem:[%s238 + $0x18] sm:$0xff]
                %243 = vst [vmem:[%s239 + $0x8] sm:$0xff] %v242
                %v244 = vld [vmem:[%s238 + $0x30] sm:$0xff]
                %245 = vst [vmem:[%s239 + $0x10] sm:$0xff] %v244
                %v246 = vld [vmem:[%s238 + $0x48] sm:$0xff]
                %247 = vst [vmem:[%s239 + $0x18] sm:$0xff] %v246
              $region49: #{gat_forward.5} parent=43 // loop_footer
                %s237 = sadd.s32 1, %s233
              $region50: #{gat_forward.5} parent=43 // loop_footer_branch
                %232 = sbr.rel target = $region46
              $region51: #{gat_forward.5} parent=43 // loop_exit
                _
            $region44: #{gat_forward.5} parent=35 // pred_fallthru
              _
          $region36: #{gat_forward.5} parent=31 // pred_fallthru
            _
          %268 = vnop
        $region32: #{gat_forward.5} parent=19 // pred_fallthru
          _
        // Predicated region
        $region67: #{gat_forward.5} parent=19 // pred_check
          %p269 = pneg %p123
        $region68: #{gat_forward.5} parent=19 // pred_check_branch
          %271 = sbr.rel (%p269) target = $region70
        $region69: #{gat_forward.5} parent=19 // pred_region
          %s272 = smul.u32 16, %s19
          %p273 = scmp.lt.s32.totalorder %s272, 47
          %s274 = scalar_select %p273, %s272, 47
          %s275 = smul.addr %s274, 8
          %s276 = scalar_lea.vmem %s3, %s275
          %s277 = smul.u32 16, %s19
        $region70: #{gat_forward.5} parent=19 // pred_fallthru
          _
      $region20: #{gat_forward.5} parent=5 // pred_fallthru
        _
      %p278 = scmp.le.s32.totalorder 1, %s11
      %p279 = scmp.lt.s32.totalorder %s11, 10
      %p280 = pnand %p278, %p279
      %p281 = pneg %p280
      // Predicated region
      $region71: #{gat_forward.5} parent=5 // pred_check
        _
      $region72: #{gat_forward.5} parent=5 // pred_check_branch
        %283 = sbr.rel (%p280) target = $region74
      $region73: #{gat_forward.5} parent=5 // pred_region
        %s284 = ssub.s32 %s11, 1
        %s285 = sand.u32 %s90, 1
        %s286 = sand.u32 %s90, 1
        %s287 = smul.addr %s286, 32
        %s288 = scalar_lea.vmem [#allocation5], %s287
        // Predicated region
        $region75: #{gat_forward.5} parent=73 // pred_check
          %p289 = pneg %p103
        $region76: #{gat_forward.5} parent=73 // pred_check_branch
          %291 = sbr.rel (%p289) target = $region78
        $region77: #{gat_forward.5} parent=73 // pred_region
          _
        $region78: #{gat_forward.5} parent=73 // pred_fallthru
          _
        %s292 = smul.u32 16, %s20
        %p293 = scmp.lt.s32.totalorder %s292, 47
        %s294 = scalar_select %p293, %s292, 47
        %s295 = smul.addr %s294, 8
        %s296 = scalar_lea.vmem %s0, %s295
        %p297 = pneg %p49
        %p298 = pneg %p46
        %p299 = scmp.lt.s32.totalorder %s21, 2
        %s300 = scalar_select %p299, %s21, 2
        %s301 = scalar_lea.vmem %s1, %s300
        %p302 = pneg %p75
        %p303 = pneg %p72
        %s304 = sand.u32 %s90, 1
        %s305 = sand.u32 %s90, 1
        %s306 = smul.addr %s305, 32
        %s307 = scalar_lea.vmem [#allocation5], %s306
        %p308 = pneg %p103
        %p309 = pneg %p100
        %s310 = smul.u32 16, %s21
        %p311 = scmp.lt.s32.totalorder %s310, 47
        %s312 = scalar_select %p311, %s310, 47
        %s313 = smul.addr %s312, 8
        %s314 = scalar_lea.vmem %s3, %s313
        %p315 = pneg %p129
        %p316 = pneg %p126
        %p317 = pneg %p150
        %p318 = pneg %p147
        %p319 = pneg %p176
        %p320 = pneg %p173
        %s321 = smul.u32 16, %s20
        %p322 = scmp.lt.s32.totalorder %s321, 47
        %s323 = scalar_select %p322, %s321, 47
        %s324 = smul.addr %s323, 8
        %s325 = scalar_lea.vmem %s5, %s324
        %s326 = smul.u32 16, %s20
        %p327 = scmp.lt.s32.totalorder %s326, 47
        %s328 = scalar_select %p327, %s326, 47
        %s329 = smul.addr %s328, 8
        %s330 = scalar_lea.vmem %s0, %s329
        %s331 = smul.u32 16, %s20
        %p332 = scmp.lt.s32.totalorder %s21, 2
        %s333 = scalar_select %p332, %s21, 2
        %s334 = scalar_lea.vmem %s1, %s333
        %s335 = smul.u32 4, %s20
        %s336 = smul.u32 16, %s21
        %p337 = scmp.lt.s32.totalorder %s336, 47
        %s338 = scalar_select %p337, %s336, 47
        %s339 = smul.addr %s338, 8
        %s340 = scalar_lea.vmem %s3, %s339
        %s341 = smul.u32 16, %s21
        %s342 = smul.u32 16, %s20
        %p343 = scmp.lt.s32.totalorder %s342, 47
        %s344 = scalar_select %p343, %s342, 47
        %s345 = smul.addr %s344, 8
        %s346 = scalar_lea.vmem %s5, %s345
        %s347 = smul.u32 16, %s20
        %p348 = scmp.eq.s32.totalorder %s21, 0
        // Predicated region
        $region79: #{gat_forward.5} parent=73 // pred_check
          %p349 = pneg %p348
        $region80: #{gat_forward.5} parent=73 // pred_check_branch
          %351 = sbr.rel (%p349) target = $region82
        $region81: #{gat_forward.5} parent=73 // pred_region
          %vm352 = vcmask 7168
          %353 = vst.msk [vmem:[#allocation2] sm:$0xff] %vm352, -1e+30
          %354 = vst.msk [vmem:[#allocation2 + $0x8] sm:$0xff] %vm352, -1e+30
          %355 = vst.msk [vmem:[#allocation2 + $0x10] sm:$0xff] %vm352, -1e+30
          %356 = vst.msk [vmem:[#allocation2 + $0x18] sm:$0xff] %vm352, -1e+30
          %357 = vst.msk [vmem:[#allocation2 + $0x20] sm:$0xff] %vm352, -1e+30
          %358 = vst.msk [vmem:[#allocation2 + $0x28] sm:$0xff] %vm352, -1e+30
          %359 = vst.msk [vmem:[#allocation2 + $0x30] sm:$0xff] %vm352, -1e+30
          %360 = vst.msk [vmem:[#allocation2 + $0x38] sm:$0xff] %vm352, -1e+30
          %361 = vst.msk [vmem:[#allocation2 + $0x40] sm:$0xff] %vm352, -1e+30
          %362 = vst.msk [vmem:[#allocation2 + $0x48] sm:$0xff] %vm352, -1e+30
          %363 = vst.msk [vmem:[#allocation2 + $0x50] sm:$0xff] %vm352, -1e+30
          %364 = vst.msk [vmem:[#allocation2 + $0x58] sm:$0xff] %vm352, -1e+30
          %365 = vst.msk [vmem:[#allocation2 + $0x60] sm:$0xff] %vm352, -1e+30
          %366 = vst.msk [vmem:[#allocation2 + $0x68] sm:$0xff] %vm352, -1e+30
          %367 = vst.msk [vmem:[#allocation2 + $0x70] sm:$0xff] %vm352, -1e+30
          %368 = vst.msk [vmem:[#allocation2 + $0x78] sm:$0xff] %vm352, -1e+30
          %369 = vst.msk [vmem:[#allocation3] sm:$0xff] %vm352, 0.0
          %370 = vst.msk [vmem:[#allocation3 + $0x8] sm:$0xff] %vm352, 0.0
          %371 = vst.msk [vmem:[#allocation3 + $0x10] sm:$0xff] %vm352, 0.0
          %372 = vst.msk [vmem:[#allocation3 + $0x18] sm:$0xff] %vm352, 0.0
          %373 = vst.msk [vmem:[#allocation3 + $0x20] sm:$0xff] %vm352, 0.0
          %374 = vst.msk [vmem:[#allocation3 + $0x28] sm:$0xff] %vm352, 0.0
          %375 = vst.msk [vmem:[#allocation3 + $0x30] sm:$0xff] %vm352, 0.0
          %376 = vst.msk [vmem:[#allocation3 + $0x38] sm:$0xff] %vm352, 0.0
          %377 = vst.msk [vmem:[#allocation3 + $0x40] sm:$0xff] %vm352, 0.0
          %378 = vst.msk [vmem:[#allocation3 + $0x48] sm:$0xff] %vm352, 0.0
          %379 = vst.msk [vmem:[#allocation3 + $0x50] sm:$0xff] %vm352, 0.0
          %380 = vst.msk [vmem:[#allocation3 + $0x58] sm:$0xff] %vm352, 0.0
          %381 = vst.msk [vmem:[#allocation3 + $0x60] sm:$0xff] %vm352, 0.0
          %382 = vst.msk [vmem:[#allocation3 + $0x68] sm:$0xff] %vm352, 0.0
          %383 = vst.msk [vmem:[#allocation3 + $0x70] sm:$0xff] %vm352, 0.0
          %384 = vst.msk [vmem:[#allocation3 + $0x78] sm:$0xff] %vm352, 0.0
          %385 = vst [vmem:[#allocation4] sm:$0xff] 0.0
          %386 = vst [vmem:[#allocation4 + $0x8] sm:$0xff] 0.0
          %387 = vst [vmem:[#allocation4 + $0x10] sm:$0xff] 0.0
          %388 = vst [vmem:[#allocation4 + $0x18] sm:$0xff] 0.0
          %389 = vst [vmem:[#allocation4 + $0x20] sm:$0xff] 0.0
          %390 = vst [vmem:[#allocation4 + $0x28] sm:$0xff] 0.0
          %391 = vst [vmem:[#allocation4 + $0x30] sm:$0xff] 0.0
          %392 = vst [vmem:[#allocation4 + $0x38] sm:$0xff] 0.0
          %393 = vst [vmem:[#allocation4 + $0x40] sm:$0xff] 0.0
          %394 = vst [vmem:[#allocation4 + $0x48] sm:$0xff] 0.0
          %395 = vst [vmem:[#allocation4 + $0x50] sm:$0xff] 0.0
          %396 = vst [vmem:[#allocation4 + $0x58] sm:$0xff] 0.0
          %397 = vst [vmem:[#allocation4 + $0x60] sm:$0xff] 0.0
          %398 = vst [vmem:[#allocation4 + $0x68] sm:$0xff] 0.0
          %399 = vst [vmem:[#allocation4 + $0x70] sm:$0xff] 0.0
          %400 = vst [vmem:[#allocation4 + $0x78] sm:$0xff] 0.0
        $region82: #{gat_forward.5} parent=73 // pred_fallthru
          _
        %v401 = vld [vmem:[%s288] sm:$0xff]
        %v402 = vld [vmem:[%s288 + $0x8] sm:$0xff]
        %v403 = vld [vmem:[%s288 + $0x10] sm:$0xff]
        %v404 = vld [vmem:[%s288 + $0x18] sm:$0xff]
        %v405 = vunpack.c.0.s8 %v401
        %v406 = vunpack.c.1.s8 %v401
        %v407 = vunpack.c.2.s8 %v401
        %v408 = vunpack.c.3.s8 %v401
        %v409 = vunpack.c.0.s8 %v402
        %v410 = vunpack.c.1.s8 %v402
        %v411 = vunpack.c.2.s8 %v402
        %v412 = vunpack.c.3.s8 %v402
        %v413 = vunpack.c.0.s8 %v403
        %v414 = vunpack.c.1.s8 %v403
        %v415 = vunpack.c.2.s8 %v403
        %v416 = vunpack.c.3.s8 %v403
        %v417 = vunpack.c.0.s8 %v404
        %v418 = vunpack.c.1.s8 %v404
        %v419 = vunpack.c.2.s8 %v404
        %v420 = vunpack.c.3.s8 %v404
        %v421 = vcvt.s32.f32 %v405
        %v422 = vcvt.s32.f32 %v406
        %v423 = vcvt.s32.f32 %v407
        %v424 = vcvt.s32.f32 %v408
        %v425 = vcvt.s32.f32 %v409
        %v426 = vcvt.s32.f32 %v410
        %v427 = vcvt.s32.f32 %v411
        %v428 = vcvt.s32.f32 %v412
        %v429 = vcvt.s32.f32 %v413
        %v430 = vcvt.s32.f32 %v414
        %v431 = vcvt.s32.f32 %v415
        %v432 = vcvt.s32.f32 %v416
        %v433 = vcvt.s32.f32 %v417
        %v434 = vcvt.s32.f32 %v418
        %v435 = vcvt.s32.f32 %v419
        %v436 = vcvt.s32.f32 %v420
        %v437 = vld [vmem:[%s330] sm:$0xff]
        %v438 = vld [vmem:[%s330 + $0x8] sm:$0xff]
        %v439 = vld [vmem:[%s330 + $0x10] sm:$0xff]
        %v440 = vld [vmem:[%s330 + $0x18] sm:$0xff]
        %v441 = vld [vmem:[%s330 + $0x20] sm:$0xff]
        %v442 = vld [vmem:[%s330 + $0x28] sm:$0xff]
        %v443 = vld [vmem:[%s330 + $0x30] sm:$0xff]
        %v444 = vld [vmem:[%s330 + $0x38] sm:$0xff]
        %v445 = vld [vmem:[%s330 + $0x40] sm:$0xff]
        %v446 = vld [vmem:[%s330 + $0x48] sm:$0xff]
        %v447 = vld [vmem:[%s330 + $0x50] sm:$0xff]
        %v448 = vld [vmem:[%s330 + $0x58] sm:$0xff]
        %v449 = vld [vmem:[%s330 + $0x60] sm:$0xff]
        %v450 = vld [vmem:[%s330 + $0x68] sm:$0xff]
        %v451 = vld [vmem:[%s330 + $0x70] sm:$0xff]
        %v452 = vld [vmem:[%s330 + $0x78] sm:$0xff]
        %v453 = vld [vmem:[%s334] sm:$0x1]
        %455 = vset.pattern.permute.xlu0 0
        %456 = vperm.xlu0 %455, %v437
        %v457 = vpop.permute.xlu0 %456
        %460 = vset.pattern.permute.xlu0 0
        %461 = vperm.xlu0 %460, %v438
        %v462 = vpop.permute.xlu0 %461
        %465 = vset.pattern.permute.xlu0 0
        %466 = vperm.xlu0 %465, %v439
        %v467 = vpop.permute.xlu0 %466
        %470 = vset.pattern.permute.xlu0 0
        %471 = vperm.xlu0 %470, %v440
        %v472 = vpop.permute.xlu0 %471
        %475 = vset.pattern.permute.xlu0 0
        %476 = vperm.xlu0 %475, %v441
        %v477 = vpop.permute.xlu0 %476
        %480 = vset.pattern.permute.xlu0 0
        %481 = vperm.xlu0 %480, %v442
        %v482 = vpop.permute.xlu0 %481
        %485 = vset.pattern.permute.xlu0 0
        %486 = vperm.xlu0 %485, %v443
        %v487 = vpop.permute.xlu0 %486
        %490 = vset.pattern.permute.xlu0 0
        %491 = vperm.xlu0 %490, %v444
        %v492 = vpop.permute.xlu0 %491
        %495 = vset.pattern.permute.xlu0 0
        %496 = vperm.xlu0 %495, %v445
        %v497 = vpop.permute.xlu0 %496
        %500 = vset.pattern.permute.xlu0 0
        %501 = vperm.xlu0 %500, %v446
        %v502 = vpop.permute.xlu0 %501
        %505 = vset.pattern.permute.xlu0 0
        %506 = vperm.xlu0 %505, %v447
        %v507 = vpop.permute.xlu0 %506
        %510 = vset.pattern.permute.xlu0 0
        %511 = vperm.xlu0 %510, %v448
        %v512 = vpop.permute.xlu0 %511
        %515 = vset.pattern.permute.xlu0 0
        %516 = vperm.xlu0 %515, %v449
        %v517 = vpop.permute.xlu0 %516
        %520 = vset.pattern.permute.xlu0 0
        %521 = vperm.xlu0 %520, %v450
        %v522 = vpop.permute.xlu0 %521
        %525 = vset.pattern.permute.xlu0 0
        %526 = vperm.xlu0 %525, %v451
        %v527 = vpop.permute.xlu0 %526
        %530 = vset.pattern.permute.xlu0 0
        %531 = vperm.xlu0 %530, %v452
        %v532 = vpop.permute.xlu0 %531
        %v535 = vlaneseq
        %v536 = vshrl.u32 %v535, 7
        %v537 = vsub.s32 0, %v536
        %v538 = vrot.slane %v453, %v537
        %v540 = vadd.f32 %v457, %v538
        %v541 = vadd.f32 %v462, %v538
        %v542 = vadd.f32 %v467, %v538
        %v543 = vadd.f32 %v472, %v538
        %v544 = vadd.f32 %v477, %v538
        %v545 = vadd.f32 %v482, %v538
        %v546 = vadd.f32 %v487, %v538
        %v547 = vadd.f32 %v492, %v538
        %v548 = vadd.f32 %v497, %v538
        %v549 = vadd.f32 %v502, %v538
        %v550 = vadd.f32 %v507, %v538
        %v551 = vadd.f32 %v512, %v538
        %v552 = vadd.f32 %v517, %v538
        %v553 = vadd.f32 %v522, %v538
        %v554 = vadd.f32 %v527, %v538
        %v555 = vadd.f32 %v532, %v538
        %vm556 = vcmp.ge.f32.partialorder %v540, 0.0
        %vm557 = vcmp.ge.f32.partialorder %v541, 0.0
        %vm558 = vcmp.ge.f32.partialorder %v542, 0.0
        %vm559 = vcmp.ge.f32.partialorder %v543, 0.0
        %vm560 = vcmp.ge.f32.partialorder %v544, 0.0
        %vm561 = vcmp.ge.f32.partialorder %v545, 0.0
        %vm562 = vcmp.ge.f32.partialorder %v546, 0.0
        %vm563 = vcmp.ge.f32.partialorder %v547, 0.0
        %vm564 = vcmp.ge.f32.partialorder %v548, 0.0
        %vm565 = vcmp.ge.f32.partialorder %v549, 0.0
        %vm566 = vcmp.ge.f32.partialorder %v550, 0.0
        %vm567 = vcmp.ge.f32.partialorder %v551, 0.0
        %vm568 = vcmp.ge.f32.partialorder %v552, 0.0
        %vm569 = vcmp.ge.f32.partialorder %v553, 0.0
        %vm570 = vcmp.ge.f32.partialorder %v554, 0.0
        %vm571 = vcmp.ge.f32.partialorder %v555, 0.0
        %v572 = vmul.f32 %v540, 0.2
        %v573 = vmul.f32 %v541, 0.2
        %v574 = vmul.f32 %v542, 0.2
        %v575 = vmul.f32 %v543, 0.2
        %v576 = vmul.f32 %v544, 0.2
        %v577 = vmul.f32 %v545, 0.2
        %v578 = vmul.f32 %v546, 0.2
        %v579 = vmul.f32 %v547, 0.2
        %v580 = vmul.f32 %v548, 0.2
        %v581 = vmul.f32 %v549, 0.2
        %v582 = vmul.f32 %v550, 0.2
        %v583 = vmul.f32 %v551, 0.2
        %v584 = vmul.f32 %v552, 0.2
        %v585 = vmul.f32 %v553, 0.2
        %v586 = vmul.f32 %v554, 0.2
        %v587 = vmul.f32 %v555, 0.2
        %v588 = vsel %vm556, %v540, %v572
        %v589 = vsel %vm557, %v541, %v573
        %v590 = vsel %vm558, %v542, %v574
        %v591 = vsel %vm559, %v543, %v575
        %v592 = vsel %vm560, %v544, %v576
        %v593 = vsel %vm561, %v545, %v577
        %v594 = vsel %vm562, %v546, %v578
        %v595 = vsel %vm563, %v547, %v579
        %v596 = vsel %vm564, %v548, %v580
        %v597 = vsel %vm565, %v549, %v581
        %v598 = vsel %vm566, %v550, %v582
        %v599 = vsel %vm567, %v551, %v583
        %v600 = vsel %vm568, %v552, %v584
        %v601 = vsel %vm569, %v553, %v585
        %v602 = vsel %vm570, %v554, %v586
        %v603 = vsel %vm571, %v555, %v587
        %vm604 = vcmp.gt.f32.partialorder %v421, 0.0
        %vm605 = vcmp.gt.f32.partialorder %v422, 0.0
        %vm606 = vcmp.gt.f32.partialorder %v423, 0.0
        %vm607 = vcmp.gt.f32.partialorder %v424, 0.0
        %vm608 = vcmp.gt.f32.partialorder %v425, 0.0
        %vm609 = vcmp.gt.f32.partialorder %v426, 0.0
        %vm610 = vcmp.gt.f32.partialorder %v427, 0.0
        %vm611 = vcmp.gt.f32.partialorder %v428, 0.0
        %vm612 = vcmp.gt.f32.partialorder %v429, 0.0
        %vm613 = vcmp.gt.f32.partialorder %v430, 0.0
        %vm614 = vcmp.gt.f32.partialorder %v431, 0.0
        %vm615 = vcmp.gt.f32.partialorder %v432, 0.0
        %vm616 = vcmp.gt.f32.partialorder %v433, 0.0
        %vm617 = vcmp.gt.f32.partialorder %v434, 0.0
        %vm618 = vcmp.gt.f32.partialorder %v435, 0.0
        %vm619 = vcmp.gt.f32.partialorder %v436, 0.0
        %v620 = vsel %vm604, %v588, -1e+30
        %v621 = vsel %vm605, %v589, -1e+30
        %v622 = vsel %vm606, %v590, -1e+30
        %v623 = vsel %vm607, %v591, -1e+30
        %v624 = vsel %vm608, %v592, -1e+30
        %v625 = vsel %vm609, %v593, -1e+30
        %v626 = vsel %vm610, %v594, -1e+30
        %v627 = vsel %vm611, %v595, -1e+30
        %v628 = vsel %vm612, %v596, -1e+30
        %v629 = vsel %vm613, %v597, -1e+30
        %v630 = vsel %vm614, %v598, -1e+30
        %v631 = vsel %vm615, %v599, -1e+30
        %v632 = vsel %vm616, %v600, -1e+30
        %v633 = vsel %vm617, %v601, -1e+30
        %v634 = vsel %vm618, %v602, -1e+30
        %v635 = vsel %vm619, %v603, -1e+30
        %v636 = vld [vmem:[#allocation2] sm:$0xff]
        %v637 = vld [vmem:[#allocation2 + $0x8] sm:$0xff]
        %v638 = vld [vmem:[#allocation2 + $0x10] sm:$0xff]
        %v639 = vld [vmem:[#allocation2 + $0x18] sm:$0xff]
        %v640 = vld [vmem:[#allocation2 + $0x20] sm:$0xff]
        %v641 = vld [vmem:[#allocation2 + $0x28] sm:$0xff]
        %v642 = vld [vmem:[#allocation2 + $0x30] sm:$0xff]
        %v643 = vld [vmem:[#allocation2 + $0x38] sm:$0xff]
        %v644 = vld [vmem:[#allocation2 + $0x40] sm:$0xff]
        %v645 = vld [vmem:[#allocation2 + $0x48] sm:$0xff]
        %v646 = vld [vmem:[#allocation2 + $0x50] sm:$0xff]
        %v647 = vld [vmem:[#allocation2 + $0x58] sm:$0xff]
        %v648 = vld [vmem:[#allocation2 + $0x60] sm:$0xff]
        %v649 = vld [vmem:[#allocation2 + $0x68] sm:$0xff]
        %v650 = vld [vmem:[#allocation2 + $0x70] sm:$0xff]
        %v651 = vld [vmem:[#allocation2 + $0x78] sm:$0xff]
        %652 = vmax.xlane.f32.xlu0 %v620
        %v653 = vpop.xlane.xlu0 %652
        %654 = vmax.xlane.f32.xlu0 %v621
        %v655 = vpop.xlane.xlu0 %654
        %656 = vmax.xlane.f32.xlu0 %v622
        %v657 = vpop.xlane.xlu0 %656
        %658 = vmax.xlane.f32.xlu0 %v623
        %v659 = vpop.xlane.xlu0 %658
        %660 = vmax.xlane.f32.xlu0 %v624
        %v661 = vpop.xlane.xlu0 %660
        %662 = vmax.xlane.f32.xlu0 %v625
        %v663 = vpop.xlane.xlu0 %662
        %664 = vmax.xlane.f32.xlu0 %v626
        %v665 = vpop.xlane.xlu0 %664
        %666 = vmax.xlane.f32.xlu0 %v627
        %v667 = vpop.xlane.xlu0 %666
        %668 = vmax.xlane.f32.xlu0 %v628
        %v669 = vpop.xlane.xlu0 %668
        %670 = vmax.xlane.f32.xlu0 %v629
        %v671 = vpop.xlane.xlu0 %670
        %672 = vmax.xlane.f32.xlu0 %v630
        %v673 = vpop.xlane.xlu0 %672
        %674 = vmax.xlane.f32.xlu0 %v631
        %v675 = vpop.xlane.xlu0 %674
        %676 = vmax.xlane.f32.xlu0 %v632
        %v677 = vpop.xlane.xlu0 %676
        %678 = vmax.xlane.f32.xlu0 %v633
        %v679 = vpop.xlane.xlu0 %678
        %680 = vmax.xlane.f32.xlu0 %v634
        %v681 = vpop.xlane.xlu0 %680
        %682 = vmax.xlane.f32.xlu0 %v635
        %v683 = vpop.xlane.xlu0 %682
        %v684 = vmax.f32 %v636, %v653
        %v685 = vmax.f32 %v637, %v655
        %v686 = vmax.f32 %v638, %v657
        %v687 = vmax.f32 %v639, %v659
        %v688 = vmax.f32 %v640, %v661
        %v689 = vmax.f32 %v641, %v663
        %v690 = vmax.f32 %v642, %v665
        %v691 = vmax.f32 %v643, %v667
        %v692 = vmax.f32 %v644, %v669
        %v693 = vmax.f32 %v645, %v671
        %v694 = vmax.f32 %v646, %v673
        %v695 = vmax.f32 %v647, %v675
        %v696 = vmax.f32 %v648, %v677
        %v697 = vmax.f32 %v649, %v679
        %v698 = vmax.f32 %v650, %v681
        %v699 = vmax.f32 %v651, %v683
        %v700 = vsub.f32 %v636, %v684
        %v701 = vsub.f32 %v637, %v685
        %v702 = vsub.f32 %v638, %v686
        %v703 = vsub.f32 %v639, %v687
        %v704 = vsub.f32 %v640, %v688
        %v705 = vsub.f32 %v641, %v689
        %v706 = vsub.f32 %v642, %v690
        %v707 = vsub.f32 %v643, %v691
        %v708 = vsub.f32 %v644, %v692
        %v709 = vsub.f32 %v645, %v693
        %v710 = vsub.f32 %v646, %v694
        %v711 = vsub.f32 %v647, %v695
        %v712 = vsub.f32 %v648, %v696
        %v713 = vsub.f32 %v649, %v697
        %v714 = vsub.f32 %v650, %v698
        %v715 = vsub.f32 %v651, %v699
        %v716 = vmul.f32 %v700, 1.442695
        %v717 = vpow.pop %v716
        %v718 = vmul.f32 %v701, 1.442695
        %v719 = vpow.pop %v718
        %v720 = vmul.f32 %v702, 1.442695
        %v721 = vpow.pop %v720
        %v722 = vmul.f32 %v703, 1.442695
        %v723 = vpow.pop %v722
        %v724 = vmul.f32 %v704, 1.442695
        %v725 = vpow.pop %v724
        %v726 = vmul.f32 %v705, 1.442695
        %v727 = vpow.pop %v726
        %v728 = vmul.f32 %v706, 1.442695
        %v729 = vpow.pop %v728
        %v730 = vmul.f32 %v707, 1.442695
        %v731 = vpow.pop %v730
        %v732 = vmul.f32 %v708, 1.442695
        %v733 = vpow.pop %v732
        %v734 = vmul.f32 %v709, 1.442695
        %v735 = vpow.pop %v734
        %v736 = vmul.f32 %v710, 1.442695
        %v737 = vpow.pop %v736
        %v738 = vmul.f32 %v711, 1.442695
        %v739 = vpow.pop %v738
        %v740 = vmul.f32 %v712, 1.442695
        %v741 = vpow.pop %v740
        %v742 = vmul.f32 %v713, 1.442695
        %v743 = vpow.pop %v742
        %v744 = vmul.f32 %v714, 1.442695
        %v745 = vpow.pop %v744
        %v746 = vmul.f32 %v715, 1.442695
        %v747 = vpow.pop %v746
        %749 = vset.pattern.permute.xlu0 0
        %750 = vperm.xlu0 %749, %v684
        %v751 = vpop.permute.xlu0 %750
        %754 = vset.pattern.permute.xlu0 0
        %755 = vperm.xlu0 %754, %v685
        %v756 = vpop.permute.xlu0 %755
        %759 = vset.pattern.permute.xlu0 0
        %760 = vperm.xlu0 %759, %v686
        %v761 = vpop.permute.xlu0 %760
        %764 = vset.pattern.permute.xlu0 0
        %765 = vperm.xlu0 %764, %v687
        %v766 = vpop.permute.xlu0 %765
        %769 = vset.pattern.permute.xlu0 0
        %770 = vperm.xlu0 %769, %v688
        %v771 = vpop.permute.xlu0 %770
        %774 = vset.pattern.permute.xlu0 0
        %775 = vperm.xlu0 %774, %v689
        %v776 = vpop.permute.xlu0 %775
        %779 = vset.pattern.permute.xlu0 0
        %780 = vperm.xlu0 %779, %v690
        %v781 = vpop.permute.xlu0 %780
        %784 = vset.pattern.permute.xlu0 0
        %785 = vperm.xlu0 %784, %v691
        %v786 = vpop.permute.xlu0 %785
        %789 = vset.pattern.permute.xlu0 0
        %790 = vperm.xlu0 %789, %v692
        %v791 = vpop.permute.xlu0 %790
        %794 = vset.pattern.permute.xlu0 0
        %795 = vperm.xlu0 %794, %v693
        %v796 = vpop.permute.xlu0 %795
        %799 = vset.pattern.permute.xlu0 0
        %800 = vperm.xlu0 %799, %v694
        %v801 = vpop.permute.xlu0 %800
        %804 = vset.pattern.permute.xlu0 0
        %805 = vperm.xlu0 %804, %v695
        %v806 = vpop.permute.xlu0 %805
        %809 = vset.pattern.permute.xlu0 0
        %810 = vperm.xlu0 %809, %v696
        %v811 = vpop.permute.xlu0 %810
        %814 = vset.pattern.permute.xlu0 0
        %815 = vperm.xlu0 %814, %v697
        %v816 = vpop.permute.xlu0 %815
        %819 = vset.pattern.permute.xlu0 0
        %820 = vperm.xlu0 %819, %v698
        %v821 = vpop.permute.xlu0 %820
        %824 = vset.pattern.permute.xlu0 0
        %825 = vperm.xlu0 %824, %v699
        %v826 = vpop.permute.xlu0 %825
        %v828 = vsub.f32 %v620, %v751
        %v829 = vsub.f32 %v621, %v756
        %v830 = vsub.f32 %v622, %v761
        %v831 = vsub.f32 %v623, %v766
        %v832 = vsub.f32 %v624, %v771
        %v833 = vsub.f32 %v625, %v776
        %v834 = vsub.f32 %v626, %v781
        %v835 = vsub.f32 %v627, %v786
        %v836 = vsub.f32 %v628, %v791
        %v837 = vsub.f32 %v629, %v796
        %v838 = vsub.f32 %v630, %v801
        %v839 = vsub.f32 %v631, %v806
        %v840 = vsub.f32 %v632, %v811
        %v841 = vsub.f32 %v633, %v816
        %v842 = vsub.f32 %v634, %v821
        %v843 = vsub.f32 %v635, %v826
        %v844 = vmul.f32 %v828, 1.442695
        %v845 = vpow.pop %v844
        %v846 = vmul.f32 %v829, 1.442695
        %v847 = vpow.pop %v846
        %v848 = vmul.f32 %v830, 1.442695
        %v849 = vpow.pop %v848
        %v850 = vmul.f32 %v831, 1.442695
        %v851 = vpow.pop %v850
        %v852 = vmul.f32 %v832, 1.442695
        %v853 = vpow.pop %v852
        %v854 = vmul.f32 %v833, 1.442695
        %v855 = vpow.pop %v854
        %v856 = vmul.f32 %v834, 1.442695
        %v857 = vpow.pop %v856
        %v858 = vmul.f32 %v835, 1.442695
        %v859 = vpow.pop %v858
        %v860 = vmul.f32 %v836, 1.442695
        %v861 = vpow.pop %v860
        %v862 = vmul.f32 %v837, 1.442695
        %v863 = vpow.pop %v862
        %v864 = vmul.f32 %v838, 1.442695
        %v865 = vpow.pop %v864
        %v866 = vmul.f32 %v839, 1.442695
        %v867 = vpow.pop %v866
        %v868 = vmul.f32 %v840, 1.442695
        %v869 = vpow.pop %v868
        %v870 = vmul.f32 %v841, 1.442695
        %v871 = vpow.pop %v870
        %v872 = vmul.f32 %v842, 1.442695
        %v873 = vpow.pop %v872
        %v874 = vmul.f32 %v843, 1.442695
        %v875 = vpow.pop %v874
        %v876 = vmul.f32 %v845, %v421
        %v877 = vmul.f32 %v847, %v422
        %v878 = vmul.f32 %v849, %v423
        %v879 = vmul.f32 %v851, %v424
        %v880 = vmul.f32 %v853, %v425
        %v881 = vmul.f32 %v855, %v426
        %v882 = vmul.f32 %v857, %v427
        %v883 = vmul.f32 %v859, %v428
        %v884 = vmul.f32 %v861, %v429
        %v885 = vmul.f32 %v863, %v430
        %v886 = vmul.f32 %v865, %v431
        %v887 = vmul.f32 %v867, %v432
        %v888 = vmul.f32 %v869, %v433
        %v889 = vmul.f32 %v871, %v434
        %v890 = vmul.f32 %v873, %v435
        %v891 = vmul.f32 %v875, %v436
        %v892 = vld [vmem:[#allocation3] sm:$0xff]
        %v893 = vld [vmem:[#allocation3 + $0x8] sm:$0xff]
        %v894 = vld [vmem:[#allocation3 + $0x10] sm:$0xff]
        %v895 = vld [vmem:[#allocation3 + $0x18] sm:$0xff]
        %v896 = vld [vmem:[#allocation3 + $0x20] sm:$0xff]
        %v897 = vld [vmem:[#allocation3 + $0x28] sm:$0xff]
        %v898 = vld [vmem:[#allocation3 + $0x30] sm:$0xff]
        %v899 = vld [vmem:[#allocation3 + $0x38] sm:$0xff]
        %v900 = vld [vmem:[#allocation3 + $0x40] sm:$0xff]
        %v901 = vld [vmem:[#allocation3 + $0x48] sm:$0xff]
        %v902 = vld [vmem:[#allocation3 + $0x50] sm:$0xff]
        %v903 = vld [vmem:[#allocation3 + $0x58] sm:$0xff]
        %v904 = vld [vmem:[#allocation3 + $0x60] sm:$0xff]
        %v905 = vld [vmem:[#allocation3 + $0x68] sm:$0xff]
        %v906 = vld [vmem:[#allocation3 + $0x70] sm:$0xff]
        %v907 = vld [vmem:[#allocation3 + $0x78] sm:$0xff]
        %v908 = vmul.f32 %v717, %v892
        %v909 = vmul.f32 %v719, %v893
        %v910 = vmul.f32 %v721, %v894
        %v911 = vmul.f32 %v723, %v895
        %v912 = vmul.f32 %v725, %v896
        %v913 = vmul.f32 %v727, %v897
        %v914 = vmul.f32 %v729, %v898
        %v915 = vmul.f32 %v731, %v899
        %v916 = vmul.f32 %v733, %v900
        %v917 = vmul.f32 %v735, %v901
        %v918 = vmul.f32 %v737, %v902
        %v919 = vmul.f32 %v739, %v903
        %v920 = vmul.f32 %v741, %v904
        %v921 = vmul.f32 %v743, %v905
        %v922 = vmul.f32 %v745, %v906
        %v923 = vmul.f32 %v747, %v907
        %924 = vadd.xlane.f32.xlu0 %v876
        %v925 = vpop.xlane.xlu0 %924
        %926 = vadd.xlane.f32.xlu0 %v877
        %v927 = vpop.xlane.xlu0 %926
        %928 = vadd.xlane.f32.xlu0 %v878
        %v929 = vpop.xlane.xlu0 %928
        %930 = vadd.xlane.f32.xlu0 %v879
        %v931 = vpop.xlane.xlu0 %930
        %932 = vadd.xlane.f32.xlu0 %v880
        %v933 = vpop.xlane.xlu0 %932
        %934 = vadd.xlane.f32.xlu0 %v881
        %v935 = vpop.xlane.xlu0 %934
        %936 = vadd.xlane.f32.xlu0 %v882
        %v937 = vpop.xlane.xlu0 %936
        %938 = vadd.xlane.f32.xlu0 %v883
        %v939 = vpop.xlane.xlu0 %938
        %940 = vadd.xlane.f32.xlu0 %v884
        %v941 = vpop.xlane.xlu0 %940
        %942 = vadd.xlane.f32.xlu0 %v885
        %v943 = vpop.xlane.xlu0 %942
        %944 = vadd.xlane.f32.xlu0 %v886
        %v945 = vpop.xlane.xlu0 %944
        %946 = vadd.xlane.f32.xlu0 %v887
        %v947 = vpop.xlane.xlu0 %946
        %948 = vadd.xlane.f32.xlu0 %v888
        %v949 = vpop.xlane.xlu0 %948
        %950 = vadd.xlane.f32.xlu0 %v889
        %v951 = vpop.xlane.xlu0 %950
        %952 = vadd.xlane.f32.xlu0 %v890
        %v953 = vpop.xlane.xlu0 %952
        %954 = vadd.xlane.f32.xlu0 %v891
        %v955 = vpop.xlane.xlu0 %954
        %v956 = vadd.f32 %v908, %v925
        %v957 = vadd.f32 %v909, %v927
        %v958 = vadd.f32 %v910, %v929
        %v959 = vadd.f32 %v911, %v931
        %v960 = vadd.f32 %v912, %v933
        %v961 = vadd.f32 %v913, %v935
        %v962 = vadd.f32 %v914, %v937
        %v963 = vadd.f32 %v915, %v939
        %v964 = vadd.f32 %v916, %v941
        %v965 = vadd.f32 %v917, %v943
        %v966 = vadd.f32 %v918, %v945
        %v967 = vadd.f32 %v919, %v947
        %v968 = vadd.f32 %v920, %v949
        %v969 = vadd.f32 %v921, %v951
        %v970 = vadd.f32 %v922, %v953
        %v971 = vadd.f32 %v923, %v955
        %vm972 = vcmask 7168
        %973 = vst.msk [vmem:[#allocation3] sm:$0xff] %vm972, %v956
        %974 = vst.msk [vmem:[#allocation3 + $0x8] sm:$0xff] %vm972, %v957
        %975 = vst.msk [vmem:[#allocation3 + $0x10] sm:$0xff] %vm972, %v958
        %976 = vst.msk [vmem:[#allocation3 + $0x18] sm:$0xff] %vm972, %v959
        %977 = vst.msk [vmem:[#allocation3 + $0x20] sm:$0xff] %vm972, %v960
        %978 = vst.msk [vmem:[#allocation3 + $0x28] sm:$0xff] %vm972, %v961
        %979 = vst.msk [vmem:[#allocation3 + $0x30] sm:$0xff] %vm972, %v962
        %980 = vst.msk [vmem:[#allocation3 + $0x38] sm:$0xff] %vm972, %v963
        %981 = vst.msk [vmem:[#allocation3 + $0x40] sm:$0xff] %vm972, %v964
        %982 = vst.msk [vmem:[#allocation3 + $0x48] sm:$0xff] %vm972, %v965
        %983 = vst.msk [vmem:[#allocation3 + $0x50] sm:$0xff] %vm972, %v966
        %984 = vst.msk [vmem:[#allocation3 + $0x58] sm:$0xff] %vm972, %v967
        %985 = vst.msk [vmem:[#allocation3 + $0x60] sm:$0xff] %vm972, %v968
        %986 = vst.msk [vmem:[#allocation3 + $0x68] sm:$0xff] %vm972, %v969
        %987 = vst.msk [vmem:[#allocation3 + $0x70] sm:$0xff] %vm972, %v970
        %988 = vst.msk [vmem:[#allocation3 + $0x78] sm:$0xff] %vm972, %v971
        %v989 = vld [vmem:[#allocation4] sm:$0xff]
        %v990 = vld [vmem:[#allocation4 + $0x8] sm:$0xff]
        %v991 = vld [vmem:[#allocation4 + $0x10] sm:$0xff]
        %v992 = vld [vmem:[#allocation4 + $0x18] sm:$0xff]
        %v993 = vld [vmem:[#allocation4 + $0x20] sm:$0xff]
        %v994 = vld [vmem:[#allocation4 + $0x28] sm:$0xff]
        %v995 = vld [vmem:[#allocation4 + $0x30] sm:$0xff]
        %v996 = vld [vmem:[#allocation4 + $0x38] sm:$0xff]
        %v997 = vld [vmem:[#allocation4 + $0x40] sm:$0xff]
        %v998 = vld [vmem:[#allocation4 + $0x48] sm:$0xff]
        %v999 = vld [vmem:[#allocation4 + $0x50] sm:$0xff]
        %v1000 = vld [vmem:[#allocation4 + $0x58] sm:$0xff]
        %v1001 = vld [vmem:[#allocation4 + $0x60] sm:$0xff]
        %v1002 = vld [vmem:[#allocation4 + $0x68] sm:$0xff]
        %v1003 = vld [vmem:[#allocation4 + $0x70] sm:$0xff]
        %v1004 = vld [vmem:[#allocation4 + $0x78] sm:$0xff]
        %1006 = vset.pattern.permute.xlu0 0
        %1007 = vperm.xlu0 %1006, %v717
        %v1008 = vpop.permute.xlu0 %1007
        %1011 = vset.pattern.permute.xlu0 0
        %1012 = vperm.xlu0 %1011, %v719
        %v1013 = vpop.permute.xlu0 %1012
        %1016 = vset.pattern.permute.xlu0 0
        %1017 = vperm.xlu0 %1016, %v721
        %v1018 = vpop.permute.xlu0 %1017
        %1021 = vset.pattern.permute.xlu0 0
        %1022 = vperm.xlu0 %1021, %v723
        %v1023 = vpop.permute.xlu0 %1022
        %1026 = vset.pattern.permute.xlu0 0
        %1027 = vperm.xlu0 %1026, %v725
        %v1028 = vpop.permute.xlu0 %1027
        %1031 = vset.pattern.permute.xlu0 0
        %1032 = vperm.xlu0 %1031, %v727
        %v1033 = vpop.permute.xlu0 %1032
        %1036 = vset.pattern.permute.xlu0 0
        %1037 = vperm.xlu0 %1036, %v729
        %v1038 = vpop.permute.xlu0 %1037
        %1041 = vset.pattern.permute.xlu0 0
        %1042 = vperm.xlu0 %1041, %v731
        %v1043 = vpop.permute.xlu0 %1042
        %1046 = vset.pattern.permute.xlu0 0
        %1047 = vperm.xlu0 %1046, %v733
        %v1048 = vpop.permute.xlu0 %1047
        %1051 = vset.pattern.permute.xlu0 0
        %1052 = vperm.xlu0 %1051, %v735
        %v1053 = vpop.permute.xlu0 %1052
        %1056 = vset.pattern.permute.xlu0 0
        %1057 = vperm.xlu0 %1056, %v737
        %v1058 = vpop.permute.xlu0 %1057
        %1061 = vset.pattern.permute.xlu0 0
        %1062 = vperm.xlu0 %1061, %v739
        %v1063 = vpop.permute.xlu0 %1062
        %1066 = vset.pattern.permute.xlu0 0
        %1067 = vperm.xlu0 %1066, %v741
        %v1068 = vpop.permute.xlu0 %1067
        %1071 = vset.pattern.permute.xlu0 0
        %1072 = vperm.xlu0 %1071, %v743
        %v1073 = vpop.permute.xlu0 %1072
        %1076 = vset.pattern.permute.xlu0 0
        %1077 = vperm.xlu0 %1076, %v745
        %v1078 = vpop.permute.xlu0 %1077
        %1081 = vset.pattern.permute.xlu0 0
        %1082 = vperm.xlu0 %1081, %v747
        %v1083 = vpop.permute.xlu0 %1082
        %v1085 = vmul.f32 %v1008, %v989
        %v1086 = vmul.f32 %v1013, %v990
        %v1087 = vmul.f32 %v1018, %v991
        %v1088 = vmul.f32 %v1023, %v992
        %v1089 = vmul.f32 %v1028, %v993
        %v1090 = vmul.f32 %v1033, %v994
        %v1091 = vmul.f32 %v1038, %v995
        %v1092 = vmul.f32 %v1043, %v996
        %v1093 = vmul.f32 %v1048, %v997
        %v1094 = vmul.f32 %v1053, %v998
        %v1095 = vmul.f32 %v1058, %v999
        %v1096 = vmul.f32 %v1063, %v1000
        %v1097 = vmul.f32 %v1068, %v1001
        %v1098 = vmul.f32 %v1073, %v1002
        %v1099 = vmul.f32 %v1078, %v1003
        %v1100 = vmul.f32 %v1083, %v1004
        %v1101 = vld [vmem:[%s340] sm:$0xff]
        %v1102 = vld [vmem:[%s340 + $0x8] sm:$0xff]
        %v1103 = vld [vmem:[%s340 + $0x10] sm:$0xff]
        %v1104 = vld [vmem:[%s340 + $0x18] sm:$0xff]
        %v1105 = vld [vmem:[%s340 + $0x20] sm:$0xff]
        %v1106 = vld [vmem:[%s340 + $0x28] sm:$0xff]
        %v1107 = vld [vmem:[%s340 + $0x30] sm:$0xff]
        %v1108 = vld [vmem:[%s340 + $0x38] sm:$0xff]
        %v1109 = vld [vmem:[%s340 + $0x40] sm:$0xff]
        %v1110 = vld [vmem:[%s340 + $0x48] sm:$0xff]
        %v1111 = vld [vmem:[%s340 + $0x50] sm:$0xff]
        %v1112 = vld [vmem:[%s340 + $0x58] sm:$0xff]
        %v1113 = vld [vmem:[%s340 + $0x60] sm:$0xff]
        %v1114 = vld [vmem:[%s340 + $0x68] sm:$0xff]
        %v1115 = vld [vmem:[%s340 + $0x70] sm:$0xff]
        %v1116 = vld [vmem:[%s340 + $0x78] sm:$0xff]
        %1117 = vmatprep.subr.mxu0 0.0
        %1118 = vmatpush1.msra.mxu0 %v1101
        %1119 = vmatprep.subr.mxu0 0.0
        %1120 = vmatpush1.msra.mxu0 %v1102
        %1121 = vmatprep.subr.mxu0 0.0
        %1122 = vmatpush1.msra.mxu0 %v1103
        %1123 = vmatprep.subr.mxu0 0.0
        %1124 = vmatpush1.msra.mxu0 %v1104
        %1125 = vmatprep.subr.mxu0 0.0
        %1126 = vmatpush1.msra.mxu0 %v1105
        %1127 = vmatprep.subr.mxu0 0.0
        %1128 = vmatpush1.msra.mxu0 %v1106
        %1129 = vmatprep.subr.mxu0 0.0
        %1130 = vmatpush1.msra.mxu0 %v1107
        %1131 = vmatprep.subr.mxu0 0.0
        %1132 = vmatpush1.msra.mxu0 %v1108
        %1133 = vmatprep.subr.mxu0 0.0
        %1134 = vmatpush1.msra.mxu0 %v1109
        %1135 = vmatprep.subr.mxu0 0.0
        %1136 = vmatpush1.msra.mxu0 %v1110
        %1137 = vmatprep.subr.mxu0 0.0
        %1138 = vmatpush1.msra.mxu0 %v1111
        %1139 = vmatprep.subr.mxu0 0.0
        %1140 = vmatpush1.msra.mxu0 %v1112
        %1141 = vmatprep.subr.mxu0 0.0
        %1142 = vmatpush1.msra.mxu0 %v1113
        %1143 = vmatprep.subr.mxu0 0.0
        %1144 = vmatpush1.msra.mxu0 %v1114
        %1145 = vmatprep.subr.mxu0 0.0
        %1146 = vmatpush1.msra.mxu0 %v1115
        %1147 = vmatprep.subr.mxu0 0.0
        %1148 = vmatpush1.msra.mxu0 %v1116
        %1149 = vmatprep.subr.mxu0 0.0
        %1150 = vmatpush1.msra.mxu0 0.0
        %1151 = vmatprep.subr.mxu0 0.0
        %1152 = vmatpush1.msra.mxu0 0.0
        %1153 = vmatprep.subr.mxu0 0.0
        %1154 = vmatpush1.msra.mxu0 0.0
        %1155 = vmatprep.subr.mxu0 0.0
        %1156 = vmatpush1.msra.mxu0 0.0
        %1157 = vmatprep.subr.mxu0 0.0
        %1158 = vmatpush1.msra.mxu0 0.0
        %1159 = vmatprep.subr.mxu0 0.0
        %1160 = vmatpush1.msra.mxu0 0.0
        %1161 = vmatprep.subr.mxu0 0.0
        %1162 = vmatpush1.msra.mxu0 0.0
        %1163 = vmatprep.subr.mxu0 0.0
        %1164 = vmatpush1.msra.mxu0 0.0
        %1165 = vmatprep.subr.mxu0 0.0
        %1166 = vmatpush1.msra.mxu0 0.0
        %1167 = vmatprep.subr.mxu0 0.0
        %1168 = vmatpush1.msra.mxu0 0.0
        %1169 = vmatprep.subr.mxu0 0.0
        %1170 = vmatpush1.msra.mxu0 0.0
        %1171 = vmatprep.subr.mxu0 0.0
        %1172 = vmatpush1.msra.mxu0 0.0
        %1173 = vmatprep.subr.mxu0 0.0
        %1174 = vmatpush1.msra.mxu0 0.0
        %1175 = vmatprep.subr.mxu0 0.0
        %1176 = vmatpush1.msra.mxu0 0.0
        %1177 = vmatprep.subr.mxu0 0.0
        %1178 = vmatpush1.msra.mxu0 0.0
        %1179 = vmatprep.subr.mxu0 0.0
        %1180 = vmatpush1.msra.mxu0 0.0
        %1181 = vmatprep.mubr.f32.mxu0 0.0
        %1182 = vmatmul.mubr.f32.gmra.mrb[0].mxu0 %v876
        %v1183 = vpop.f32.mrb[0].mxu0
        %v1184 = vadd.f32 0.0, %v1183
        %v1185 = vpop.f32.mrb[0].mxu0
        %1186 = vmatprep.mubr.f32.mxu0 0.0
        %1187 = vmatmul.mubr.f32.gmra.mrb[0].mxu0 %v877
        %v1188 = vpop.f32.mrb[0].mxu0
        %v1189 = vadd.f32 0.0, %v1188
        %v1190 = vpop.f32.mrb[0].mxu0
        %1191 = vmatprep.mubr.f32.mxu0 0.0
        %1192 = vmatmul.mubr.f32.gmra.mrb[0].mxu0 %v878
        %v1193 = vpop.f32.mrb[0].mxu0
        %v1194 = vadd.f32 0.0, %v1193
        %v1195 = vpop.f32.mrb[0].mxu0
        %1196 = vmatprep.mubr.f32.mxu0 0.0
        %1197 = vmatmul.mubr.f32.gmra.mrb[0].mxu0 %v879
        %v1198 = vpop.f32.mrb[0].mxu0
        %v1199 = vadd.f32 0.0, %v1198
        %v1200 = vpop.f32.mrb[0].mxu0
        %1201 = vmatprep.mubr.f32.mxu0 0.0
        %1202 = vmatmul.mubr.f32.gmra.mrb[0].mxu0 %v880
        %v1203 = vpop.f32.mrb[0].mxu0
        %v1204 = vadd.f32 0.0, %v1203
        %v1205 = vpop.f32.mrb[0].mxu0
        %1206 = vmatprep.mubr.f32.mxu0 0.0
        %1207 = vmatmul.mubr.f32.gmra.mrb[0].mxu0 %v881
        %v1208 = vpop.f32.mrb[0].mxu0
        %v1209 = vadd.f32 0.0, %v1208
        %v1210 = vpop.f32.mrb[0].mxu0
        %1211 = vmatprep.mubr.f32.mxu0 0.0
        %1212 = vmatmul.mubr.f32.gmra.mrb[0].mxu0 %v882
        %v1213 = vpop.f32.mrb[0].mxu0
        %v1214 = vadd.f32 0.0, %v1213
        %v1215 = vpop.f32.mrb[0].mxu0
        %1216 = vmatprep.mubr.f32.mxu0 0.0
        %1217 = vmatmul.mubr.f32.gmra.mrb[0].mxu0 %v883
        %v1218 = vpop.f32.mrb[0].mxu0
        %v1219 = vadd.f32 0.0, %v1218
        %v1220 = vpop.f32.mrb[0].mxu0
        %1221 = vmatprep.mubr.f32.mxu0 0.0
        %1222 = vmatmul.mubr.f32.gmra.mrb[0].mxu0 %v884
        %v1223 = vpop.f32.mrb[0].mxu0
        %v1224 = vadd.f32 0.0, %v1223
        %v1225 = vpop.f32.mrb[0].mxu0
        %1226 = vmatprep.mubr.f32.mxu0 0.0
        %1227 = vmatmul.mubr.f32.gmra.mrb[0].mxu0 %v885
        %v1228 = vpop.f32.mrb[0].mxu0
        %v1229 = vadd.f32 0.0, %v1228
        %v1230 = vpop.f32.mrb[0].mxu0
        %1231 = vmatprep.mubr.f32.mxu0 0.0
        %1232 = vmatmul.mubr.f32.gmra.mrb[0].mxu0 %v886
        %v1233 = vpop.f32.mrb[0].mxu0
        %v1234 = vadd.f32 0.0, %v1233
        %v1235 = vpop.f32.mrb[0].mxu0
        %1236 = vmatprep.mubr.f32.mxu0 0.0
        %1237 = vmatmul.mubr.f32.gmra.mrb[0].mxu0 %v887
        %v1238 = vpop.f32.mrb[0].mxu0
        %v1239 = vadd.f32 0.0, %v1238
        %v1240 = vpop.f32.mrb[0].mxu0
        %1241 = vmatprep.mubr.f32.mxu0 0.0
        %1242 = vmatmul.mubr.f32.gmra.mrb[0].mxu0 %v888
        %v1243 = vpop.f32.mrb[0].mxu0
        %v1244 = vadd.f32 0.0, %v1243
        %v1245 = vpop.f32.mrb[0].mxu0
        %1246 = vmatprep.mubr.f32.mxu0 0.0
        %1247 = vmatmul.mubr.f32.gmra.mrb[0].mxu0 %v889
        %v1248 = vpop.f32.mrb[0].mxu0
        %v1249 = vadd.f32 0.0, %v1248
        %v1250 = vpop.f32.mrb[0].mxu0
        %1251 = vmatprep.mubr.f32.mxu0 0.0
        %1252 = vmatmul.mubr.f32.gmra.mrb[0].mxu0 %v890
        %v1253 = vpop.f32.mrb[0].mxu0
        %v1254 = vadd.f32 0.0, %v1253
        %v1255 = vpop.f32.mrb[0].mxu0
        %1256 = vmatprep.mubr.f32.mxu0 0.0
        %1257 = vmatmul.mubr.f32.gmra.mrb[0].mxu0 %v891
        %v1258 = vpop.f32.mrb[0].mxu0
        %v1259 = vadd.f32 0.0, %v1258
        %v1260 = vpop.f32.mrb[0].mxu0
        %1261 = vdwg.mxu0
        %v1262 = vadd.f32 %v1085, %v1184
        %v1263 = vadd.f32 %v1086, %v1189
        %v1264 = vadd.f32 %v1087, %v1194
        %v1265 = vadd.f32 %v1088, %v1199
        %v1266 = vadd.f32 %v1089, %v1204
        %v1267 = vadd.f32 %v1090, %v1209
        %v1268 = vadd.f32 %v1091, %v1214
        %v1269 = vadd.f32 %v1092, %v1219
        %v1270 = vadd.f32 %v1093, %v1224
        %v1271 = vadd.f32 %v1094, %v1229
        %v1272 = vadd.f32 %v1095, %v1234
        %v1273 = vadd.f32 %v1096, %v1239
        %v1274 = vadd.f32 %v1097, %v1244
        %v1275 = vadd.f32 %v1098, %v1249
        %v1276 = vadd.f32 %v1099, %v1254
        %v1277 = vadd.f32 %v1100, %v1259
        %1278 = vst [vmem:[#allocation4] sm:$0xff] %v1262
        %1279 = vst [vmem:[#allocation4 + $0x8] sm:$0xff] %v1263
        %1280 = vst [vmem:[#allocation4 + $0x10] sm:$0xff] %v1264
        %1281 = vst [vmem:[#allocation4 + $0x18] sm:$0xff] %v1265
        %1282 = vst [vmem:[#allocation4 + $0x20] sm:$0xff] %v1266
        %1283 = vst [vmem:[#allocation4 + $0x28] sm:$0xff] %v1267
        %1284 = vst [vmem:[#allocation4 + $0x30] sm:$0xff] %v1268
        %1285 = vst [vmem:[#allocation4 + $0x38] sm:$0xff] %v1269
        %1286 = vst [vmem:[#allocation4 + $0x40] sm:$0xff] %v1270
        %1287 = vst [vmem:[#allocation4 + $0x48] sm:$0xff] %v1271
        %1288 = vst [vmem:[#allocation4 + $0x50] sm:$0xff] %v1272
        %1289 = vst [vmem:[#allocation4 + $0x58] sm:$0xff] %v1273
        %1290 = vst [vmem:[#allocation4 + $0x60] sm:$0xff] %v1274
        %1291 = vst [vmem:[#allocation4 + $0x68] sm:$0xff] %v1275
        %1292 = vst [vmem:[#allocation4 + $0x70] sm:$0xff] %v1276
        %1293 = vst [vmem:[#allocation4 + $0x78] sm:$0xff] %v1277
        %1294 = vst.msk [vmem:[#allocation2] sm:$0xff] %vm972, %v684
        %1295 = vst.msk [vmem:[#allocation2 + $0x8] sm:$0xff] %vm972, %v685
        %1296 = vst.msk [vmem:[#allocation2 + $0x10] sm:$0xff] %vm972, %v686
        %1297 = vst.msk [vmem:[#allocation2 + $0x18] sm:$0xff] %vm972, %v687
        %1298 = vst.msk [vmem:[#allocation2 + $0x20] sm:$0xff] %vm972, %v688
        %1299 = vst.msk [vmem:[#allocation2 + $0x28] sm:$0xff] %vm972, %v689
        %1300 = vst.msk [vmem:[#allocation2 + $0x30] sm:$0xff] %vm972, %v690
        %1301 = vst.msk [vmem:[#allocation2 + $0x38] sm:$0xff] %vm972, %v691
        %1302 = vst.msk [vmem:[#allocation2 + $0x40] sm:$0xff] %vm972, %v692
        %1303 = vst.msk [vmem:[#allocation2 + $0x48] sm:$0xff] %vm972, %v693
        %1304 = vst.msk [vmem:[#allocation2 + $0x50] sm:$0xff] %vm972, %v694
        %1305 = vst.msk [vmem:[#allocation2 + $0x58] sm:$0xff] %vm972, %v695
        %1306 = vst.msk [vmem:[#allocation2 + $0x60] sm:$0xff] %vm972, %v696
        %1307 = vst.msk [vmem:[#allocation2 + $0x68] sm:$0xff] %vm972, %v697
        %1308 = vst.msk [vmem:[#allocation2 + $0x70] sm:$0xff] %vm972, %v698
        %1309 = vst.msk [vmem:[#allocation2 + $0x78] sm:$0xff] %vm972, %v699
        %p1310 = scmp.eq.s32.totalorder %s21, 2
        // Predicated region
        $region83: #{gat_forward.5} parent=73 // pred_check
          %p1311 = pneg %p1310
        $region84: #{gat_forward.5} parent=73 // pred_check_branch
          %1313 = sbr.rel (%p1311) target = $region86
        $region85: #{gat_forward.5} parent=73 // pred_region
          %v1314 = vld [vmem:[#allocation4] sm:$0xff]
          %v1315 = vld [vmem:[#allocation4 + $0x8] sm:$0xff]
          %v1316 = vld [vmem:[#allocation4 + $0x10] sm:$0xff]
          %v1317 = vld [vmem:[#allocation4 + $0x18] sm:$0xff]
          %v1318 = vld [vmem:[#allocation4 + $0x20] sm:$0xff]
          %v1319 = vld [vmem:[#allocation4 + $0x28] sm:$0xff]
          %v1320 = vld [vmem:[#allocation4 + $0x30] sm:$0xff]
          %v1321 = vld [vmem:[#allocation4 + $0x38] sm:$0xff]
          %v1322 = vld [vmem:[#allocation4 + $0x40] sm:$0xff]
          %v1323 = vld [vmem:[#allocation4 + $0x48] sm:$0xff]
          %v1324 = vld [vmem:[#allocation4 + $0x50] sm:$0xff]
          %v1325 = vld [vmem:[#allocation4 + $0x58] sm:$0xff]
          %v1326 = vld [vmem:[#allocation4 + $0x60] sm:$0xff]
          %v1327 = vld [vmem:[#allocation4 + $0x68] sm:$0xff]
          %v1328 = vld [vmem:[#allocation4 + $0x70] sm:$0xff]
          %v1329 = vld [vmem:[#allocation4 + $0x78] sm:$0xff]
          %v1330 = vld [vmem:[#allocation3] sm:$0xff]
          %v1331 = vld [vmem:[#allocation3 + $0x8] sm:$0xff]
          %v1332 = vld [vmem:[#allocation3 + $0x10] sm:$0xff]
          %v1333 = vld [vmem:[#allocation3 + $0x18] sm:$0xff]
          %v1334 = vld [vmem:[#allocation3 + $0x20] sm:$0xff]
          %v1335 = vld [vmem:[#allocation3 + $0x28] sm:$0xff]
          %v1336 = vld [vmem:[#allocation3 + $0x30] sm:$0xff]
          %v1337 = vld [vmem:[#allocation3 + $0x38] sm:$0xff]
          %v1338 = vld [vmem:[#allocation3 + $0x40] sm:$0xff]
          %v1339 = vld [vmem:[#allocation3 + $0x48] sm:$0xff]
          %v1340 = vld [vmem:[#allocation3 + $0x50] sm:$0xff]
          %v1341 = vld [vmem:[#allocation3 + $0x58] sm:$0xff]
          %v1342 = vld [vmem:[#allocation3 + $0x60] sm:$0xff]
          %v1343 = vld [vmem:[#allocation3 + $0x68] sm:$0xff]
          %v1344 = vld [vmem:[#allocation3 + $0x70] sm:$0xff]
          %v1345 = vld [vmem:[#allocation3 + $0x78] sm:$0xff]
          %v1346 = vrcp.pop %v1330
          %v1347 = vrcp.pop %v1331
          %v1348 = vrcp.pop %v1332
          %v1349 = vrcp.pop %v1333
          %v1350 = vrcp.pop %v1334
          %v1351 = vrcp.pop %v1335
          %v1352 = vrcp.pop %v1336
          %v1353 = vrcp.pop %v1337
          %v1354 = vrcp.pop %v1338
          %v1355 = vrcp.pop %v1339
          %v1356 = vrcp.pop %v1340
          %v1357 = vrcp.pop %v1341
          %v1358 = vrcp.pop %v1342
          %v1359 = vrcp.pop %v1343
          %v1360 = vrcp.pop %v1344
          %v1361 = vrcp.pop %v1345
          %1363 = vset.pattern.permute.xlu0 0
          %1364 = vperm.xlu0 %1363, %v1346
          %v1365 = vpop.permute.xlu0 %1364
          %1368 = vset.pattern.permute.xlu0 0
          %1369 = vperm.xlu0 %1368, %v1347
          %v1370 = vpop.permute.xlu0 %1369
          %1373 = vset.pattern.permute.xlu0 0
          %1374 = vperm.xlu0 %1373, %v1348
          %v1375 = vpop.permute.xlu0 %1374
          %1378 = vset.pattern.permute.xlu0 0
          %1379 = vperm.xlu0 %1378, %v1349
          %v1380 = vpop.permute.xlu0 %1379
          %1383 = vset.pattern.permute.xlu0 0
          %1384 = vperm.xlu0 %1383, %v1350
          %v1385 = vpop.permute.xlu0 %1384
          %1388 = vset.pattern.permute.xlu0 0
          %1389 = vperm.xlu0 %1388, %v1351
          %v1390 = vpop.permute.xlu0 %1389
          %1393 = vset.pattern.permute.xlu0 0
          %1394 = vperm.xlu0 %1393, %v1352
          %v1395 = vpop.permute.xlu0 %1394
          %1398 = vset.pattern.permute.xlu0 0
          %1399 = vperm.xlu0 %1398, %v1353
          %v1400 = vpop.permute.xlu0 %1399
          %1403 = vset.pattern.permute.xlu0 0
          %1404 = vperm.xlu0 %1403, %v1354
          %v1405 = vpop.permute.xlu0 %1404
          %1408 = vset.pattern.permute.xlu0 0
          %1409 = vperm.xlu0 %1408, %v1355
          %v1410 = vpop.permute.xlu0 %1409
          %1413 = vset.pattern.permute.xlu0 0
          %1414 = vperm.xlu0 %1413, %v1356
          %v1415 = vpop.permute.xlu0 %1414
          %1418 = vset.pattern.permute.xlu0 0
          %1419 = vperm.xlu0 %1418, %v1357
          %v1420 = vpop.permute.xlu0 %1419
          %1423 = vset.pattern.permute.xlu0 0
          %1424 = vperm.xlu0 %1423, %v1358
          %v1425 = vpop.permute.xlu0 %1424
          %1428 = vset.pattern.permute.xlu0 0
          %1429 = vperm.xlu0 %1428, %v1359
          %v1430 = vpop.permute.xlu0 %1429
          %1433 = vset.pattern.permute.xlu0 0
          %1434 = vperm.xlu0 %1433, %v1360
          %v1435 = vpop.permute.xlu0 %1434
          %1438 = vset.pattern.permute.xlu0 0
          %1439 = vperm.xlu0 %1438, %v1361
          %v1440 = vpop.permute.xlu0 %1439
          %v1442 = vmul.f32 %v1314, %v1365
          %v1443 = vmul.f32 %v1315, %v1370
          %v1444 = vmul.f32 %v1316, %v1375
          %v1445 = vmul.f32 %v1317, %v1380
          %v1446 = vmul.f32 %v1318, %v1385
          %v1447 = vmul.f32 %v1319, %v1390
          %v1448 = vmul.f32 %v1320, %v1395
          %v1449 = vmul.f32 %v1321, %v1400
          %v1450 = vmul.f32 %v1322, %v1405
          %v1451 = vmul.f32 %v1323, %v1410
          %v1452 = vmul.f32 %v1324, %v1415
          %v1453 = vmul.f32 %v1325, %v1420
          %v1454 = vmul.f32 %v1326, %v1425
          %v1455 = vmul.f32 %v1327, %v1430
          %v1456 = vmul.f32 %v1328, %v1435
          %v1457 = vmul.f32 %v1329, %v1440
          %v1458 = vld [vmem:[%s4] sm:$0x1]
          %v1460 = vlaneseq
          %v1461 = vshrl.u32 %v1460, 7
          %v1462 = vsub.s32 0, %v1461
          %v1463 = vrot.slane %v1458, %v1462
          %v1465 = vadd.f32 %v1442, %v1463
          %v1466 = vadd.f32 %v1443, %v1463
          %v1467 = vadd.f32 %v1444, %v1463
          %v1468 = vadd.f32 %v1445, %v1463
          %v1469 = vadd.f32 %v1446, %v1463
          %v1470 = vadd.f32 %v1447, %v1463
          %v1471 = vadd.f32 %v1448, %v1463
          %v1472 = vadd.f32 %v1449, %v1463
          %v1473 = vadd.f32 %v1450, %v1463
          %v1474 = vadd.f32 %v1451, %v1463
          %v1475 = vadd.f32 %v1452, %v1463
          %v1476 = vadd.f32 %v1453, %v1463
          %v1477 = vadd.f32 %v1454, %v1463
          %v1478 = vadd.f32 %v1455, %v1463
          %v1479 = vadd.f32 %v1456, %v1463
          %v1480 = vadd.f32 %v1457, %v1463
          %v1481 = vmax.f32 %v1465, 0.0
          %v1482 = vmax.f32 %v1466, 0.0
          %v1483 = vmax.f32 %v1467, 0.0
          %v1484 = vmax.f32 %v1468, 0.0
          %v1485 = vmax.f32 %v1469, 0.0
          %v1486 = vmax.f32 %v1470, 0.0
          %v1487 = vmax.f32 %v1471, 0.0
          %v1488 = vmax.f32 %v1472, 0.0
          %v1489 = vmax.f32 %v1473, 0.0
          %v1490 = vmax.f32 %v1474, 0.0
          %v1491 = vmax.f32 %v1475, 0.0
          %v1492 = vmax.f32 %v1476, 0.0
          %v1493 = vmax.f32 %v1477, 0.0
          %v1494 = vmax.f32 %v1478, 0.0
          %v1495 = vmax.f32 %v1479, 0.0
          %v1496 = vmax.f32 %v1480, 0.0
          %1497 = vst [vmem:[%s346] sm:$0xff] %v1481
          %1498 = vst [vmem:[%s346 + $0x8] sm:$0xff] %v1482
          %1499 = vst [vmem:[%s346 + $0x10] sm:$0xff] %v1483
          %1500 = vst [vmem:[%s346 + $0x18] sm:$0xff] %v1484
          %1501 = vst [vmem:[%s346 + $0x20] sm:$0xff] %v1485
          %1502 = vst [vmem:[%s346 + $0x28] sm:$0xff] %v1486
          %1503 = vst [vmem:[%s346 + $0x30] sm:$0xff] %v1487
          %1504 = vst [vmem:[%s346 + $0x38] sm:$0xff] %v1488
          %1505 = vst [vmem:[%s346 + $0x40] sm:$0xff] %v1489
          %1506 = vst [vmem:[%s346 + $0x48] sm:$0xff] %v1490
          %1507 = vst [vmem:[%s346 + $0x50] sm:$0xff] %v1491
          %1508 = vst [vmem:[%s346 + $0x58] sm:$0xff] %v1492
          %1509 = vst [vmem:[%s346 + $0x60] sm:$0xff] %v1493
          %1510 = vst [vmem:[%s346 + $0x68] sm:$0xff] %v1494
          %1511 = vst [vmem:[%s346 + $0x70] sm:$0xff] %v1495
          %1512 = vst [vmem:[%s346 + $0x78] sm:$0xff] %v1496
        $region86: #{gat_forward.5} parent=73 // pred_fallthru
          _
        %s1513 = smul.u32 16, %s20
        %p1514 = scmp.lt.s32.totalorder %s1513, 47
        %s1515 = scalar_select %p1514, %s1513, 47
        %s1516 = smul.addr %s1515, 8
        %s1517 = scalar_lea.vmem %s5, %s1516
        // Predicated region
        $region87: #{gat_forward.5} parent=73 // pred_check
          %p1518 = pneg %p173
        $region88: #{gat_forward.5} parent=73 // pred_check_branch
          %1520 = sbr.rel (%p1518) target = $region90
        $region89: #{gat_forward.5} parent=73 // pred_region
          %s1521 = smul.u32 16, %s20
        $region90: #{gat_forward.5} parent=73 // pred_fallthru
          _
      $region74: #{gat_forward.5} parent=5 // pred_fallthru
        _
      %p1522 = scmp.le.s32.totalorder 2, %s11
      // Predicated region
      $region91: #{gat_forward.5} parent=5 // pred_check
        %p1523 = pneg %p1522
      $region92: #{gat_forward.5} parent=5 // pred_check_branch
        %1525 = sbr.rel (%p1523) target = $region94
      $region93: #{gat_forward.5} parent=5 // pred_region
        %s1526 = ssub.s32 %s11, 2
        // Predicated region
        $region95: #{gat_forward.5} parent=93 // pred_check
          %p1527 = pneg %p179
        $region96: #{gat_forward.5} parent=93 // pred_check_branch
          %1529 = sbr.rel (%p1527) target = $region98
        $region97: #{gat_forward.5} parent=93 // pred_region
          %s1530 = smul.u32 16, %s22
          %p1531 = scmp.lt.s32.totalorder %s1530, 47
          %s1532 = scalar_select %p1531, %s1530, 47
          %s1533 = smul.addr %s1532, 8
          %s1534 = scalar_lea.vmem %s5, %s1533
        $region98: #{gat_forward.5} parent=93 // pred_fallthru
          _
      $region94: #{gat_forward.5} parent=5 // pred_fallthru
        _
    $region6: #{gat_forward.5} parent=1 // loop_footer
      %s15 = sadd.s32 1, %s11
    $region7: #{gat_forward.5} parent=1 // loop_footer_branch
      %10 = sbr.rel target = $region3
    $region8: #{gat_forward.5} parent=1 // loop_exit
      _

// kernel: gat_forward.7
$region0: #{gat_forward.7}
  #allocation0 [shape = 'u32[]', space=smem, size = 0x4, offset = 0x4, fixed_abs, tag = 'smem constant byte address 0x4 - core index']
  #allocation1 [shape = 'u32[144,128]{1,0:T(1,128)}', space=vmem, size = 0x12000, scoped, tag = 'internal scratch']
  #allocation2 [shape = 'f32[128,1]{1,0:T(8,128)}', space=vmem, size = 0x10000, scoped, tag = 'scratch operand']
  #allocation3 [shape = 'f32[128,1]{1,0:T(8,128)}', space=vmem, size = 0x10000, scoped, tag = 'scratch operand']
  #allocation4 [shape = 'f32[128,128]{1,0:T(8,128)}', space=vmem, size = 0x10000, scoped, tag = 'scratch operand']
  %s0 = inlined_call_operand.vmem [shape: f32[384,1], index: 0, kind: input, shape index: {}]
  %s1 = inlined_call_operand.vmem [shape: f32[1,384], index: 1, kind: input, shape index: {}]
  %s2 = inlined_call_operand.vmem [shape: s8[384,384], index: 2, kind: input, shape index: {}]
  %s3 = inlined_call_operand.vmem [shape: f32[384,128], index: 3, kind: input, shape index: {}]
  %s4 = inlined_call_operand.vmem [shape: f32[1,128], index: 4, kind: input, shape index: {}]
  %s5 = inlined_call_operand.vmem [shape: f32[384,128], index: 5, kind: output, shape index: {}]
  %s6 = sld [smem:[#allocation0]]
  $region99: #{gat_forward.7} parent=0
    _
  %s8 = ssub.s32 1, %s6
  %s9 = scalar_select 0, %s8, %s6
  $region1: #{gat_forward.7} parent=0
    #allocation5 [shape = 'u8[32768]{0}', space=vmem, size = 0x8000, scoped, tag = 'input window, operand 2']
    loop: start=0, step=1, limit=11
    $region2: #{gat_forward.7} parent=1 // loop_pre_header
      _
    $region3: #{gat_forward.7} parent=1 // loop_header
      %s11 = sphi 0, %s15
      %p12 = scmp.ge.s32.totalorder %s11, 11
      %s18 = sphi 0, %s30
      %s19 = sphi 0, %s26
      %s20 = sphi 0, %s18
      %s21 = sphi 0, %s19
      %s22 = sphi 0, %s20
      %s23 = sphi 0, %s21
      %s33 = sphi 0, %s35
      %s36 = sphi 0, %s33
      %s37 = sphi 0, %s36
      %s53 = sphi 0, %s37
      %s59 = sphi 0, %s61
      %s62 = sphi 0, %s59
      %s63 = sphi 0, %s62
      %s79 = sphi 0, %s63
      %s87 = sphi 0, %s89
      %s90 = sphi 0, %s87
      %s91 = sphi 0, %s90
      %s107 = sphi 0, %s91
      %s113 = sphi 0, %s115
      %s116 = sphi 0, %s113
      %s117 = sphi 0, %s116
      %s133 = sphi 0, %s117
      %s137 = sphi 0, %s137
      %s139 = sphi 0, %s137
      %s140 = sphi 0, %s139
      %s154 = sphi 0, %s140
      %s160 = sphi 0, %s162
      %s163 = sphi 0, %s160
      %s164 = sphi 0, %s163
      %s180 = sphi 0, %s164
    $region4: #{gat_forward.7} parent=1 // loop_header_branch
      %14 = sbr.rel (%p12) target = $region8
    $region5: #{gat_forward.7} parent=1 // loop_body
      %s16 = ssub.s32 %s11, 1
      %s17 = ssub.s32 %s11, 2
      %s24 = sadd.s32 1, %s19
      %p25 = scmp.ge.s32.totalorder %s24, 3
      %s26 = scalar_select %p25, 0, %s24
      %s27 = sadd.s32 1, %s18
      %s28 = scalar_select %p25, %s27, %s18
      %p29 = scmp.ge.s32.totalorder %s28, 3
      %s30 = scalar_select %p29, 0, %s28
      %s31 = ssub.s32 %s18, %s30
      %p32 = scmp.eq.s32.totalorder %s31, 0
      %s34 = sadd.s32 %s33, 1
      %s35 = scalar_select %p32, %s33, %s34
      %p38 = pneg %p32
      %p39 = scmp.eq.s32.totalorder %s11, 8
      %p40 = por %p38, %p39
      %p41 = scmp.ne.s32.totalorder %s33, %s36
      %p42 = scmp.eq.s32.totalorder %s11, 0
      %p43 = por %p41, %p42
      %p44 = scmp.ne.s32.totalorder %s33, %s36
      %p45 = scmp.eq.s32.totalorder %s16, 8
      %p46 = por %p44, %p45
      %p47 = scmp.ne.s32.totalorder %s36, %s37
      %p48 = scmp.eq.s32.totalorder %s16, 0
      %p49 = por %p47, %p48
      %p50 = scmp.ne.s32.totalorder %s36, %s37
      %p51 = scmp.eq.s32.totalorder %s17, 8
      %p52 = por %p50, %p51
      %p54 = scmp.ne.s32.totalorder %s37, %s53
      %p55 = scmp.eq.s32.totalorder %s17, 0
      %p56 = por %p54, %p55
      %s57 = ssub.s32 %s19, %s26
      %p58 = scmp.eq.s32.totalorder %s57, 0
      %s60 = sadd.s32 %s59, 1
      %s61 = scalar_select %p58, %s59, %s60
      %p64 = pneg %p58
      %p65 = scmp.eq.s32.totalorder %s11, 8
      %p66 = por %p64, %p65
      %p67 = scmp.ne.s32.totalorder %s59, %s62
      %p68 = scmp.eq.s32.totalorder %s11, 0
      %p69 = por %p67, %p68
      %p70 = scmp.ne.s32.totalorder %s59, %s62
      %p71 = scmp.eq.s32.totalorder %s16, 8
      %p72 = por %p70, %p71
      %p73 = scmp.ne.s32.totalorder %s62, %s63
      %p74 = scmp.eq.s32.totalorder %s16, 0
      %p75 = por %p73, %p74
      %p76 = scmp.ne.s32.totalorder %s62, %s63
      %p77 = scmp.eq.s32.totalorder %s17, 8
      %p78 = por %p76, %p77
      %p80 = scmp.ne.s32.totalorder %s63, %s79
      %p81 = scmp.eq.s32.totalorder %s17, 0
      %p82 = por %p80, %p81
      %s83 = ssub.s32 %s18, %s30
      %s84 = ssub.s32 %s19, %s26
      %s85 = sor.u32 %s83, %s84
      %p86 = scmp.eq.s32.totalorder %s85, 0
      %s88 = sadd.s32 %s87, 1
      %s89 = scalar_select %p86, %s87, %s88
      %p92 = pneg %p86
      %p93 = scmp.eq.s32.totalorder %s11, 8
      %p94 = por %p92, %p93
      %p95 = scmp.ne.s32.totalorder %s87, %s90
      %p96 = scmp.eq.s32.totalorder %s11, 0
      %p97 = por %p95, %p96
      %p98 = scmp.ne.s32.totalorder %s87, %s90
      %p99 = scmp.eq.s32.totalorder %s16, 8
      %p100 = por %p98, %p99
      %p101 = scmp.ne.s32.totalorder %s90, %s91
      %p102 = scmp.eq.s32.totalorder %s16, 0
      %p103 = por %p101, %p102
      %p104 = scmp.ne.s32.totalorder %s90, %s91
      %p105 = scmp.eq.s32.totalorder %s17, 8
      %p106 = por %p104, %p105
      %p108 = scmp.ne.s32.totalorder %s91, %s107
      %p109 = scmp.eq.s32.totalorder %s17, 0
      %p110 = por %p108, %p109
      %s111 = ssub.s32 %s19, %s26
      %p112 = scmp.eq.s32.totalorder %s111, 0
      %s114 = sadd.s32 %s113, 1
      %s115 = scalar_select %p112, %s113, %s114
      %p118 = pneg %p112
      %p119 = scmp.eq.s32.totalorder %s11, 8
      %p120 = por %p118, %p119
      %p121 = scmp.ne.s32.totalorder %s113, %s116
      %p122 = scmp.eq.s32.totalorder %s11, 0
      %p123 = por %p121, %p122
      %p124 = scmp.ne.s32.totalorder %s113, %s116
      %p125 = scmp.eq.s32.totalorder %s16, 8
      %p126 = por %p124, %p125
      %p127 = scmp.ne.s32.totalorder %s116, %s117
      %p128 = scmp.eq.s32.totalorder %s16, 0
      %p129 = por %p127, %p128
      %p130 = scmp.ne.s32.totalorder %s116, %s117
      %p131 = scmp.eq.s32.totalorder %s17, 8
      %p132 = por %p130, %p131
      %p134 = scmp.ne.s32.totalorder %s117, %s133
      %p135 = scmp.eq.s32.totalorder %s17, 0
      %p136 = por %p134, %p135
      %s138 = sadd.s32 %s137, 1
      %p141 = scmp.eq.s32.totalorder %s11, 8
      %p142 = scmp.ne.s32.totalorder %s137, %s139
      %p143 = scmp.eq.s32.totalorder %s11, 0
      %p144 = por %p142, %p143
      %p145 = scmp.ne.s32.totalorder %s137, %s139
      %p146 = scmp.eq.s32.totalorder %s16, 8
      %p147 = por %p145, %p146
      %p148 = scmp.ne.s32.totalorder %s139, %s140
      %p149 = scmp.eq.s32.totalorder %s16, 0
      %p150 = por %p148, %p149
      %p151 = scmp.ne.s32.totalorder %s139, %s140
      %p152 = scmp.eq.s32.totalorder %s17, 8
      %p153 = por %p151, %p152
      %p155 = scmp.ne.s32.totalorder %s140, %s154
      %p156 = scmp.eq.s32.totalorder %s17, 0
      %p157 = por %p155, %p156
      %s158 = ssub.s32 %s18, %s30
      %p159 = scmp.eq.s32.totalorder %s158, 0
      %s161 = sadd.s32 %s160, 1
      %s162 = scalar_select %p159, %s160, %s161
      %p165 = pneg %p159
      %p166 = scmp.eq.s32.totalorder %s11, 8
      %p167 = por %p165, %p166
      %p168 = scmp.ne.s32.totalorder %s160, %s163
      %p169 = scmp.eq.s32.totalorder %s11, 0
      %p170 = por %p168, %p169
      %p171 = scmp.ne.s32.totalorder %s160, %s163
      %p172 = scmp.eq.s32.totalorder %s16, 8
      %p173 = por %p171, %p172
      %p174 = scmp.ne.s32.totalorder %s163, %s164
      %p175 = scmp.eq.s32.totalorder %s16, 0
      %p176 = por %p174, %p175
      %p177 = scmp.ne.s32.totalorder %s163, %s164
      %p178 = scmp.eq.s32.totalorder %s17, 8
      %p179 = por %p177, %p178
      %p181 = scmp.ne.s32.totalorder %s164, %s180
      %p182 = scmp.eq.s32.totalorder %s17, 0
      %p183 = por %p181, %p182
      %p184 = scmp.le.s32.totalorder 1, %s11
      %p185 = scmp.lt.s32.totalorder %s11, 10
      %p186 = pnand %p184, %p185
      %p187 = pneg %p186
      // Predicated region
      $region9: #{gat_forward.7} parent=5 // pred_check
        _
      $region10: #{gat_forward.7} parent=5 // pred_check_branch
        %189 = sbr.rel (%p186) target = $region12
      $region11: #{gat_forward.7} parent=5 // pred_region
        %s190 = ssub.s32 %s11, 1
        // Predicated region
        $region13: #{gat_forward.7} parent=11 // pred_check
          %p191 = pneg %p150
        $region14: #{gat_forward.7} parent=11 // pred_check_branch
          %193 = sbr.rel (%p191) target = $region16
        $region15: #{gat_forward.7} parent=11 // pred_region
          _
        $region16: #{gat_forward.7} parent=11 // pred_fallthru
          _
      $region12: #{gat_forward.7} parent=5 // pred_fallthru
        _
      %p194 = scmp.lt.s32.totalorder %s11, 9
      // Predicated region
      $region17: #{gat_forward.7} parent=5 // pred_check
        %p195 = pneg %p194
      $region18: #{gat_forward.7} parent=5 // pred_check_branch
        %197 = sbr.rel (%p195) target = $region20
      $region19: #{gat_forward.7} parent=5 // pred_region
        // Predicated region
        $region21: #{gat_forward.7} parent=19 // pred_check
          %p198 = pneg %p43
        $region22: #{gat_forward.7} parent=19 // pred_check_branch
          %200 = sbr.rel (%p198) target = $region24
        $region23: #{gat_forward.7} parent=19 // pred_region
          %s201 = smul.u32 16, %s18
          %p202 = scmp.lt.s32.totalorder %s201, 47
          %s203 = scalar_select %p202, %s201, 47
          %s204 = smul.addr %s203, 8
          %s205 = scalar_lea.vmem %s0, %s204
          %s206 = smul.u32 16, %s18
        $region24: #{gat_forward.7} parent=19 // pred_fallthru
          _
        // Predicated region
        $region25: #{gat_forward.7} parent=19 // pred_check
          %p207 = pneg %p69
        $region26: #{gat_forward.7} parent=19 // pred_check_branch
          %209 = sbr.rel (%p207) target = $region28
        $region27: #{gat_forward.7} parent=19 // pred_region
          %p210 = scmp.lt.s32.totalorder %s19, 2
          %s211 = scalar_select %p210, %s19, 2
          %s212 = scalar_lea.vmem %s1, %s211
        $region28: #{gat_forward.7} parent=19 // pred_fallthru
          _
        // Predicated region
        $region29: #{gat_forward.7} parent=19 // pred_check
          %p213 = pneg %p97
        $region30: #{gat_forward.7} parent=19 // pred_check_branch
          %215 = sbr.rel (%p213) target = $region32
        $region31: #{gat_forward.7} parent=19 // pred_region
          %s216 = sand.u32 %s87, 1
          %s217 = sand.u32 %s87, 1
          %s218 = smul.addr %s217, 32
          %s219 = scalar_lea.vmem [#allocation5], %s218
          %s220 = smul.u32 4, %s18
          %s221 = smul.addr %s220, 3
          %s222 = sadd.s32 %s19, %s221
          %s223 = smul.addr %s222, 8
          %s224 = scalar_lea.vmem %s2, %s223
          // Predicated region
          $region33: #{gat_forward.7} parent=31 // pred_check
            _
          $region34: #{gat_forward.7} parent=31 // pred_check_branch
            %226 = sbr.rel (0) target = $region36
          $region35: #{gat_forward.7} parent=31 // pred_region
            // Predicated region
            $region37: #{gat_forward.7} parent=35 // pred_check
              _
            $region38: #{gat_forward.7} parent=35 // pred_check_branch
              %228 = sbr.rel (0) target = $region40
            $region39: #{gat_forward.7} parent=35 // pred_region
              // Predicated region
              $region52: #{gat_forward.7} parent=39 // pred_check
                _
              $region53: #{gat_forward.7} parent=39 // pred_check_branch
                %249 = sbr.rel (0) target = $region55
              $region54: #{gat_forward.7} parent=39 // pred_region
                loop: start=0, step=1, limit=1
                $region56: #{gat_forward.7} parent=54 // loop_pre_header
                  _
                $region57: #{gat_forward.7} parent=54 // loop_header
                  %s251 = sphi 0, %s255
                  %p252 = scmp.ge.s32.totalorder %s251, 1
                  %s256 = sphi %s224, %s224
                  %s257 = sphi %s219, %s219
                $region58: #{gat_forward.7} parent=54 // loop_header_branch
                  %254 = sbr.rel (%p252) target = $region62
                $region59: #{gat_forward.7} parent=54 // loop_body
                  %v258 = vld [vmem:[%s256] sm:$0xff]
                  %259 = vst [vmem:[%s257] sm:$0xff] %v258
                  %v260 = vld [vmem:[%s256 + $0x18] sm:$0xff]
                  %261 = vst [vmem:[%s257 + $0x8] sm:$0xff] %v260
                  %v262 = vld [vmem:[%s256 + $0x30] sm:$0xff]
                  %263 = vst [vmem:[%s257 + $0x10] sm:$0xff] %v262
                  %v264 = vld [vmem:[%s256 + $0x48] sm:$0xff]
                  %265 = vst [vmem:[%s257 + $0x18] sm:$0xff] %v264
                $region60: #{gat_forward.7} parent=54 // loop_footer
                  %s255 = sadd.s32 1, %s251
                $region61: #{gat_forward.7} parent=54 // loop_footer_branch
                  %250 = sbr.rel target = $region57
                $region62: #{gat_forward.7} parent=54 // loop_exit
                  _
              $region55: #{gat_forward.7} parent=39 // pred_fallthru
                _
              // Predicated region
              $region63: #{gat_forward.7} parent=39 // pred_check
                _
              $region64: #{gat_forward.7} parent=39 // pred_check_branch
                %267 = sbr.rel target = $region66
              $region65: #{gat_forward.7} parent=39 // pred_region
                _
              $region66: #{gat_forward.7} parent=39 // pred_fallthru
                _
            $region40: #{gat_forward.7} parent=35 // pred_fallthru
              _
            // Predicated region
            $region41: #{gat_forward.7} parent=35 // pred_check
              _
            $region42: #{gat_forward.7} parent=35 // pred_check_branch
              %230 = sbr.rel target = $region44
            $region43: #{gat_forward.7} parent=35 // pred_region
              loop: start=0, step=1, limit=1
              $region45: #{gat_forward.7} parent=43 // loop_pre_header
                _
              $region46: #{gat_forward.7} parent=43 // loop_header
                %s233 = sphi 0, %s237
                %p234 = scmp.ge.s32.totalorder %s233, 1
                %s238 = sphi %s224, %s224
                %s239 = sphi %s219, %s219
              $region47: #{gat_forward.7} parent=43 // loop_header_branch
                %236 = sbr.rel (%p234) target = $region51
              $region48: #{gat_forward.7} parent=43 // loop_body
                %v240 = vld [vmem:[%s238] sm:$0xff]
                %241 = vst [vmem:[%s239] sm:$0xff] %v240
                %v242 = vld [vmem:[%s238 + $0x18] sm:$0xff]
                %243 = vst [vmem:[%s239 + $0x8] sm:$0xff] %v242
                %v244 = vld [vmem:[%s238 + $0x30] sm:$0xff]
                %245 = vst [vmem:[%s239 + $0x10] sm:$0xff] %v244
                %v246 = vld [vmem:[%s238 + $0x48] sm:$0xff]
                %247 = vst [vmem:[%s239 + $0x18] sm:$0xff] %v246
              $region49: #{gat_forward.7} parent=43 // loop_footer
                %s237 = sadd.s32 1, %s233
              $region50: #{gat_forward.7} parent=43 // loop_footer_branch
                %232 = sbr.rel target = $region46
              $region51: #{gat_forward.7} parent=43 // loop_exit
                _
            $region44: #{gat_forward.7} parent=35 // pred_fallthru
              _
          $region36: #{gat_forward.7} parent=31 // pred_fallthru
            _
          %268 = vnop
        $region32: #{gat_forward.7} parent=19 // pred_fallthru
          _
        // Predicated region
        $region67: #{gat_forward.7} parent=19 // pred_check
          %p269 = pneg %p123
        $region68: #{gat_forward.7} parent=19 // pred_check_branch
          %271 = sbr.rel (%p269) target = $region70
        $region69: #{gat_forward.7} parent=19 // pred_region
          %s272 = smul.u32 16, %s19
          %p273 = scmp.lt.s32.totalorder %s272, 47
          %s274 = scalar_select %p273, %s272, 47
          %s275 = smul.addr %s274, 8
          %s276 = scalar_lea.vmem %s3, %s275
          %s277 = smul.u32 16, %s19
        $region70: #{gat_forward.7} parent=19 // pred_fallthru
          _
      $region20: #{gat_forward.7} parent=5 // pred_fallthru
        _
      %p278 = scmp.le.s32.totalorder 1, %s11
      %p279 = scmp.lt.s32.totalorder %s11, 10
      %p280 = pnand %p278, %p279
      %p281 = pneg %p280
      // Predicated region
      $region71: #{gat_forward.7} parent=5 // pred_check
        _
      $region72: #{gat_forward.7} parent=5 // pred_check_branch
        %283 = sbr.rel (%p280) target = $region74
      $region73: #{gat_forward.7} parent=5 // pred_region
        %s284 = ssub.s32 %s11, 1
        %s285 = sand.u32 %s90, 1
        %s286 = sand.u32 %s90, 1
        %s287 = smul.addr %s286, 32
        %s288 = scalar_lea.vmem [#allocation5], %s287
        // Predicated region
        $region75: #{gat_forward.7} parent=73 // pred_check
          %p289 = pneg %p103
        $region76: #{gat_forward.7} parent=73 // pred_check_branch
          %291 = sbr.rel (%p289) target = $region78
        $region77: #{gat_forward.7} parent=73 // pred_region
          _
        $region78: #{gat_forward.7} parent=73 // pred_fallthru
          _
        %s292 = smul.u32 16, %s20
        %p293 = scmp.lt.s32.totalorder %s292, 47
        %s294 = scalar_select %p293, %s292, 47
        %s295 = smul.addr %s294, 8
        %s296 = scalar_lea.vmem %s0, %s295
        %p297 = pneg %p49
        %p298 = pneg %p46
        %p299 = scmp.lt.s32.totalorder %s21, 2
        %s300 = scalar_select %p299, %s21, 2
        %s301 = scalar_lea.vmem %s1, %s300
        %p302 = pneg %p75
        %p303 = pneg %p72
        %s304 = sand.u32 %s90, 1
        %s305 = sand.u32 %s90, 1
        %s306 = smul.addr %s305, 32
        %s307 = scalar_lea.vmem [#allocation5], %s306
        %p308 = pneg %p103
        %p309 = pneg %p100
        %s310 = smul.u32 16, %s21
        %p311 = scmp.lt.s32.totalorder %s310, 47
        %s312 = scalar_select %p311, %s310, 47
        %s313 = smul.addr %s312, 8
        %s314 = scalar_lea.vmem %s3, %s313
        %p315 = pneg %p129
        %p316 = pneg %p126
        %p317 = pneg %p150
        %p318 = pneg %p147
        %p319 = pneg %p176
        %p320 = pneg %p173
        %s321 = smul.u32 16, %s20
        %p322 = scmp.lt.s32.totalorder %s321, 47
        %s323 = scalar_select %p322, %s321, 47
        %s324 = smul.addr %s323, 8
        %s325 = scalar_lea.vmem %s5, %s324
        %s326 = smul.u32 16, %s20
        %p327 = scmp.lt.s32.totalorder %s326, 47
        %s328 = scalar_select %p327, %s326, 47
        %s329 = smul.addr %s328, 8
        %s330 = scalar_lea.vmem %s0, %s329
        %s331 = smul.u32 16, %s20
        %p332 = scmp.lt.s32.totalorder %s21, 2
        %s333 = scalar_select %p332, %s21, 2
        %s334 = scalar_lea.vmem %s1, %s333
        %s335 = smul.u32 4, %s20
        %s336 = smul.u32 16, %s21
        %p337 = scmp.lt.s32.totalorder %s336, 47
        %s338 = scalar_select %p337, %s336, 47
        %s339 = smul.addr %s338, 8
        %s340 = scalar_lea.vmem %s3, %s339
        %s341 = smul.u32 16, %s21
        %s342 = smul.u32 16, %s20
        %p343 = scmp.lt.s32.totalorder %s342, 47
        %s344 = scalar_select %p343, %s342, 47
        %s345 = smul.addr %s344, 8
        %s346 = scalar_lea.vmem %s5, %s345
        %s347 = smul.u32 16, %s20
        %p348 = scmp.eq.s32.totalorder %s21, 0
        // Predicated region
        $region79: #{gat_forward.7} parent=73 // pred_check
          %p349 = pneg %p348
        $region80: #{gat_forward.7} parent=73 // pred_check_branch
          %351 = sbr.rel (%p349) target = $region82
        $region81: #{gat_forward.7} parent=73 // pred_region
          %vm352 = vcmask 7168
          %353 = vst.msk [vmem:[#allocation2] sm:$0xff] %vm352, -1e+30
          %354 = vst.msk [vmem:[#allocation2 + $0x8] sm:$0xff] %vm352, -1e+30
          %355 = vst.msk [vmem:[#allocation2 + $0x10] sm:$0xff] %vm352, -1e+30
          %356 = vst.msk [vmem:[#allocation2 + $0x18] sm:$0xff] %vm352, -1e+30
          %357 = vst.msk [vmem:[#allocation2 + $0x20] sm:$0xff] %vm352, -1e+30
          %358 = vst.msk [vmem:[#allocation2 + $0x28] sm:$0xff] %vm352, -1e+30
          %359 = vst.msk [vmem:[#allocation2 + $0x30] sm:$0xff] %vm352, -1e+30
          %360 = vst.msk [vmem:[#allocation2 + $0x38] sm:$0xff] %vm352, -1e+30
          %361 = vst.msk [vmem:[#allocation2 + $0x40] sm:$0xff] %vm352, -1e+30
          %362 = vst.msk [vmem:[#allocation2 + $0x48] sm:$0xff] %vm352, -1e+30
          %363 = vst.msk [vmem:[#allocation2 + $0x50] sm:$0xff] %vm352, -1e+30
          %364 = vst.msk [vmem:[#allocation2 + $0x58] sm:$0xff] %vm352, -1e+30
          %365 = vst.msk [vmem:[#allocation2 + $0x60] sm:$0xff] %vm352, -1e+30
          %366 = vst.msk [vmem:[#allocation2 + $0x68] sm:$0xff] %vm352, -1e+30
          %367 = vst.msk [vmem:[#allocation2 + $0x70] sm:$0xff] %vm352, -1e+30
          %368 = vst.msk [vmem:[#allocation2 + $0x78] sm:$0xff] %vm352, -1e+30
          %369 = vst.msk [vmem:[#allocation3] sm:$0xff] %vm352, 0.0
          %370 = vst.msk [vmem:[#allocation3 + $0x8] sm:$0xff] %vm352, 0.0
          %371 = vst.msk [vmem:[#allocation3 + $0x10] sm:$0xff] %vm352, 0.0
          %372 = vst.msk [vmem:[#allocation3 + $0x18] sm:$0xff] %vm352, 0.0
          %373 = vst.msk [vmem:[#allocation3 + $0x20] sm:$0xff] %vm352, 0.0
          %374 = vst.msk [vmem:[#allocation3 + $0x28] sm:$0xff] %vm352, 0.0
          %375 = vst.msk [vmem:[#allocation3 + $0x30] sm:$0xff] %vm352, 0.0
          %376 = vst.msk [vmem:[#allocation3 + $0x38] sm:$0xff] %vm352, 0.0
          %377 = vst.msk [vmem:[#allocation3 + $0x40] sm:$0xff] %vm352, 0.0
          %378 = vst.msk [vmem:[#allocation3 + $0x48] sm:$0xff] %vm352, 0.0
          %379 = vst.msk [vmem:[#allocation3 + $0x50] sm:$0xff] %vm352, 0.0
          %380 = vst.msk [vmem:[#allocation3 + $0x58] sm:$0xff] %vm352, 0.0
          %381 = vst.msk [vmem:[#allocation3 + $0x60] sm:$0xff] %vm352, 0.0
          %382 = vst.msk [vmem:[#allocation3 + $0x68] sm:$0xff] %vm352, 0.0
          %383 = vst.msk [vmem:[#allocation3 + $0x70] sm:$0xff] %vm352, 0.0
          %384 = vst.msk [vmem:[#allocation3 + $0x78] sm:$0xff] %vm352, 0.0
          %385 = vst [vmem:[#allocation4] sm:$0xff] 0.0
          %386 = vst [vmem:[#allocation4 + $0x8] sm:$0xff] 0.0
          %387 = vst [vmem:[#allocation4 + $0x10] sm:$0xff] 0.0
          %388 = vst [vmem:[#allocation4 + $0x18] sm:$0xff] 0.0
          %389 = vst [vmem:[#allocation4 + $0x20] sm:$0xff] 0.0
          %390 = vst [vmem:[#allocation4 + $0x28] sm:$0xff] 0.0
          %391 = vst [vmem:[#allocation4 + $0x30] sm:$0xff] 0.0
          %392 = vst [vmem:[#allocation4 + $0x38] sm:$0xff] 0.0
          %393 = vst [vmem:[#allocation4 + $0x40] sm:$0xff] 0.0
          %394 = vst [vmem:[#allocation4 + $0x48] sm:$0xff] 0.0
          %395 = vst [vmem:[#allocation4 + $0x50] sm:$0xff] 0.0
          %396 = vst [vmem:[#allocation4 + $0x58] sm:$0xff] 0.0
          %397 = vst [vmem:[#allocation4 + $0x60] sm:$0xff] 0.0
          %398 = vst [vmem:[#allocation4 + $0x68] sm:$0xff] 0.0
          %399 = vst [vmem:[#allocation4 + $0x70] sm:$0xff] 0.0
          %400 = vst [vmem:[#allocation4 + $0x78] sm:$0xff] 0.0
        $region82: #{gat_forward.7} parent=73 // pred_fallthru
          _
        %v401 = vld [vmem:[%s288] sm:$0xff]
        %v402 = vld [vmem:[%s288 + $0x8] sm:$0xff]
        %v403 = vld [vmem:[%s288 + $0x10] sm:$0xff]
        %v404 = vld [vmem:[%s288 + $0x18] sm:$0xff]
        %v405 = vunpack.c.0.s8 %v401
        %v406 = vunpack.c.1.s8 %v401
        %v407 = vunpack.c.2.s8 %v401
        %v408 = vunpack.c.3.s8 %v401
        %v409 = vunpack.c.0.s8 %v402
        %v410 = vunpack.c.1.s8 %v402
        %v411 = vunpack.c.2.s8 %v402
        %v412 = vunpack.c.3.s8 %v402
        %v413 = vunpack.c.0.s8 %v403
        %v414 = vunpack.c.1.s8 %v403
        %v415 = vunpack.c.2.s8 %v403
        %v416 = vunpack.c.3.s8 %v403
        %v417 = vunpack.c.0.s8 %v404
        %v418 = vunpack.c.1.s8 %v404
        %v419 = vunpack.c.2.s8 %v404
        %v420 = vunpack.c.3.s8 %v404
        %v421 = vcvt.s32.f32 %v405
        %v422 = vcvt.s32.f32 %v406
        %v423 = vcvt.s32.f32 %v407
        %v424 = vcvt.s32.f32 %v408
        %v425 = vcvt.s32.f32 %v409
        %v426 = vcvt.s32.f32 %v410
        %v427 = vcvt.s32.f32 %v411
        %v428 = vcvt.s32.f32 %v412
        %v429 = vcvt.s32.f32 %v413
        %v430 = vcvt.s32.f32 %v414
        %v431 = vcvt.s32.f32 %v415
        %v432 = vcvt.s32.f32 %v416
        %v433 = vcvt.s32.f32 %v417
        %v434 = vcvt.s32.f32 %v418
        %v435 = vcvt.s32.f32 %v419
        %v436 = vcvt.s32.f32 %v420
        %v437 = vld [vmem:[%s330] sm:$0xff]
        %v438 = vld [vmem:[%s330 + $0x8] sm:$0xff]
        %v439 = vld [vmem:[%s330 + $0x10] sm:$0xff]
        %v440 = vld [vmem:[%s330 + $0x18] sm:$0xff]
        %v441 = vld [vmem:[%s330 + $0x20] sm:$0xff]
        %v442 = vld [vmem:[%s330 + $0x28] sm:$0xff]
        %v443 = vld [vmem:[%s330 + $0x30] sm:$0xff]
        %v444 = vld [vmem:[%s330 + $0x38] sm:$0xff]
        %v445 = vld [vmem:[%s330 + $0x40] sm:$0xff]
        %v446 = vld [vmem:[%s330 + $0x48] sm:$0xff]
        %v447 = vld [vmem:[%s330 + $0x50] sm:$0xff]
        %v448 = vld [vmem:[%s330 + $0x58] sm:$0xff]
        %v449 = vld [vmem:[%s330 + $0x60] sm:$0xff]
        %v450 = vld [vmem:[%s330 + $0x68] sm:$0xff]
        %v451 = vld [vmem:[%s330 + $0x70] sm:$0xff]
        %v452 = vld [vmem:[%s330 + $0x78] sm:$0xff]
        %v453 = vld [vmem:[%s334] sm:$0x1]
        %455 = vset.pattern.permute.xlu0 0
        %456 = vperm.xlu0 %455, %v437
        %v457 = vpop.permute.xlu0 %456
        %460 = vset.pattern.permute.xlu0 0
        %461 = vperm.xlu0 %460, %v438
        %v462 = vpop.permute.xlu0 %461
        %465 = vset.pattern.permute.xlu0 0
        %466 = vperm.xlu0 %465, %v439
        %v467 = vpop.permute.xlu0 %466
        %470 = vset.pattern.permute.xlu0 0
        %471 = vperm.xlu0 %470, %v440
        %v472 = vpop.permute.xlu0 %471
        %475 = vset.pattern.permute.xlu0 0
        %476 = vperm.xlu0 %475, %v441
        %v477 = vpop.permute.xlu0 %476
        %480 = vset.pattern.permute.xlu0 0
        %481 = vperm.xlu0 %480, %v442
        %v482 = vpop.permute.xlu0 %481
        %485 = vset.pattern.permute.xlu0 0
        %486 = vperm.xlu0 %485, %v443
        %v487 = vpop.permute.xlu0 %486
        %490 = vset.pattern.permute.xlu0 0
        %491 = vperm.xlu0 %490, %v444
        %v492 = vpop.permute.xlu0 %491
        %495 = vset.pattern.permute.xlu0 0
        %496 = vperm.xlu0 %495, %v445
        %v497 = vpop.permute.xlu0 %496
        %500 = vset.pattern.permute.xlu0 0
        %501 = vperm.xlu0 %500, %v446
        %v502 = vpop.permute.xlu0 %501
        %505 = vset.pattern.permute.xlu0 0
        %506 = vperm.xlu0 %505, %v447
        %v507 = vpop.permute.xlu0 %506
        %510 = vset.pattern.permute.xlu0 0
        %511 = vperm.xlu0 %510, %v448
        %v512 = vpop.permute.xlu0 %511
        %515 = vset.pattern.permute.xlu0 0
        %516 = vperm.xlu0 %515, %v449
        %v517 = vpop.permute.xlu0 %516
        %520 = vset.pattern.permute.xlu0 0
        %521 = vperm.xlu0 %520, %v450
        %v522 = vpop.permute.xlu0 %521
        %525 = vset.pattern.permute.xlu0 0
        %526 = vperm.xlu0 %525, %v451
        %v527 = vpop.permute.xlu0 %526
        %530 = vset.pattern.permute.xlu0 0
        %531 = vperm.xlu0 %530, %v452
        %v532 = vpop.permute.xlu0 %531
        %v535 = vlaneseq
        %v536 = vshrl.u32 %v535, 7
        %v537 = vsub.s32 0, %v536
        %v538 = vrot.slane %v453, %v537
        %v540 = vadd.f32 %v457, %v538
        %v541 = vadd.f32 %v462, %v538
        %v542 = vadd.f32 %v467, %v538
        %v543 = vadd.f32 %v472, %v538
        %v544 = vadd.f32 %v477, %v538
        %v545 = vadd.f32 %v482, %v538
        %v546 = vadd.f32 %v487, %v538
        %v547 = vadd.f32 %v492, %v538
        %v548 = vadd.f32 %v497, %v538
        %v549 = vadd.f32 %v502, %v538
        %v550 = vadd.f32 %v507, %v538
        %v551 = vadd.f32 %v512, %v538
        %v552 = vadd.f32 %v517, %v538
        %v553 = vadd.f32 %v522, %v538
        %v554 = vadd.f32 %v527, %v538
        %v555 = vadd.f32 %v532, %v538
        %vm556 = vcmp.ge.f32.partialorder %v540, 0.0
        %vm557 = vcmp.ge.f32.partialorder %v541, 0.0
        %vm558 = vcmp.ge.f32.partialorder %v542, 0.0
        %vm559 = vcmp.ge.f32.partialorder %v543, 0.0
        %vm560 = vcmp.ge.f32.partialorder %v544, 0.0
        %vm561 = vcmp.ge.f32.partialorder %v545, 0.0
        %vm562 = vcmp.ge.f32.partialorder %v546, 0.0
        %vm563 = vcmp.ge.f32.partialorder %v547, 0.0
        %vm564 = vcmp.ge.f32.partialorder %v548, 0.0
        %vm565 = vcmp.ge.f32.partialorder %v549, 0.0
        %vm566 = vcmp.ge.f32.partialorder %v550, 0.0
        %vm567 = vcmp.ge.f32.partialorder %v551, 0.0
        %vm568 = vcmp.ge.f32.partialorder %v552, 0.0
        %vm569 = vcmp.ge.f32.partialorder %v553, 0.0
        %vm570 = vcmp.ge.f32.partialorder %v554, 0.0
        %vm571 = vcmp.ge.f32.partialorder %v555, 0.0
        %v572 = vmul.f32 %v540, 0.2
        %v573 = vmul.f32 %v541, 0.2
        %v574 = vmul.f32 %v542, 0.2
        %v575 = vmul.f32 %v543, 0.2
        %v576 = vmul.f32 %v544, 0.2
        %v577 = vmul.f32 %v545, 0.2
        %v578 = vmul.f32 %v546, 0.2
        %v579 = vmul.f32 %v547, 0.2
        %v580 = vmul.f32 %v548, 0.2
        %v581 = vmul.f32 %v549, 0.2
        %v582 = vmul.f32 %v550, 0.2
        %v583 = vmul.f32 %v551, 0.2
        %v584 = vmul.f32 %v552, 0.2
        %v585 = vmul.f32 %v553, 0.2
        %v586 = vmul.f32 %v554, 0.2
        %v587 = vmul.f32 %v555, 0.2
        %v588 = vsel %vm556, %v540, %v572
        %v589 = vsel %vm557, %v541, %v573
        %v590 = vsel %vm558, %v542, %v574
        %v591 = vsel %vm559, %v543, %v575
        %v592 = vsel %vm560, %v544, %v576
        %v593 = vsel %vm561, %v545, %v577
        %v594 = vsel %vm562, %v546, %v578
        %v595 = vsel %vm563, %v547, %v579
        %v596 = vsel %vm564, %v548, %v580
        %v597 = vsel %vm565, %v549, %v581
        %v598 = vsel %vm566, %v550, %v582
        %v599 = vsel %vm567, %v551, %v583
        %v600 = vsel %vm568, %v552, %v584
        %v601 = vsel %vm569, %v553, %v585
        %v602 = vsel %vm570, %v554, %v586
        %v603 = vsel %vm571, %v555, %v587
        %vm604 = vcmp.gt.f32.partialorder %v421, 0.0
        %vm605 = vcmp.gt.f32.partialorder %v422, 0.0
        %vm606 = vcmp.gt.f32.partialorder %v423, 0.0
        %vm607 = vcmp.gt.f32.partialorder %v424, 0.0
        %vm608 = vcmp.gt.f32.partialorder %v425, 0.0
        %vm609 = vcmp.gt.f32.partialorder %v426, 0.0
        %vm610 = vcmp.gt.f32.partialorder %v427, 0.0
        %vm611 = vcmp.gt.f32.partialorder %v428, 0.0
        %vm612 = vcmp.gt.f32.partialorder %v429, 0.0
        %vm613 = vcmp.gt.f32.partialorder %v430, 0.0
        %vm614 = vcmp.gt.f32.partialorder %v431, 0.0
        %vm615 = vcmp.gt.f32.partialorder %v432, 0.0
        %vm616 = vcmp.gt.f32.partialorder %v433, 0.0
        %vm617 = vcmp.gt.f32.partialorder %v434, 0.0
        %vm618 = vcmp.gt.f32.partialorder %v435, 0.0
        %vm619 = vcmp.gt.f32.partialorder %v436, 0.0
        %v620 = vsel %vm604, %v588, -1e+30
        %v621 = vsel %vm605, %v589, -1e+30
        %v622 = vsel %vm606, %v590, -1e+30
        %v623 = vsel %vm607, %v591, -1e+30
        %v624 = vsel %vm608, %v592, -1e+30
        %v625 = vsel %vm609, %v593, -1e+30
        %v626 = vsel %vm610, %v594, -1e+30
        %v627 = vsel %vm611, %v595, -1e+30
        %v628 = vsel %vm612, %v596, -1e+30
        %v629 = vsel %vm613, %v597, -1e+30
        %v630 = vsel %vm614, %v598, -1e+30
        %v631 = vsel %vm615, %v599, -1e+30
        %v632 = vsel %vm616, %v600, -1e+30
        %v633 = vsel %vm617, %v601, -1e+30
        %v634 = vsel %vm618, %v602, -1e+30
        %v635 = vsel %vm619, %v603, -1e+30
        %v636 = vld [vmem:[#allocation2] sm:$0xff]
        %v637 = vld [vmem:[#allocation2 + $0x8] sm:$0xff]
        %v638 = vld [vmem:[#allocation2 + $0x10] sm:$0xff]
        %v639 = vld [vmem:[#allocation2 + $0x18] sm:$0xff]
        %v640 = vld [vmem:[#allocation2 + $0x20] sm:$0xff]
        %v641 = vld [vmem:[#allocation2 + $0x28] sm:$0xff]
        %v642 = vld [vmem:[#allocation2 + $0x30] sm:$0xff]
        %v643 = vld [vmem:[#allocation2 + $0x38] sm:$0xff]
        %v644 = vld [vmem:[#allocation2 + $0x40] sm:$0xff]
        %v645 = vld [vmem:[#allocation2 + $0x48] sm:$0xff]
        %v646 = vld [vmem:[#allocation2 + $0x50] sm:$0xff]
        %v647 = vld [vmem:[#allocation2 + $0x58] sm:$0xff]
        %v648 = vld [vmem:[#allocation2 + $0x60] sm:$0xff]
        %v649 = vld [vmem:[#allocation2 + $0x68] sm:$0xff]
        %v650 = vld [vmem:[#allocation2 + $0x70] sm:$0xff]
        %v651 = vld [vmem:[#allocation2 + $0x78] sm:$0xff]
        %652 = vmax.xlane.f32.xlu0 %v620
        %v653 = vpop.xlane.xlu0 %652
        %654 = vmax.xlane.f32.xlu0 %v621
        %v655 = vpop.xlane.xlu0 %654
        %656 = vmax.xlane.f32.xlu0 %v622
        %v657 = vpop.xlane.xlu0 %656
        %658 = vmax.xlane.f32.xlu0 %v623
        %v659 = vpop.xlane.xlu0 %658
        %660 = vmax.xlane.f32.xlu0 %v624
        %v661 = vpop.xlane.xlu0 %660
        %662 = vmax.xlane.f32.xlu0 %v625
        %v663 = vpop.xlane.xlu0 %662
        %664 = vmax.xlane.f32.xlu0 %v626
        %v665 = vpop.xlane.xlu0 %664
        %666 = vmax.xlane.f32.xlu0 %v627
        %v667 = vpop.xlane.xlu0 %666
        %668 = vmax.xlane.f32.xlu0 %v628
        %v669 = vpop.xlane.xlu0 %668
        %670 = vmax.xlane.f32.xlu0 %v629
        %v671 = vpop.xlane.xlu0 %670
        %672 = vmax.xlane.f32.xlu0 %v630
        %v673 = vpop.xlane.xlu0 %672
        %674 = vmax.xlane.f32.xlu0 %v631
        %v675 = vpop.xlane.xlu0 %674
        %676 = vmax.xlane.f32.xlu0 %v632
        %v677 = vpop.xlane.xlu0 %676
        %678 = vmax.xlane.f32.xlu0 %v633
        %v679 = vpop.xlane.xlu0 %678
        %680 = vmax.xlane.f32.xlu0 %v634
        %v681 = vpop.xlane.xlu0 %680
        %682 = vmax.xlane.f32.xlu0 %v635
        %v683 = vpop.xlane.xlu0 %682
        %v684 = vmax.f32 %v636, %v653
        %v685 = vmax.f32 %v637, %v655
        %v686 = vmax.f32 %v638, %v657
        %v687 = vmax.f32 %v639, %v659
        %v688 = vmax.f32 %v640, %v661
        %v689 = vmax.f32 %v641, %v663
        %v690 = vmax.f32 %v642, %v665
        %v691 = vmax.f32 %v643, %v667
        %v692 = vmax.f32 %v644, %v669
        %v693 = vmax.f32 %v645, %v671
        %v694 = vmax.f32 %v646, %v673
        %v695 = vmax.f32 %v647, %v675
        %v696 = vmax.f32 %v648, %v677
        %v697 = vmax.f32 %v649, %v679
        %v698 = vmax.f32 %v650, %v681
        %v699 = vmax.f32 %v651, %v683
        %v700 = vsub.f32 %v636, %v684
        %v701 = vsub.f32 %v637, %v685
        %v702 = vsub.f32 %v638, %v686
        %v703 = vsub.f32 %v639, %v687
        %v704 = vsub.f32 %v640, %v688
        %v705 = vsub.f32 %v641, %v689
        %v706 = vsub.f32 %v642, %v690
        %v707 = vsub.f32 %v643, %v691
        %v708 = vsub.f32 %v644, %v692
        %v709 = vsub.f32 %v645, %v693
        %v710 = vsub.f32 %v646, %v694
        %v711 = vsub.f32 %v647, %v695
        %v712 = vsub.f32 %v648, %v696
        %v713 = vsub.f32 %v649, %v697
        %v714 = vsub.f32 %v650, %v698
        %v715 = vsub.f32 %v651, %v699
        %v716 = vmul.f32 %v700, 1.442695
        %v717 = vpow.pop %v716
        %v718 = vmul.f32 %v701, 1.442695
        %v719 = vpow.pop %v718
        %v720 = vmul.f32 %v702, 1.442695
        %v721 = vpow.pop %v720
        %v722 = vmul.f32 %v703, 1.442695
        %v723 = vpow.pop %v722
        %v724 = vmul.f32 %v704, 1.442695
        %v725 = vpow.pop %v724
        %v726 = vmul.f32 %v705, 1.442695
        %v727 = vpow.pop %v726
        %v728 = vmul.f32 %v706, 1.442695
        %v729 = vpow.pop %v728
        %v730 = vmul.f32 %v707, 1.442695
        %v731 = vpow.pop %v730
        %v732 = vmul.f32 %v708, 1.442695
        %v733 = vpow.pop %v732
        %v734 = vmul.f32 %v709, 1.442695
        %v735 = vpow.pop %v734
        %v736 = vmul.f32 %v710, 1.442695
        %v737 = vpow.pop %v736
        %v738 = vmul.f32 %v711, 1.442695
        %v739 = vpow.pop %v738
        %v740 = vmul.f32 %v712, 1.442695
        %v741 = vpow.pop %v740
        %v742 = vmul.f32 %v713, 1.442695
        %v743 = vpow.pop %v742
        %v744 = vmul.f32 %v714, 1.442695
        %v745 = vpow.pop %v744
        %v746 = vmul.f32 %v715, 1.442695
        %v747 = vpow.pop %v746
        %749 = vset.pattern.permute.xlu0 0
        %750 = vperm.xlu0 %749, %v684
        %v751 = vpop.permute.xlu0 %750
        %754 = vset.pattern.permute.xlu0 0
        %755 = vperm.xlu0 %754, %v685
        %v756 = vpop.permute.xlu0 %755
        %759 = vset.pattern.permute.xlu0 0
        %760 = vperm.xlu0 %759, %v686
        %v761 = vpop.permute.xlu0 %760
        %764 = vset.pattern.permute.xlu0 0
        %765 = vperm.xlu0 %764, %v687
        %v766 = vpop.permute.xlu0 %765
        %769 = vset.pattern.permute.xlu0 0
        %770 = vperm.xlu0 %769, %v688
        %v771 = vpop.permute.xlu0 %770
        %774 = vset.pattern.permute.xlu0 0
        %775 = vperm.xlu0 %774, %v689
        %v776 = vpop.permute.xlu0 %775
        %779 = vset.pattern.permute.xlu0 0
        %780 = vperm.xlu0 %779, %v690
        %v781 = vpop.permute.xlu0 %780
        %784 = vset.pattern.permute.xlu0 0
        %785 = vperm.xlu0 %784, %v691
        %v786 = vpop.permute.xlu0 %785
        %789 = vset.pattern.permute.xlu0 0
        %790 = vperm.xlu0 %789, %v692
        %v791 = vpop.permute.xlu0 %790
        %794 = vset.pattern.permute.xlu0 0
        %795 = vperm.xlu0 %794, %v693
        %v796 = vpop.permute.xlu0 %795
        %799 = vset.pattern.permute.xlu0 0
        %800 = vperm.xlu0 %799, %v694
        %v801 = vpop.permute.xlu0 %800
        %804 = vset.pattern.permute.xlu0 0
        %805 = vperm.xlu0 %804, %v695
        %v806 = vpop.permute.xlu0 %805
        %809 = vset.pattern.permute.xlu0 0
        %810 = vperm.xlu0 %809, %v696
        %v811 = vpop.permute.xlu0 %810
        %814 = vset.pattern.permute.xlu0 0
        %815 = vperm.xlu0 %814, %v697
        %v816 = vpop.permute.xlu0 %815
        %819 = vset.pattern.permute.xlu0 0
        %820 = vperm.xlu0 %819, %v698
        %v821 = vpop.permute.xlu0 %820
        %824 = vset.pattern.permute.xlu0 0
        %825 = vperm.xlu0 %824, %v699
        %v826 = vpop.permute.xlu0 %825
        %v828 = vsub.f32 %v620, %v751
        %v829 = vsub.f32 %v621, %v756
        %v830 = vsub.f32 %v622, %v761
        %v831 = vsub.f32 %v623, %v766
        %v832 = vsub.f32 %v624, %v771
        %v833 = vsub.f32 %v625, %v776
        %v834 = vsub.f32 %v626, %v781
        %v835 = vsub.f32 %v627, %v786
        %v836 = vsub.f32 %v628, %v791
        %v837 = vsub.f32 %v629, %v796
        %v838 = vsub.f32 %v630, %v801
        %v839 = vsub.f32 %v631, %v806
        %v840 = vsub.f32 %v632, %v811
        %v841 = vsub.f32 %v633, %v816
        %v842 = vsub.f32 %v634, %v821
        %v843 = vsub.f32 %v635, %v826
        %v844 = vmul.f32 %v828, 1.442695
        %v845 = vpow.pop %v844
        %v846 = vmul.f32 %v829, 1.442695
        %v847 = vpow.pop %v846
        %v848 = vmul.f32 %v830, 1.442695
        %v849 = vpow.pop %v848
        %v850 = vmul.f32 %v831, 1.442695
        %v851 = vpow.pop %v850
        %v852 = vmul.f32 %v832, 1.442695
        %v853 = vpow.pop %v852
        %v854 = vmul.f32 %v833, 1.442695
        %v855 = vpow.pop %v854
        %v856 = vmul.f32 %v834, 1.442695
        %v857 = vpow.pop %v856
        %v858 = vmul.f32 %v835, 1.442695
        %v859 = vpow.pop %v858
        %v860 = vmul.f32 %v836, 1.442695
        %v861 = vpow.pop %v860
        %v862 = vmul.f32 %v837, 1.442695
        %v863 = vpow.pop %v862
        %v864 = vmul.f32 %v838, 1.442695
        %v865 = vpow.pop %v864
        %v866 = vmul.f32 %v839, 1.442695
        %v867 = vpow.pop %v866
        %v868 = vmul.f32 %v840, 1.442695
        %v869 = vpow.pop %v868
        %v870 = vmul.f32 %v841, 1.442695
        %v871 = vpow.pop %v870
        %v872 = vmul.f32 %v842, 1.442695
        %v873 = vpow.pop %v872
        %v874 = vmul.f32 %v843, 1.442695
        %v875 = vpow.pop %v874
        %v876 = vmul.f32 %v845, %v421
        %v877 = vmul.f32 %v847, %v422
        %v878 = vmul.f32 %v849, %v423
        %v879 = vmul.f32 %v851, %v424
        %v880 = vmul.f32 %v853, %v425
        %v881 = vmul.f32 %v855, %v426
        %v882 = vmul.f32 %v857, %v427
        %v883 = vmul.f32 %v859, %v428
        %v884 = vmul.f32 %v861, %v429
        %v885 = vmul.f32 %v863, %v430
        %v886 = vmul.f32 %v865, %v431
        %v887 = vmul.f32 %v867, %v432
        %v888 = vmul.f32 %v869, %v433
        %v889 = vmul.f32 %v871, %v434
        %v890 = vmul.f32 %v873, %v435
        %v891 = vmul.f32 %v875, %v436
        %v892 = vld [vmem:[#allocation3] sm:$0xff]
        %v893 = vld [vmem:[#allocation3 + $0x8] sm:$0xff]
        %v894 = vld [vmem:[#allocation3 + $0x10] sm:$0xff]
        %v895 = vld [vmem:[#allocation3 + $0x18] sm:$0xff]
        %v896 = vld [vmem:[#allocation3 + $0x20] sm:$0xff]
        %v897 = vld [vmem:[#allocation3 + $0x28] sm:$0xff]
        %v898 = vld [vmem:[#allocation3 + $0x30] sm:$0xff]
        %v899 = vld [vmem:[#allocation3 + $0x38] sm:$0xff]
        %v900 = vld [vmem:[#allocation3 + $0x40] sm:$0xff]
        %v901 = vld [vmem:[#allocation3 + $0x48] sm:$0xff]
        %v902 = vld [vmem:[#allocation3 + $0x50] sm:$0xff]
        %v903 = vld [vmem:[#allocation3 + $0x58] sm:$0xff]
        %v904 = vld [vmem:[#allocation3 + $0x60] sm:$0xff]
        %v905 = vld [vmem:[#allocation3 + $0x68] sm:$0xff]
        %v906 = vld [vmem:[#allocation3 + $0x70] sm:$0xff]
        %v907 = vld [vmem:[#allocation3 + $0x78] sm:$0xff]
        %v908 = vmul.f32 %v717, %v892
        %v909 = vmul.f32 %v719, %v893
        %v910 = vmul.f32 %v721, %v894
        %v911 = vmul.f32 %v723, %v895
        %v912 = vmul.f32 %v725, %v896
        %v913 = vmul.f32 %v727, %v897
        %v914 = vmul.f32 %v729, %v898
        %v915 = vmul.f32 %v731, %v899
        %v916 = vmul.f32 %v733, %v900
        %v917 = vmul.f32 %v735, %v901
        %v918 = vmul.f32 %v737, %v902
        %v919 = vmul.f32 %v739, %v903
        %v920 = vmul.f32 %v741, %v904
        %v921 = vmul.f32 %v743, %v905
        %v922 = vmul.f32 %v745, %v906
        %v923 = vmul.f32 %v747, %v907
        %924 = vadd.xlane.f32.xlu0 %v876
        %v925 = vpop.xlane.xlu0 %924
        %926 = vadd.xlane.f32.xlu0 %v877
        %v927 = vpop.xlane.xlu0 %926
        %928 = vadd.xlane.f32.xlu0 %v878
        %v929 = vpop.xlane.xlu0 %928
        %930 = vadd.xlane.f32.xlu0 %v879
        %v931 = vpop.xlane.xlu0 %930
        %932 = vadd.xlane.f32.xlu0 %v880
        %v933 = vpop.xlane.xlu0 %932
        %934 = vadd.xlane.f32.xlu0 %v881
        %v935 = vpop.xlane.xlu0 %934
        %936 = vadd.xlane.f32.xlu0 %v882
        %v937 = vpop.xlane.xlu0 %936
        %938 = vadd.xlane.f32.xlu0 %v883
        %v939 = vpop.xlane.xlu0 %938
        %940 = vadd.xlane.f32.xlu0 %v884
        %v941 = vpop.xlane.xlu0 %940
        %942 = vadd.xlane.f32.xlu0 %v885
        %v943 = vpop.xlane.xlu0 %942
        %944 = vadd.xlane.f32.xlu0 %v886
        %v945 = vpop.xlane.xlu0 %944
        %946 = vadd.xlane.f32.xlu0 %v887
        %v947 = vpop.xlane.xlu0 %946
        %948 = vadd.xlane.f32.xlu0 %v888
        %v949 = vpop.xlane.xlu0 %948
        %950 = vadd.xlane.f32.xlu0 %v889
        %v951 = vpop.xlane.xlu0 %950
        %952 = vadd.xlane.f32.xlu0 %v890
        %v953 = vpop.xlane.xlu0 %952
        %954 = vadd.xlane.f32.xlu0 %v891
        %v955 = vpop.xlane.xlu0 %954
        %v956 = vadd.f32 %v908, %v925
        %v957 = vadd.f32 %v909, %v927
        %v958 = vadd.f32 %v910, %v929
        %v959 = vadd.f32 %v911, %v931
        %v960 = vadd.f32 %v912, %v933
        %v961 = vadd.f32 %v913, %v935
        %v962 = vadd.f32 %v914, %v937
        %v963 = vadd.f32 %v915, %v939
        %v964 = vadd.f32 %v916, %v941
        %v965 = vadd.f32 %v917, %v943
        %v966 = vadd.f32 %v918, %v945
        %v967 = vadd.f32 %v919, %v947
        %v968 = vadd.f32 %v920, %v949
        %v969 = vadd.f32 %v921, %v951
        %v970 = vadd.f32 %v922, %v953
        %v971 = vadd.f32 %v923, %v955
        %vm972 = vcmask 7168
        %973 = vst.msk [vmem:[#allocation3] sm:$0xff] %vm972, %v956
        %974 = vst.msk [vmem:[#allocation3 + $0x8] sm:$0xff] %vm972, %v957
        %975 = vst.msk [vmem:[#allocation3 + $0x10] sm:$0xff] %vm972, %v958
        %976 = vst.msk [vmem:[#allocation3 + $0x18] sm:$0xff] %vm972, %v959
        %977 = vst.msk [vmem:[#allocation3 + $0x20] sm:$0xff] %vm972, %v960
        %978 = vst.msk [vmem:[#allocation3 + $0x28] sm:$0xff] %vm972, %v961
        %979 = vst.msk [vmem:[#allocation3 + $0x30] sm:$0xff] %vm972, %v962
        %980 = vst.msk [vmem:[#allocation3 + $0x38] sm:$0xff] %vm972, %v963
        %981 = vst.msk [vmem:[#allocation3 + $0x40] sm:$0xff] %vm972, %v964
        %982 = vst.msk [vmem:[#allocation3 + $0x48] sm:$0xff] %vm972, %v965
        %983 = vst.msk [vmem:[#allocation3 + $0x50] sm:$0xff] %vm972, %v966
        %984 = vst.msk [vmem:[#allocation3 + $0x58] sm:$0xff] %vm972, %v967
        %985 = vst.msk [vmem:[#allocation3 + $0x60] sm:$0xff] %vm972, %v968
        %986 = vst.msk [vmem:[#allocation3 + $0x68] sm:$0xff] %vm972, %v969
        %987 = vst.msk [vmem:[#allocation3 + $0x70] sm:$0xff] %vm972, %v970
        %988 = vst.msk [vmem:[#allocation3 + $0x78] sm:$0xff] %vm972, %v971
        %v989 = vld [vmem:[#allocation4] sm:$0xff]
        %v990 = vld [vmem:[#allocation4 + $0x8] sm:$0xff]
        %v991 = vld [vmem:[#allocation4 + $0x10] sm:$0xff]
        %v992 = vld [vmem:[#allocation4 + $0x18] sm:$0xff]
        %v993 = vld [vmem:[#allocation4 + $0x20] sm:$0xff]
        %v994 = vld [vmem:[#allocation4 + $0x28] sm:$0xff]
        %v995 = vld [vmem:[#allocation4 + $0x30] sm:$0xff]
        %v996 = vld [vmem:[#allocation4 + $0x38] sm:$0xff]
        %v997 = vld [vmem:[#allocation4 + $0x40] sm:$0xff]
        %v998 = vld [vmem:[#allocation4 + $0x48] sm:$0xff]
        %v999 = vld [vmem:[#allocation4 + $0x50] sm:$0xff]
        %v1000 = vld [vmem:[#allocation4 + $0x58] sm:$0xff]
        %v1001 = vld [vmem:[#allocation4 + $0x60] sm:$0xff]
        %v1002 = vld [vmem:[#allocation4 + $0x68] sm:$0xff]
        %v1003 = vld [vmem:[#allocation4 + $0x70] sm:$0xff]
        %v1004 = vld [vmem:[#allocation4 + $0x78] sm:$0xff]
        %1006 = vset.pattern.permute.xlu0 0
        %1007 = vperm.xlu0 %1006, %v717
        %v1008 = vpop.permute.xlu0 %1007
        %1011 = vset.pattern.permute.xlu0 0
        %1012 = vperm.xlu0 %1011, %v719
        %v1013 = vpop.permute.xlu0 %1012
        %1016 = vset.pattern.permute.xlu0 0
        %1017 = vperm.xlu0 %1016, %v721
        %v1018 = vpop.permute.xlu0 %1017
        %1021 = vset.pattern.permute.xlu0 0
        %1022 = vperm.xlu0 %1021, %v723
        %v1023 = vpop.permute.xlu0 %1022
        %1026 = vset.pattern.permute.xlu0 0
        %1027 = vperm.xlu0 %1026, %v725
        %v1028 = vpop.permute.xlu0 %1027
        %1031 = vset.pattern.permute.xlu0 0
        %1032 = vperm.xlu0 %1031, %v727
        %v1033 = vpop.permute.xlu0 %1032
        %1036 = vset.pattern.permute.xlu0 0
        %1037 = vperm.xlu0 %1036, %v729
        %v1038 = vpop.permute.xlu0 %1037
        %1041 = vset.pattern.permute.xlu0 0
        %1042 = vperm.xlu0 %1041, %v731
        %v1043 = vpop.permute.xlu0 %1042
        %1046 = vset.pattern.permute.xlu0 0
        %1047 = vperm.xlu0 %1046, %v733
        %v1048 = vpop.permute.xlu0 %1047
        %1051 = vset.pattern.permute.xlu0 0
        %1052 = vperm.xlu0 %1051, %v735
        %v1053 = vpop.permute.xlu0 %1052
        %1056 = vset.pattern.permute.xlu0 0
        %1057 = vperm.xlu0 %1056, %v737
        %v1058 = vpop.permute.xlu0 %1057
        %1061 = vset.pattern.permute.xlu0 0
        %1062 = vperm.xlu0 %1061, %v739
        %v1063 = vpop.permute.xlu0 %1062
        %1066 = vset.pattern.permute.xlu0 0
        %1067 = vperm.xlu0 %1066, %v741
        %v1068 = vpop.permute.xlu0 %1067
        %1071 = vset.pattern.permute.xlu0 0
        %1072 = vperm.xlu0 %1071, %v743
        %v1073 = vpop.permute.xlu0 %1072
        %1076 = vset.pattern.permute.xlu0 0
        %1077 = vperm.xlu0 %1076, %v745
        %v1078 = vpop.permute.xlu0 %1077
        %1081 = vset.pattern.permute.xlu0 0
        %1082 = vperm.xlu0 %1081, %v747
        %v1083 = vpop.permute.xlu0 %1082
        %v1085 = vmul.f32 %v1008, %v989
        %v1086 = vmul.f32 %v1013, %v990
        %v1087 = vmul.f32 %v1018, %v991
        %v1088 = vmul.f32 %v1023, %v992
        %v1089 = vmul.f32 %v1028, %v993
        %v1090 = vmul.f32 %v1033, %v994
        %v1091 = vmul.f32 %v1038, %v995
        %v1092 = vmul.f32 %v1043, %v996
        %v1093 = vmul.f32 %v1048, %v997
        %v1094 = vmul.f32 %v1053, %v998
        %v1095 = vmul.f32 %v1058, %v999
        %v1096 = vmul.f32 %v1063, %v1000
        %v1097 = vmul.f32 %v1068, %v1001
        %v1098 = vmul.f32 %v1073, %v1002
        %v1099 = vmul.f32 %v1078, %v1003
        %v1100 = vmul.f32 %v1083, %v1004
        %v1101 = vld [vmem:[%s340] sm:$0xff]
        %v1102 = vld [vmem:[%s340 + $0x8] sm:$0xff]
        %v1103 = vld [vmem:[%s340 + $0x10] sm:$0xff]
        %v1104 = vld [vmem:[%s340 + $0x18] sm:$0xff]
        %v1105 = vld [vmem:[%s340 + $0x20] sm:$0xff]
        %v1106 = vld [vmem:[%s340 + $0x28] sm:$0xff]
        %v1107 = vld [vmem:[%s340 + $0x30] sm:$0xff]
        %v1108 = vld [vmem:[%s340 + $0x38] sm:$0xff]
        %v1109 = vld [vmem:[%s340 + $0x40] sm:$0xff]
        %v1110 = vld [vmem:[%s340 + $0x48] sm:$0xff]
        %v1111 = vld [vmem:[%s340 + $0x50] sm:$0xff]
        %v1112 = vld [vmem:[%s340 + $0x58] sm:$0xff]
        %v1113 = vld [vmem:[%s340 + $0x60] sm:$0xff]
        %v1114 = vld [vmem:[%s340 + $0x68] sm:$0xff]
        %v1115 = vld [vmem:[%s340 + $0x70] sm:$0xff]
        %v1116 = vld [vmem:[%s340 + $0x78] sm:$0xff]
        %1117 = vmatprep.subr.mxu0 0.0
        %1118 = vmatpush1.msra.mxu0 %v1101
        %1119 = vmatprep.subr.mxu0 0.0
        %1120 = vmatpush1.msra.mxu0 %v1102
        %1121 = vmatprep.subr.mxu0 0.0
        %1122 = vmatpush1.msra.mxu0 %v1103
        %1123 = vmatprep.subr.mxu0 0.0
        %1124 = vmatpush1.msra.mxu0 %v1104
        %1125 = vmatprep.subr.mxu0 0.0
        %1126 = vmatpush1.msra.mxu0 %v1105
        %1127 = vmatprep.subr.mxu0 0.0
        %1128 = vmatpush1.msra.mxu0 %v1106
        %1129 = vmatprep.subr.mxu0 0.0
        %1130 = vmatpush1.msra.mxu0 %v1107
        %1131 = vmatprep.subr.mxu0 0.0
        %1132 = vmatpush1.msra.mxu0 %v1108
        %1133 = vmatprep.subr.mxu0 0.0
        %1134 = vmatpush1.msra.mxu0 %v1109
        %1135 = vmatprep.subr.mxu0 0.0
        %1136 = vmatpush1.msra.mxu0 %v1110
        %1137 = vmatprep.subr.mxu0 0.0
        %1138 = vmatpush1.msra.mxu0 %v1111
        %1139 = vmatprep.subr.mxu0 0.0
        %1140 = vmatpush1.msra.mxu0 %v1112
        %1141 = vmatprep.subr.mxu0 0.0
        %1142 = vmatpush1.msra.mxu0 %v1113
        %1143 = vmatprep.subr.mxu0 0.0
        %1144 = vmatpush1.msra.mxu0 %v1114
        %1145 = vmatprep.subr.mxu0 0.0
        %1146 = vmatpush1.msra.mxu0 %v1115
        %1147 = vmatprep.subr.mxu0 0.0
        %1148 = vmatpush1.msra.mxu0 %v1116
        %1149 = vmatprep.subr.mxu0 0.0
        %1150 = vmatpush1.msra.mxu0 0.0
        %1151 = vmatprep.subr.mxu0 0.0
        %1152 = vmatpush1.msra.mxu0 0.0
        %1153 = vmatprep.subr.mxu0 0.0
        %1154 = vmatpush1.msra.mxu0 0.0
        %1155 = vmatprep.subr.mxu0 0.0
        %1156 = vmatpush1.msra.mxu0 0.0
        %1157 = vmatprep.subr.mxu0 0.0
        %1158 = vmatpush1.msra.mxu0 0.0
        %1159 = vmatprep.subr.mxu0 0.0
        %1160 = vmatpush1.msra.mxu0 0.0
        %1161 = vmatprep.subr.mxu0 0.0
        %1162 = vmatpush1.msra.mxu0 0.0
        %1163 = vmatprep.subr.mxu0 0.0
        %1164 = vmatpush1.msra.mxu0 0.0
        %1165 = vmatprep.subr.mxu0 0.0
        %1166 = vmatpush1.msra.mxu0 0.0
        %1167 = vmatprep.subr.mxu0 0.0
        %1168 = vmatpush1.msra.mxu0 0.0
        %1169 = vmatprep.subr.mxu0 0.0
        %1170 = vmatpush1.msra.mxu0 0.0
        %1171 = vmatprep.subr.mxu0 0.0
        %1172 = vmatpush1.msra.mxu0 0.0
        %1173 = vmatprep.subr.mxu0 0.0
        %1174 = vmatpush1.msra.mxu0 0.0
        %1175 = vmatprep.subr.mxu0 0.0
        %1176 = vmatpush1.msra.mxu0 0.0
        %1177 = vmatprep.subr.mxu0 0.0
        %1178 = vmatpush1.msra.mxu0 0.0
        %1179 = vmatprep.subr.mxu0 0.0
        %1180 = vmatpush1.msra.mxu0 0.0
        %1181 = vmatprep.mubr.f32.mxu0 0.0
        %1182 = vmatmul.mubr.f32.gmra.mrb[0].mxu0 %v876
        %v1183 = vpop.f32.mrb[0].mxu0
        %v1184 = vadd.f32 0.0, %v1183
        %v1185 = vpop.f32.mrb[0].mxu0
        %1186 = vmatprep.mubr.f32.mxu0 0.0
        %1187 = vmatmul.mubr.f32.gmra.mrb[0].mxu0 %v877
        %v1188 = vpop.f32.mrb[0].mxu0
        %v1189 = vadd.f32 0.0, %v1188
        %v1190 = vpop.f32.mrb[0].mxu0
        %1191 = vmatprep.mubr.f32.mxu0 0.0
        %1192 = vmatmul.mubr.f32.gmra.mrb[0].mxu0 %v878
        %v1193 = vpop.f32.mrb[0].mxu0
        %v1194 = vadd.f32 0.0, %v1193
        %v1195 = vpop.f32.mrb[0].mxu0
        %1196 = vmatprep.mubr.f32.mxu0 0.0
        %1197 = vmatmul.mubr.f32.gmra.mrb[0].mxu0 %v879
        %v1198 = vpop.f32.mrb[0].mxu0
        %v1199 = vadd.f32 0.0, %v1198
        %v1200 = vpop.f32.mrb[0].mxu0
        %1201 = vmatprep.mubr.f32.mxu0 0.0
        %1202 = vmatmul.mubr.f32.gmra.mrb[0].mxu0 %v880
        %v1203 = vpop.f32.mrb[0].mxu0
        %v1204 = vadd.f32 0.0, %v1203
        %v1205 = vpop.f32.mrb[0].mxu0
        %1206 = vmatprep.mubr.f32.mxu0 0.0
        %1207 = vmatmul.mubr.f32.gmra.mrb[0].mxu0 %v881
        %v1208 = vpop.f32.mrb[0].mxu0
        %v1209 = vadd.f32 0.0, %v1208
        %v1210 = vpop.f32.mrb[0].mxu0
        %1211 = vmatprep.mubr.f32.mxu0 0.0
        %1212 = vmatmul.mubr.f32.gmra.mrb[0].mxu0 %v882
        %v1213 = vpop.f32.mrb[0].mxu0
        %v1214 = vadd.f32 0.0, %v1213
        %v1215 = vpop.f32.mrb[0].mxu0
        %1216 = vmatprep.mubr.f32.mxu0 0.0
        %1217 = vmatmul.mubr.f32.gmra.mrb[0].mxu0 %v883
        %v1218 = vpop.f32.mrb[0].mxu0
        %v1219 = vadd.f32 0.0, %v1218
        %v1220 = vpop.f32.mrb[0].mxu0
        %1221 = vmatprep.mubr.f32.mxu0 0.0
        %1222 = vmatmul.mubr.f32.gmra.mrb[0].mxu0 %v884
        %v1223 = vpop.f32.mrb[0].mxu0
        %v1224 = vadd.f32 0.0, %v1223
        %v1225 = vpop.f32.mrb[0].mxu0
        %1226 = vmatprep.mubr.f32.mxu0 0.0
        %1227 = vmatmul.mubr.f32.gmra.mrb[0].mxu0 %v885
        %v1228 = vpop.f32.mrb[0].mxu0
        %v1229 = vadd.f32 0.0, %v1228
        %v1230 = vpop.f32.mrb[0].mxu0
        %1231 = vmatprep.mubr.f32.mxu0 0.0
        %1232 = vmatmul.mubr.f32.gmra.mrb[0].mxu0 %v886
        %v1233 = vpop.f32.mrb[0].mxu0
        %v1234 = vadd.f32 0.0, %v1233
        %v1235 = vpop.f32.mrb[0].mxu0
        %1236 = vmatprep.mubr.f32.mxu0 0.0
        %1237 = vmatmul.mubr.f32.gmra.mrb[0].mxu0 %v887
        %v1238 = vpop.f32.mrb[0].mxu0
        %v1239 = vadd.f32 0.0, %v1238
        %v1240 = vpop.f32.mrb[0].mxu0
        %1241 = vmatprep.mubr.f32.mxu0 0.0
        %1242 = vmatmul.mubr.f32.gmra.mrb[0].mxu0 %v888
        %v1243 = vpop.f32.mrb[0].mxu0
        %v1244 = vadd.f32 0.0, %v1243
        %v1245 = vpop.f32.mrb[0].mxu0
        %1246 = vmatprep.mubr.f32.mxu0 0.0
        %1247 = vmatmul.mubr.f32.gmra.mrb[0].mxu0 %v889
        %v1248 = vpop.f32.mrb[0].mxu0
        %v1249 = vadd.f32 0.0, %v1248
        %v1250 = vpop.f32.mrb[0].mxu0
        %1251 = vmatprep.mubr.f32.mxu0 0.0
        %1252 = vmatmul.mubr.f32.gmra.mrb[0].mxu0 %v890
        %v1253 = vpop.f32.mrb[0].mxu0
        %v1254 = vadd.f32 0.0, %v1253
        %v1255 = vpop.f32.mrb[0].mxu0
        %1256 = vmatprep.mubr.f32.mxu0 0.0
        %1257 = vmatmul.mubr.f32.gmra.mrb[0].mxu0 %v891
        %v1258 = vpop.f32.mrb[0].mxu0
        %v1259 = vadd.f32 0.0, %v1258
        %v1260 = vpop.f32.mrb[0].mxu0
        %1261 = vdwg.mxu0
        %v1262 = vadd.f32 %v1085, %v1184
        %v1263 = vadd.f32 %v1086, %v1189
        %v1264 = vadd.f32 %v1087, %v1194
        %v1265 = vadd.f32 %v1088, %v1199
        %v1266 = vadd.f32 %v1089, %v1204
        %v1267 = vadd.f32 %v1090, %v1209
        %v1268 = vadd.f32 %v1091, %v1214
        %v1269 = vadd.f32 %v1092, %v1219
        %v1270 = vadd.f32 %v1093, %v1224
        %v1271 = vadd.f32 %v1094, %v1229
        %v1272 = vadd.f32 %v1095, %v1234
        %v1273 = vadd.f32 %v1096, %v1239
        %v1274 = vadd.f32 %v1097, %v1244
        %v1275 = vadd.f32 %v1098, %v1249
        %v1276 = vadd.f32 %v1099, %v1254
        %v1277 = vadd.f32 %v1100, %v1259
        %1278 = vst [vmem:[#allocation4] sm:$0xff] %v1262
        %1279 = vst [vmem:[#allocation4 + $0x8] sm:$0xff] %v1263
        %1280 = vst [vmem:[#allocation4 + $0x10] sm:$0xff] %v1264
        %1281 = vst [vmem:[#allocation4 + $0x18] sm:$0xff] %v1265
        %1282 = vst [vmem:[#allocation4 + $0x20] sm:$0xff] %v1266
        %1283 = vst [vmem:[#allocation4 + $0x28] sm:$0xff] %v1267
        %1284 = vst [vmem:[#allocation4 + $0x30] sm:$0xff] %v1268
        %1285 = vst [vmem:[#allocation4 + $0x38] sm:$0xff] %v1269
        %1286 = vst [vmem:[#allocation4 + $0x40] sm:$0xff] %v1270
        %1287 = vst [vmem:[#allocation4 + $0x48] sm:$0xff] %v1271
        %1288 = vst [vmem:[#allocation4 + $0x50] sm:$0xff] %v1272
        %1289 = vst [vmem:[#allocation4 + $0x58] sm:$0xff] %v1273
        %1290 = vst [vmem:[#allocation4 + $0x60] sm:$0xff] %v1274
        %1291 = vst [vmem:[#allocation4 + $0x68] sm:$0xff] %v1275
        %1292 = vst [vmem:[#allocation4 + $0x70] sm:$0xff] %v1276
        %1293 = vst [vmem:[#allocation4 + $0x78] sm:$0xff] %v1277
        %1294 = vst.msk [vmem:[#allocation2] sm:$0xff] %vm972, %v684
        %1295 = vst.msk [vmem:[#allocation2 + $0x8] sm:$0xff] %vm972, %v685
        %1296 = vst.msk [vmem:[#allocation2 + $0x10] sm:$0xff] %vm972, %v686
        %1297 = vst.msk [vmem:[#allocation2 + $0x18] sm:$0xff] %vm972, %v687
        %1298 = vst.msk [vmem:[#allocation2 + $0x20] sm:$0xff] %vm972, %v688
        %1299 = vst.msk [vmem:[#allocation2 + $0x28] sm:$0xff] %vm972, %v689
        %1300 = vst.msk [vmem:[#allocation2 + $0x30] sm:$0xff] %vm972, %v690
        %1301 = vst.msk [vmem:[#allocation2 + $0x38] sm:$0xff] %vm972, %v691
        %1302 = vst.msk [vmem:[#allocation2 + $0x40] sm:$0xff] %vm972, %v692
        %1303 = vst.msk [vmem:[#allocation2 + $0x48] sm:$0xff] %vm972, %v693
        %1304 = vst.msk [vmem:[#allocation2 + $0x50] sm:$0xff] %vm972, %v694
        %1305 = vst.msk [vmem:[#allocation2 + $0x58] sm:$0xff] %vm972, %v695
        %1306 = vst.msk [vmem:[#allocation2 + $0x60] sm:$0xff] %vm972, %v696
        %1307 = vst.msk [vmem:[#allocation2 + $0x68] sm:$0xff] %vm972, %v697
        %1308 = vst.msk [vmem:[#allocation2 + $0x70] sm:$0xff] %vm972, %v698
        %1309 = vst.msk [vmem:[#allocation2 + $0x78] sm:$0xff] %vm972, %v699
        %p1310 = scmp.eq.s32.totalorder %s21, 2
        // Predicated region
        $region83: #{gat_forward.7} parent=73 // pred_check
          %p1311 = pneg %p1310
        $region84: #{gat_forward.7} parent=73 // pred_check_branch
          %1313 = sbr.rel (%p1311) target = $region86
        $region85: #{gat_forward.7} parent=73 // pred_region
          %v1314 = vld [vmem:[#allocation4] sm:$0xff]
          %v1315 = vld [vmem:[#allocation4 + $0x8] sm:$0xff]
          %v1316 = vld [vmem:[#allocation4 + $0x10] sm:$0xff]
          %v1317 = vld [vmem:[#allocation4 + $0x18] sm:$0xff]
          %v1318 = vld [vmem:[#allocation4 + $0x20] sm:$0xff]
          %v1319 = vld [vmem:[#allocation4 + $0x28] sm:$0xff]
          %v1320 = vld [vmem:[#allocation4 + $0x30] sm:$0xff]
          %v1321 = vld [vmem:[#allocation4 + $0x38] sm:$0xff]
          %v1322 = vld [vmem:[#allocation4 + $0x40] sm:$0xff]
          %v1323 = vld [vmem:[#allocation4 + $0x48] sm:$0xff]
          %v1324 = vld [vmem:[#allocation4 + $0x50] sm:$0xff]
          %v1325 = vld [vmem:[#allocation4 + $0x58] sm:$0xff]
          %v1326 = vld [vmem:[#allocation4 + $0x60] sm:$0xff]
          %v1327 = vld [vmem:[#allocation4 + $0x68] sm:$0xff]
          %v1328 = vld [vmem:[#allocation4 + $0x70] sm:$0xff]
          %v1329 = vld [vmem:[#allocation4 + $0x78] sm:$0xff]
          %v1330 = vld [vmem:[#allocation3] sm:$0xff]
          %v1331 = vld [vmem:[#allocation3 + $0x8] sm:$0xff]
          %v1332 = vld [vmem:[#allocation3 + $0x10] sm:$0xff]
          %v1333 = vld [vmem:[#allocation3 + $0x18] sm:$0xff]
          %v1334 = vld [vmem:[#allocation3 + $0x20] sm:$0xff]
          %v1335 = vld [vmem:[#allocation3 + $0x28] sm:$0xff]
          %v1336 = vld [vmem:[#allocation3 + $0x30] sm:$0xff]
          %v1337 = vld [vmem:[#allocation3 + $0x38] sm:$0xff]
          %v1338 = vld [vmem:[#allocation3 + $0x40] sm:$0xff]
          %v1339 = vld [vmem:[#allocation3 + $0x48] sm:$0xff]
          %v1340 = vld [vmem:[#allocation3 + $0x50] sm:$0xff]
          %v1341 = vld [vmem:[#allocation3 + $0x58] sm:$0xff]
          %v1342 = vld [vmem:[#allocation3 + $0x60] sm:$0xff]
          %v1343 = vld [vmem:[#allocation3 + $0x68] sm:$0xff]
          %v1344 = vld [vmem:[#allocation3 + $0x70] sm:$0xff]
          %v1345 = vld [vmem:[#allocation3 + $0x78] sm:$0xff]
          %v1346 = vrcp.pop %v1330
          %v1347 = vrcp.pop %v1331
          %v1348 = vrcp.pop %v1332
          %v1349 = vrcp.pop %v1333
          %v1350 = vrcp.pop %v1334
          %v1351 = vrcp.pop %v1335
          %v1352 = vrcp.pop %v1336
          %v1353 = vrcp.pop %v1337
          %v1354 = vrcp.pop %v1338
          %v1355 = vrcp.pop %v1339
          %v1356 = vrcp.pop %v1340
          %v1357 = vrcp.pop %v1341
          %v1358 = vrcp.pop %v1342
          %v1359 = vrcp.pop %v1343
          %v1360 = vrcp.pop %v1344
          %v1361 = vrcp.pop %v1345
          %1363 = vset.pattern.permute.xlu0 0
          %1364 = vperm.xlu0 %1363, %v1346
          %v1365 = vpop.permute.xlu0 %1364
          %1368 = vset.pattern.permute.xlu0 0
          %1369 = vperm.xlu0 %1368, %v1347
          %v1370 = vpop.permute.xlu0 %1369
          %1373 = vset.pattern.permute.xlu0 0
          %1374 = vperm.xlu0 %1373, %v1348
          %v1375 = vpop.permute.xlu0 %1374
          %1378 = vset.pattern.permute.xlu0 0
          %1379 = vperm.xlu0 %1378, %v1349
          %v1380 = vpop.permute.xlu0 %1379
          %1383 = vset.pattern.permute.xlu0 0
          %1384 = vperm.xlu0 %1383, %v1350
          %v1385 = vpop.permute.xlu0 %1384
          %1388 = vset.pattern.permute.xlu0 0
          %1389 = vperm.xlu0 %1388, %v1351
          %v1390 = vpop.permute.xlu0 %1389
          %1393 = vset.pattern.permute.xlu0 0
          %1394 = vperm.xlu0 %1393, %v1352
          %v1395 = vpop.permute.xlu0 %1394
          %1398 = vset.pattern.permute.xlu0 0
          %1399 = vperm.xlu0 %1398, %v1353
          %v1400 = vpop.permute.xlu0 %1399
          %1403 = vset.pattern.permute.xlu0 0
          %1404 = vperm.xlu0 %1403, %v1354
          %v1405 = vpop.permute.xlu0 %1404
          %1408 = vset.pattern.permute.xlu0 0
          %1409 = vperm.xlu0 %1408, %v1355
          %v1410 = vpop.permute.xlu0 %1409
          %1413 = vset.pattern.permute.xlu0 0
          %1414 = vperm.xlu0 %1413, %v1356
          %v1415 = vpop.permute.xlu0 %1414
          %1418 = vset.pattern.permute.xlu0 0
          %1419 = vperm.xlu0 %1418, %v1357
          %v1420 = vpop.permute.xlu0 %1419
          %1423 = vset.pattern.permute.xlu0 0
          %1424 = vperm.xlu0 %1423, %v1358
          %v1425 = vpop.permute.xlu0 %1424
          %1428 = vset.pattern.permute.xlu0 0
          %1429 = vperm.xlu0 %1428, %v1359
          %v1430 = vpop.permute.xlu0 %1429
          %1433 = vset.pattern.permute.xlu0 0
          %1434 = vperm.xlu0 %1433, %v1360
          %v1435 = vpop.permute.xlu0 %1434
          %1438 = vset.pattern.permute.xlu0 0
          %1439 = vperm.xlu0 %1438, %v1361
          %v1440 = vpop.permute.xlu0 %1439
          %v1442 = vmul.f32 %v1314, %v1365
          %v1443 = vmul.f32 %v1315, %v1370
          %v1444 = vmul.f32 %v1316, %v1375
          %v1445 = vmul.f32 %v1317, %v1380
          %v1446 = vmul.f32 %v1318, %v1385
          %v1447 = vmul.f32 %v1319, %v1390
          %v1448 = vmul.f32 %v1320, %v1395
          %v1449 = vmul.f32 %v1321, %v1400
          %v1450 = vmul.f32 %v1322, %v1405
          %v1451 = vmul.f32 %v1323, %v1410
          %v1452 = vmul.f32 %v1324, %v1415
          %v1453 = vmul.f32 %v1325, %v1420
          %v1454 = vmul.f32 %v1326, %v1425
          %v1455 = vmul.f32 %v1327, %v1430
          %v1456 = vmul.f32 %v1328, %v1435
          %v1457 = vmul.f32 %v1329, %v1440
          %v1458 = vld [vmem:[%s4] sm:$0x1]
          %v1460 = vlaneseq
          %v1461 = vshrl.u32 %v1460, 7
          %v1462 = vsub.s32 0, %v1461
          %v1463 = vrot.slane %v1458, %v1462
          %v1465 = vadd.f32 %v1442, %v1463
          %v1466 = vadd.f32 %v1443, %v1463
          %v1467 = vadd.f32 %v1444, %v1463
          %v1468 = vadd.f32 %v1445, %v1463
          %v1469 = vadd.f32 %v1446, %v1463
          %v1470 = vadd.f32 %v1447, %v1463
          %v1471 = vadd.f32 %v1448, %v1463
          %v1472 = vadd.f32 %v1449, %v1463
          %v1473 = vadd.f32 %v1450, %v1463
          %v1474 = vadd.f32 %v1451, %v1463
          %v1475 = vadd.f32 %v1452, %v1463
          %v1476 = vadd.f32 %v1453, %v1463
          %v1477 = vadd.f32 %v1454, %v1463
          %v1478 = vadd.f32 %v1455, %v1463
          %v1479 = vadd.f32 %v1456, %v1463
          %v1480 = vadd.f32 %v1457, %v1463
          %v1481 = vmul.f32 %v1465, %v1465
          %v1482 = vmul.f32 %v1466, %v1466
          %v1483 = vmul.f32 %v1467, %v1467
          %v1484 = vmul.f32 %v1468, %v1468
          %v1485 = vmul.f32 %v1469, %v1469
          %v1486 = vmul.f32 %v1470, %v1470
          %v1487 = vmul.f32 %v1471, %v1471
          %v1488 = vmul.f32 %v1472, %v1472
          %v1489 = vmul.f32 %v1473, %v1473
          %v1490 = vmul.f32 %v1474, %v1474
          %v1491 = vmul.f32 %v1475, %v1475
          %v1492 = vmul.f32 %v1476, %v1476
          %v1493 = vmul.f32 %v1477, %v1477
          %v1494 = vmul.f32 %v1478, %v1478
          %v1495 = vmul.f32 %v1479, %v1479
          %v1496 = vmul.f32 %v1480, %v1480
          %1497 = vadd.xlane.f32.xlu0 %v1481
          %v1498 = vpop.xlane.xlu0 %1497
          %1499 = vadd.xlane.f32.xlu0 %v1482
          %v1500 = vpop.xlane.xlu0 %1499
          %1501 = vadd.xlane.f32.xlu0 %v1483
          %v1502 = vpop.xlane.xlu0 %1501
          %1503 = vadd.xlane.f32.xlu0 %v1484
          %v1504 = vpop.xlane.xlu0 %1503
          %1505 = vadd.xlane.f32.xlu0 %v1485
          %v1506 = vpop.xlane.xlu0 %1505
          %1507 = vadd.xlane.f32.xlu0 %v1486
          %v1508 = vpop.xlane.xlu0 %1507
          %1509 = vadd.xlane.f32.xlu0 %v1487
          %v1510 = vpop.xlane.xlu0 %1509
          %1511 = vadd.xlane.f32.xlu0 %v1488
          %v1512 = vpop.xlane.xlu0 %1511
          %1513 = vadd.xlane.f32.xlu0 %v1489
          %v1514 = vpop.xlane.xlu0 %1513
          %1515 = vadd.xlane.f32.xlu0 %v1490
          %v1516 = vpop.xlane.xlu0 %1515
          %1517 = vadd.xlane.f32.xlu0 %v1491
          %v1518 = vpop.xlane.xlu0 %1517
          %1519 = vadd.xlane.f32.xlu0 %v1492
          %v1520 = vpop.xlane.xlu0 %1519
          %1521 = vadd.xlane.f32.xlu0 %v1493
          %v1522 = vpop.xlane.xlu0 %1521
          %1523 = vadd.xlane.f32.xlu0 %v1494
          %v1524 = vpop.xlane.xlu0 %1523
          %1525 = vadd.xlane.f32.xlu0 %v1495
          %v1526 = vpop.xlane.xlu0 %1525
          %1527 = vadd.xlane.f32.xlu0 %v1496
          %v1528 = vpop.xlane.xlu0 %1527
          %v1529 = vmax.f32 %v1498, 1e-24
          %v1530 = vmax.f32 %v1500, 1e-24
          %v1531 = vmax.f32 %v1502, 1e-24
          %v1532 = vmax.f32 %v1504, 1e-24
          %v1533 = vmax.f32 %v1506, 1e-24
          %v1534 = vmax.f32 %v1508, 1e-24
          %v1535 = vmax.f32 %v1510, 1e-24
          %v1536 = vmax.f32 %v1512, 1e-24
          %v1537 = vmax.f32 %v1514, 1e-24
          %v1538 = vmax.f32 %v1516, 1e-24
          %v1539 = vmax.f32 %v1518, 1e-24
          %v1540 = vmax.f32 %v1520, 1e-24
          %v1541 = vmax.f32 %v1522, 1e-24
          %v1542 = vmax.f32 %v1524, 1e-24
          %v1543 = vmax.f32 %v1526, 1e-24
          %v1544 = vmax.f32 %v1528, 1e-24
          %v1545 = vrsqrt.pop %v1529
          %v1546 = vrsqrt.pop %v1530
          %v1547 = vrsqrt.pop %v1531
          %v1548 = vrsqrt.pop %v1532
          %v1549 = vrsqrt.pop %v1533
          %v1550 = vrsqrt.pop %v1534
          %v1551 = vrsqrt.pop %v1535
          %v1552 = vrsqrt.pop %v1536
          %v1553 = vrsqrt.pop %v1537
          %v1554 = vrsqrt.pop %v1538
          %v1555 = vrsqrt.pop %v1539
          %v1556 = vrsqrt.pop %v1540
          %v1557 = vrsqrt.pop %v1541
          %v1558 = vrsqrt.pop %v1542
          %v1559 = vrsqrt.pop %v1543
          %v1560 = vrsqrt.pop %v1544
          %v1561 = vmul.f32 %v1465, %v1545
          %v1562 = vmul.f32 %v1466, %v1546
          %v1563 = vmul.f32 %v1467, %v1547
          %v1564 = vmul.f32 %v1468, %v1548
          %v1565 = vmul.f32 %v1469, %v1549
          %v1566 = vmul.f32 %v1470, %v1550
          %v1567 = vmul.f32 %v1471, %v1551
          %v1568 = vmul.f32 %v1472, %v1552
          %v1569 = vmul.f32 %v1473, %v1553
          %v1570 = vmul.f32 %v1474, %v1554
          %v1571 = vmul.f32 %v1475, %v1555
          %v1572 = vmul.f32 %v1476, %v1556
          %v1573 = vmul.f32 %v1477, %v1557
          %v1574 = vmul.f32 %v1478, %v1558
          %v1575 = vmul.f32 %v1479, %v1559
          %v1576 = vmul.f32 %v1480, %v1560
          %1577 = vst [vmem:[%s346] sm:$0xff] %v1561
          %1578 = vst [vmem:[%s346 + $0x8] sm:$0xff] %v1562
          %1579 = vst [vmem:[%s346 + $0x10] sm:$0xff] %v1563
          %1580 = vst [vmem:[%s346 + $0x18] sm:$0xff] %v1564
          %1581 = vst [vmem:[%s346 + $0x20] sm:$0xff] %v1565
          %1582 = vst [vmem:[%s346 + $0x28] sm:$0xff] %v1566
          %1583 = vst [vmem:[%s346 + $0x30] sm:$0xff] %v1567
          %1584 = vst [vmem:[%s346 + $0x38] sm:$0xff] %v1568
          %1585 = vst [vmem:[%s346 + $0x40] sm:$0xff] %v1569
          %1586 = vst [vmem:[%s346 + $0x48] sm:$0xff] %v1570
          %1587 = vst [vmem:[%s346 + $0x50] sm:$0xff] %v1571
          %1588 = vst [vmem:[%s346 + $0x58] sm:$0xff] %v1572
          %1589 = vst [vmem:[%s346 + $0x60] sm:$0xff] %v1573
          %1590 = vst [vmem:[%s346 + $0x68] sm:$0xff] %v1574
          %1591 = vst [vmem:[%s346 + $0x70] sm:$0xff] %v1575
          %1592 = vst [vmem:[%s346 + $0x78] sm:$0xff] %v1576
        $region86: #{gat_forward.7} parent=73 // pred_fallthru
          _
        %s1593 = smul.u32 16, %s20
        %p1594 = scmp.lt.s32.totalorder %s1593, 47
        %s1595 = scalar_select %p1594, %s1593, 47
        %s1596 = smul.addr %s1595, 8
        %s1597 = scalar_lea.vmem %s5, %s1596
        // Predicated region
        $region87: #{gat_forward.7} parent=73 // pred_check
          %p1598 = pneg %p173
        $region88: #{gat_forward.7} parent=73 // pred_check_branch
          %1600 = sbr.rel (%p1598) target = $region90
        $region89: #{gat_forward.7} parent=73 // pred_region
          %s1601 = smul.u32 16, %s20
        $region90: #{gat_forward.7} parent=73 // pred_fallthru
          _
      $region74: #{gat_forward.7} parent=5 // pred_fallthru
        _
      %p1602 = scmp.le.s32.totalorder 2, %s11
      // Predicated region
      $region91: #{gat_forward.7} parent=5 // pred_check
        %p1603 = pneg %p1602
      $region92: #{gat_forward.7} parent=5 // pred_check_branch
        %1605 = sbr.rel (%p1603) target = $region94
      $region93: #{gat_forward.7} parent=5 // pred_region
        %s1606 = ssub.s32 %s11, 2
        // Predicated region
        $region95: #{gat_forward.7} parent=93 // pred_check
          %p1607 = pneg %p179
        $region96: #{gat_forward.7} parent=93 // pred_check_branch
          %1609 = sbr.rel (%p1607) target = $region98
        $region97: #{gat_forward.7} parent=93 // pred_region
          %s1610 = smul.u32 16, %s22
          %p1611 = scmp.lt.s32.totalorder %s1610, 47
          %s1612 = scalar_select %p1611, %s1610, 47
          %s1613 = smul.addr %s1612, 8
          %s1614 = scalar_lea.vmem %s5, %s1613
        $region98: #{gat_forward.7} parent=93 // pred_fallthru
          _
      $region94: #{gat_forward.7} parent=5 // pred_fallthru
        _
    $region6: #{gat_forward.7} parent=1 // loop_footer
      %s15 = sadd.s32 1, %s11
    $region7: #{gat_forward.7} parent=1 // loop_footer_branch
      %10 = sbr.rel target = $region3
    $region8: #{gat_forward.7} parent=1 // loop_exit
      _

</llo_original>
